<compile_context>
chip_gen: v5e
topology: v5e:2x2
jax: 0.10.0
libtpu: 0.0.40
codegen_flags: <defaults>
</compile_context>

<pallas_src>
import functools

import jax
import jax.numpy as jnp
from jax.experimental import pallas as pl
from jax.experimental.pallas import tpu as pltpu


_PARALLEL = getattr(pltpu, "PARALLEL", "parallel")

# ~6 MiB blocks: per-step DMA time >> ~0.35 us step overhead on v5e/v6e/v7x,
# and the double-buffered 2x(in) + 2x(out) blocks stay around 24 MiB.
_TARGET_BLOCK_BYTES = 6 << 20
# Explicit scoped-VMEM limit: above v5e's 16 MiB / v6e-v7x's 32 MiB scoped
# defaults, comfortably below v7x's 64 MiB-per-TC physical VMEM.
_VMEM_LIMIT_BYTES = 40 << 20

_LANE = 128
# Candidate packed widths (largest first) for the small-lan_size path.
_PACKED_WIDTHS = (512, 256, 128)

# Below this, the fused XLA elementwise is strictly faster than a pallas_call
# (the whole multiply is ~1 us of HBM traffic on v6e, ~0.3 us on v7x).
_MIN_PALLAS_BYTES = 4 << 20


def _mul_bcast_kernel(x_ref, row_ref, o_ref):
    # (TILE_R, TILE_W) * (1, TILE_W) broadcast multiply — the whole hot path.
    # Keep the explicit multiply (not iota/where) so NaN/Inf propagation
    # matches the PyTorch elementwise-multiply semantics exactly.
    o_ref[...] = x_ref[...] * row_ref[...]


@functools.lru_cache(maxsize=None)
def _row_axis_semantics():
    """Semantics for grid axis 0: CORE_PARALLEL if this chip/runtime takes it.

    On v7x (2 TensorCores per chip) only CORE_PARALLEL actually shards a grid
    axis across cores (plain "parallel" is near-zero codegen effect), and the
    HBM path is per-TC, so this roughly doubles achievable bandwidth for a
    mem-bound kernel.  Support varies by generation/runtime, so probe once on
    a tiny odd-sized 2-D grid, verify numerics, and fall back to PARALLEL
    (which is a no-op on single-TC v5e/v6e anyway).
    """
    core_parallel = getattr(pltpu, "CORE_PARALLEL", None)
    if core_parallel is None:
        return _PARALLEL
    try:
        x = jnp.arange(24 * 128, dtype=jnp.float32).reshape(24, 128)
        row = jnp.full((1, 128), 2.0, dtype=jnp.float32)
        out = pl.pallas_call(
            _mul_bcast_kernel,
            out_shape=jax.ShapeDtypeStruct((24, 128), jnp.float32),
            grid_spec=pl.GridSpec(
                grid=(3, 1),
                in_specs=[pl.BlockSpec((8, 128), lambda i, j: (i, j)),
                          pl.BlockSpec((1, 128), lambda i, j: (0, j))],
                out_specs=pl.BlockSpec((8, 128), lambda i, j: (i, j)),
            ),
            compiler_params=pltpu.CompilerParams(
                dimension_semantics=(core_parallel, _PARALLEL)),
        )(x, row)
        if bool(jnp.allclose(out, x * row)):
            return core_parallel
    except Exception:  # pragma: no cover — depends on chip/runtime support
        pass
    return _PARALLEL


def _pick_tiles(num_rows, width, itemsize, target_bytes=_TARGET_BLOCK_BYTES):
    """(tile_r, tile_w): ~target_bytes blocks, sublane/lane aligned per dtype."""
    # Sub-32-bit dtypes pack along sublanes: the second-minor block dim must
    # be a multiple of 8 (f32), 16 (bf16), 32 (int8/fp8).
    sub = max(8, 32 // max(1, itemsize))
    if width <= _LANE or width * sub * itemsize <= target_bytes:
        tile_w = width                       # lane axis untiled (full width)
    else:
        # Very wide rows: tile the lane axis too so one block (and its ~4x
        # double-buffered footprint) never exceeds the VMEM budget (critical
        # on v7x's 64 MiB/TC; merely polite on v5e/v6e's 128 MiB).
        tile_w = (target_bytes // (sub * itemsize * _LANE)) * _LANE
        tile_w = max(_LANE, min(tile_w, width))
    tile_r = target_bytes // max(1, tile_w * itemsize)
    if tile_r >= num_rows:
        tile_r = num_rows                    # full dim is always legal
    else:
        tile_r = max(sub, (tile_r // sub) * sub)
    return tile_r, tile_w


def _pallas_bcast_mul(x2d, row2d):
    """x2d: (R, W), row2d: (1, W)  ->  x2d * row2d via a (rows, lanes) grid."""
    R, W = x2d.shape
    itemsize = x2d.dtype.itemsize
    tile_r, tile_w = _pick_tiles(R, W, itemsize)
    grid = (pl.cdiv(R, tile_r), pl.cdiv(W, tile_w))
    sem0 = _row_axis_semantics() if grid[0] > 1 else _PARALLEL
    return pl.pallas_call(
        _mul_bcast_kernel,
        out_shape=jax.ShapeDtypeStruct((R, W), x2d.dtype),
        grid_spec=pl.GridSpec(
            grid=grid,
            in_specs=[
                pl.BlockSpec((tile_r, tile_w), lambda i, j: (i, j)),
                pl.BlockSpec((1, tile_w), lambda i, j: (0, j)),
            ],
            out_specs=pl.BlockSpec((tile_r, tile_w), lambda i, j: (i, j)),
        ),
        compiler_params=pltpu.CompilerParams(
            dimension_semantics=(sem0, _PARALLEL),
            vmem_limit_bytes=_VMEM_LIMIT_BYTES,
        ),
        # Purely bandwidth bound: tell XLA's scheduler so it overlaps
        # neighbouring ops around the custom call correctly.
        cost_estimate=pl.CostEstimate(
            flops=R * W,
            transcendentals=0,
            bytes_accessed=(2 * R * W + W) * itemsize,
        ),
    )(x2d, row2d)


def init_actor_forward(feature, existed_src, lan_dist_vec,
                       *, min_pallas_bytes=_MIN_PALLAS_BYTES):
    """Pallas implementation of InitActor.forward((feature, existed_src)).

    `feature` is accepted for signature parity with the PyTorch module but is
    unused (exactly as in the reference forward).
    """
    del feature  # unused in the reference forward
    B, L = existed_src.shape
    row = lan_dist_vec.astype(existed_src.dtype)

    nbytes = existed_src.size * existed_src.dtype.itemsize
    if nbytes < min_pallas_bytes:
        # Tiny problem: let XLA fuse it into neighboring ops; a pallas_call
        # here is pure launch / pipeline-prologue overhead.
        return existed_src * row[None, :]

    if L < _LANE and _LANE % L == 0:
        # Lane-dense packing: fold batch into the lane axis.  Flat index
        # n = b*L + l and L | W, so the multiplier at packed column (n mod W)
        # is exactly lan_dist_vec[l].  All reshapes below preserve row-major
        # contiguity and are therefore free (bitcasts) — no jnp.pad / output
        # slice HBM round-trips.
        N = B * L
        for W in _PACKED_WIDTHS:
            if N % W == 0:
                # Perfectly aligned: single zero-copy packed call.
                row_w = jnp.tile(row, W // L).reshape(1, W)
                out = _pallas_bcast_mul(existed_src.reshape(N // W, W), row_w)
                return out.reshape(B, L)
        # Ragged: run the W-aligned batch prefix through Pallas and only the
        # (< W // L)-row tail through fused XLA, then stitch.
        # TODO(synk): a fully copy-free ragged path needs in-kernel ragged
        # handling (1-D flat blocks or manual DMA); the prefix slice + concat
        # below still cost ~1 extra HBM pass each, but the whole-array
        # jnp.pad / [:N] output slice of the previous version are gone and
        # the common aligned case above is now zero-copy.
        W = _PACKED_WIDTHS[0]
        g = W // L
        b_main = (B // g) * g
        if b_main == 0:
            return existed_src * row[None, :]
        row_w = jnp.tile(row, g).reshape(1, W)
        out_main = _pallas_bcast_mul(
            existed_src[:b_main].reshape(b_main // g, W), row_w)
        out_tail = existed_src[b_main:] * row[None, :]
        return jnp.concatenate([out_main.reshape(b_main, L), out_tail], axis=0)

    # General / already lane-dense layout (L >= 128 or awkward L):
    # 2-D (row_tiles, lane_tiles) grid; the lane axis is only actually tiled
    # when a full-width block would blow the VMEM budget (very wide L).
    return _pallas_bcast_mul(existed_src, row.reshape(1, L))


def make_lan_dist_vec(lan_size, base_lan_id, dtype=jnp.float32):
    """Deterministic parameter init matching InitActor.__init__."""
    vec = jnp.zeros((lan_size,), dtype=dtype)
    vec = vec.at[base_lan_id].set(100.0)
    return vec


if __name__ == "__main__":
    class HParams:
        d_hidden = 32       # unused by forward (as in the reference)
        lan_size = 8
        base_lan_id = 3
        cuda = False

    hp = HParams()
    key = jax.random.PRNGKey(0)
    keys = jax.random.split(key, 6)

    lan_vec = make_lan_dist_vec(hp.lan_size, hp.base_lan_id)

    # 1) Module-scale tiny shape (batch=2): size-gated fused-XLA path.
    feature = jax.random.normal(keys[0], (2, 16), dtype=jnp.float32)
    existed_small = jax.random.normal(keys[1], (2, hp.lan_size), dtype=jnp.float32)
    out_small = jax.block_until_ready(
        init_actor_forward(feature, existed_small, lan_vec))
    assert out_small.shape == (2, hp.lan_size)
    assert jnp.allclose(out_small, existed_small * lan_vec[None, :], atol=1e-6)

    # 2) Large batch, small lan_size, B*L % 512 == 0: zero-copy packed path.
    b_al = 262144
    x_al = jax.random.normal(keys[2], (b_al, hp.lan_size), dtype=jnp.float32)
    out_al = jax.block_until_ready(init_actor_forward(feature, x_al, lan_vec))
    assert out_al.shape == (b_al, hp.lan_size)
    assert jnp.allclose(out_al, x_al * lan_vec[None, :], atol=1e-6)

    # 3) Large batch, ragged flat length (B*L % 128 != 0): packed Pallas
    #    prefix + tiny XLA tail (no jnp.pad / output slice round trips).
    b_rag = 262154
    x_rag = jax.random.normal(keys[3], (b_rag, hp.lan_size), dtype=jnp.float32)
    out_rag = jax.block_until_ready(init_actor_forward(feature, x_rag, lan_vec))
    assert out_rag.shape == (b_rag, hp.lan_size)
    assert jnp.allclose(out_rag, x_rag * lan_vec[None, :], atol=1e-6)

    # 4) Lane-dense lan_size (multiple of 128), batch not a multiple of the
    #    row tile: general row-tiled path with a masked last row block.
    b_wide, l_wide, base_wide = 8192, 256, 37
    lan_wide = make_lan_dist_vec(l_wide, base_wide)
    x_wide = jax.random.normal(keys[4], (b_wide, l_wide), dtype=jnp.float32)
    out_wide = jax.block_until_ready(
        init_actor_forward(feature, x_wide, lan_wide))
    assert out_wide.shape == (b_wide, l_wide)
    assert jnp.allclose(out_wide, x_wide * lan_wide[None, :], atol=1e-6)

    # 5) Very wide L: the lane axis itself gets tiled (VMEM-budget guard that
    #    matters on v7x's 64 MiB/TC VMEM).
    b_huge, l_huge, base_huge = 8, 262144, 12345
    lan_huge = make_lan_dist_vec(l_huge, base_huge)
    x_huge = jax.random.normal(keys[5], (b_huge, l_huge), dtype=jnp.float32)
    out_huge = jax.block_until_ready(
        init_actor_forward(feature, x_huge, lan_huge))
    assert out_huge.shape == (b_huge, l_huge)
    assert jnp.allclose(out_huge, x_huge * lan_huge[None, :], atol=1e-6)

    print("KERNEL_OK")
</pallas_src>

<mosaic_0001>
module attributes {stable_mosaic.version = 11 : i64} {
  func.func @_mul_bcast_kernel(%arg0: i32, %arg1: i32, %arg2: memref<8x128xf32, #tpu.memory_space<vmem>>, %arg3: memref<1x128xf32, #tpu.memory_space<vmem>>, %arg4: memref<8x128xf32, #tpu.memory_space<vmem>>) attributes {dimension_semantics = [#tpu.dimension_semantics<core_parallel>, #tpu.dimension_semantics<parallel>], iteration_bounds = array<i64: 3, 1>, scalar_prefetch = 0 : i64, scratch_operands = 0 : i64, tpu.core_type = #tpu.core_type<tc>, window_params = [{transform_indices = @transform_0, window_bounds = array<i64: 8, 128>}, {transform_indices = @transform_1, window_bounds = array<i64: 1, 128>}, {transform_indices = @transform_2, window_bounds = array<i64: 8, 128>}]} {
    %c0 = arith.constant 0 : index
    %c0_0 = arith.constant 0 : index
    %0 = vector.load %arg2[%c0, %c0_0] : memref<8x128xf32, #tpu.memory_space<vmem>>, vector<8x128xf32>
    %c0_1 = arith.constant 0 : index
    %c0_2 = arith.constant 0 : index
    %1 = vector.load %arg3[%c0_1, %c0_2] : memref<1x128xf32, #tpu.memory_space<vmem>>, vector<1x128xf32>
    %2 = vector.broadcast %1 : vector<1x128xf32> to vector<8x128xf32>
    %3 = arith.mulf %0, %2 : vector<8x128xf32>
    %c0_3 = arith.constant 0 : index
    %c0_4 = arith.constant 0 : index
    %4 = vector.load %arg4[%c0_3, %c0_4] : memref<8x128xf32, #tpu.memory_space<vmem>>, vector<8x128xf32>
    tpu.vector_store %arg4[%c0_3, %c0_4], %3 {strides = array<i32>} : memref<8x128xf32, #tpu.memory_space<vmem>>, vector<8x128xf32>,
    return
  }
  func.func @transform_0(%arg0: i32, %arg1: i32) -> (i32, i32) {
    %c0_i32 = arith.constant 0 : i32
    return %arg0, %arg1 : i32, i32
  }
  func.func @transform_1(%arg0: i32, %arg1: i32) -> (i32, i32) {
    %c0_i32 = arith.constant 0 : i32
    %c0_i32_0 = arith.constant 0 : i32
    return %c0_i32, %arg1 : i32, i32
  }
  func.func @transform_2(%arg0: i32, %arg1: i32) -> (i32, i32) {
    %c0_i32 = arith.constant 0 : i32
    return %arg0, %arg1 : i32, i32
  }
}

module attributes {stable_mosaic.version = 11 : i64} {
  func.func @_mul_bcast_kernel(%arg0: i32, %arg1: i32, %arg2: memref<3072x512xf32, #tpu.memory_space<vmem>>, %arg3: memref<1x512xf32, #tpu.memory_space<vmem>>, %arg4: memref<3072x512xf32, #tpu.memory_space<vmem>>) attributes {dimension_semantics = [#tpu.dimension_semantics<parallel>, #tpu.dimension_semantics<parallel>], iteration_bounds = array<i64: 2, 1>, scalar_prefetch = 0 : i64, scratch_operands = 0 : i64, tpu.core_type = #tpu.core_type<tc>, window_params = [{transform_indices = @transform_0, window_bounds = array<i64: 3072, 512>}, {transform_indices = @transform_1, window_bounds = array<i64: 1, 512>}, {transform_indices = @transform_2, window_bounds = array<i64: 3072, 512>}]} {
    %c0 = arith.constant 0 : index
    %c0_0 = arith.constant 0 : index
    %0 = vector.load %arg2[%c0, %c0_0] : memref<3072x512xf32, #tpu.memory_space<vmem>>, vector<3072x512xf32>
    %c0_1 = arith.constant 0 : index
    %c0_2 = arith.constant 0 : index
    %1 = vector.load %arg3[%c0_1, %c0_2] : memref<1x512xf32, #tpu.memory_space<vmem>>, vector<1x512xf32>
    %2 = vector.broadcast %1 : vector<1x512xf32> to vector<3072x512xf32>
    %3 = arith.mulf %0, %2 : vector<3072x512xf32>
    %c0_3 = arith.constant 0 : index
    %c0_4 = arith.constant 0 : index
    %4 = vector.load %arg4[%c0_3, %c0_4] : memref<3072x512xf32, #tpu.memory_space<vmem>>, vector<3072x512xf32>
    tpu.vector_store %arg4[%c0_3, %c0_4], %3 {strides = array<i32>} : memref<3072x512xf32, #tpu.memory_space<vmem>>, vector<3072x512xf32>,
    return
  }
  func.func @transform_0(%arg0: i32, %arg1: i32) -> (i32, i32) {
    %c0_i32 = arith.constant 0 : i32
    return %arg0, %arg1 : i32, i32
  }
  func.func @transform_1(%arg0: i32, %arg1: i32) -> (i32, i32) {
    %c0_i32 = arith.constant 0 : i32
    %c0_i32_0 = arith.constant 0 : i32
    return %c0_i32, %arg1 : i32, i32
  }
  func.func @transform_2(%arg0: i32, %arg1: i32) -> (i32, i32) {
    %c0_i32 = arith.constant 0 : i32
    return %arg0, %arg1 : i32, i32
  }
}

</mosaic_0001>

<llo_original>
// kernel: tpu_custom_call.1
$region0: #{tpu_custom_call.1}
  #allocation0 [shape = 'u32[]', space=smem, size = 0x4, offset = 0x4, fixed_abs, tag = 'smem constant byte address 0x4 - core index']
  #allocation1 [shape = 'u32[72,128]{1,0:T(1,128)}', space=vmem, size = 0x9000, scoped, tag = 'internal scratch']
  %s0 = inlined_call_operand.hbm [shape: f32[4096,512], index: 0, kind: input, shape index: {}]
  %s1 = inlined_call_operand.hbm [shape: f32[1,512], index: 1, kind: input, shape index: {}]
  %s2 = inlined_call_operand.hbm [shape: f32[4096,512], index: 2, kind: output, shape index: {}]
  %s3 = sld [smem:[#allocation0]]
  $region49: #{tpu_custom_call.1} parent=0
    _
  %s5 = ssub.s32 1, %s3
  %s6 = scalar_select 0, %s5, %s3
  $region1: #{tpu_custom_call.1} parent=0
    #allocation2 [shape = 'u8[12582912]{0}', space=vmem, size = 0xc00000, scoped, tag = 'input window, operand 0']
    #allocation3 [shape = 's32[2]{0}', space=sflag, size = 0x8, scoped, tag = 'scoped memory for tpu_custom_call.1']
    #allocation4 [shape = 's32[2]{0}', space=sflag, size = 0x8, scoped, tag = 'scoped memory for tpu_custom_call.1']
    #allocation5 [shape = 'u8[2048]{0}', space=vmem, size = 0x800, scoped, tag = 'input window, operand 1, single buffered']
    #allocation6 [shape = 's32[1]{0}', space=sflag, size = 0x4, scoped, tag = 'scoped memory for tpu_custom_call.1']
    #allocation7 [shape = 'u8[12582912]{0}', space=vmem, size = 0xc00000, scoped, tag = 'output window, operand 0']
    %7 = vsyncpa [#allocation3], 0
    %s8 = scalar_lea.sflag [#allocation3], 1
    %9 = vsyncpa %s8, 0
    %10 = vsyncpa [#allocation6], 0
    %11 = vsyncpa [#allocation4], 0
    %s12 = scalar_lea.sflag [#allocation4], 1
    %13 = vsyncpa %s12, 0
    loop: start=0, step=1, limit=4
    $region2: #{tpu_custom_call.1} parent=1 // loop_pre_header
      _
    $region3: #{tpu_custom_call.1} parent=1 // loop_header
      %s15 = sphi 0, %s19
      %p16 = scmp.ge.s32.totalorder %s15, 4
      %s22 = sphi 0, %s34
      %s23 = sphi 0, %s30
      %s24 = sphi 0, %s22
      %s25 = sphi 0, %s23
      %s26 = sphi 0, %s24
      %s27 = sphi 0, %s25
      %s39 = sphi 0, %s41
      %s42 = sphi 0, %s39
      %s43 = sphi 0, %s42
      %s59 = sphi 0, %s43
      %s65 = sphi 0, %s67
      %s68 = sphi 0, %s65
      %s69 = sphi 0, %s68
      %s85 = sphi 0, %s69
      %s93 = sphi 0, %s95
      %s96 = sphi 0, %s93
      %s97 = sphi 0, %s96
      %s113 = sphi 0, %s97
    $region4: #{tpu_custom_call.1} parent=1 // loop_header_branch
      %18 = sbr.rel (%p16) target = $region8
    $region5: #{tpu_custom_call.1} parent=1 // loop_body
      %s20 = ssub.s32 %s15, 1
      %s21 = ssub.s32 %s15, 2
      %s28 = sadd.s32 1, %s23
      %p29 = scmp.ge.s32.totalorder %s28, 1
      %s30 = scalar_select %p29, 0, %s28
      %s31 = sadd.s32 1, %s22
      %s32 = scalar_select %p29, %s31, %s22
      %p33 = scmp.ge.s32.totalorder %s32, 2
      %s34 = scalar_select %p33, 0, %s32
      %s35 = ssub.s32 %s22, %s34
      %s36 = ssub.s32 %s23, %s30
      %s37 = sor.u32 %s35, %s36
      %p38 = scmp.eq.s32.totalorder %s37, 0
      %s40 = sadd.s32 %s39, 1
      %s41 = scalar_select %p38, %s39, %s40
      %p44 = pneg %p38
      %p45 = scmp.eq.s32.totalorder %s15, 1
      %p46 = por %p44, %p45
      %p47 = scmp.ne.s32.totalorder %s39, %s42
      %p48 = scmp.eq.s32.totalorder %s15, 0
      %p49 = por %p47, %p48
      %p50 = scmp.ne.s32.totalorder %s39, %s42
      %p51 = scmp.eq.s32.totalorder %s20, 1
      %p52 = por %p50, %p51
      %p53 = scmp.ne.s32.totalorder %s42, %s43
      %p54 = scmp.eq.s32.totalorder %s20, 0
      %p55 = por %p53, %p54
      %p56 = scmp.ne.s32.totalorder %s42, %s43
      %p57 = scmp.eq.s32.totalorder %s21, 1
      %p58 = por %p56, %p57
      %p60 = scmp.ne.s32.totalorder %s43, %s59
      %p61 = scmp.eq.s32.totalorder %s21, 0
      %p62 = por %p60, %p61
      %s63 = ssub.s32 %s23, %s30
      %p64 = scmp.eq.s32.totalorder %s63, 0
      %s66 = sadd.s32 %s65, 1
      %s67 = scalar_select %p64, %s65, %s66
      %p70 = pneg %p64
      %p71 = scmp.eq.s32.totalorder %s15, 1
      %p72 = por %p70, %p71
      %p73 = scmp.ne.s32.totalorder %s65, %s68
      %p74 = scmp.eq.s32.totalorder %s15, 0
      %p75 = por %p73, %p74
      %p76 = scmp.ne.s32.totalorder %s65, %s68
      %p77 = scmp.eq.s32.totalorder %s20, 1
      %p78 = por %p76, %p77
      %p79 = scmp.ne.s32.totalorder %s68, %s69
      %p80 = scmp.eq.s32.totalorder %s20, 0
      %p81 = por %p79, %p80
      %p82 = scmp.ne.s32.totalorder %s68, %s69
      %p83 = scmp.eq.s32.totalorder %s21, 1
      %p84 = por %p82, %p83
      %p86 = scmp.ne.s32.totalorder %s69, %s85
      %p87 = scmp.eq.s32.totalorder %s21, 0
      %p88 = por %p86, %p87
      %s89 = ssub.s32 %s22, %s34
      %s90 = ssub.s32 %s23, %s30
      %s91 = sor.u32 %s89, %s90
      %p92 = scmp.eq.s32.totalorder %s91, 0
      %s94 = sadd.s32 %s93, 1
      %s95 = scalar_select %p92, %s93, %s94
      %p98 = pneg %p92
      %p99 = scmp.eq.s32.totalorder %s15, 1
      %p100 = por %p98, %p99
      %p101 = scmp.ne.s32.totalorder %s93, %s96
      %p102 = scmp.eq.s32.totalorder %s15, 0
      %p103 = por %p101, %p102
      %p104 = scmp.ne.s32.totalorder %s93, %s96
      %p105 = scmp.eq.s32.totalorder %s20, 1
      %p106 = por %p104, %p105
      %p107 = scmp.ne.s32.totalorder %s96, %s97
      %p108 = scmp.eq.s32.totalorder %s20, 0
      %p109 = por %p107, %p108
      %p110 = scmp.ne.s32.totalorder %s96, %s97
      %p111 = scmp.eq.s32.totalorder %s21, 1
      %p112 = por %p110, %p111
      %p114 = scmp.ne.s32.totalorder %s97, %s113
      %p115 = scmp.eq.s32.totalorder %s21, 0
      %p116 = por %p114, %p115
      %p117 = scmp.le.s32.totalorder 1, %s15
      %p118 = scmp.lt.s32.totalorder %s15, 3
      %p119 = pnand %p117, %p118
      %p120 = pneg %p119
      // Predicated region
      $region9: #{tpu_custom_call.1} parent=5 // pred_check
        _
      $region10: #{tpu_custom_call.1} parent=5 // pred_check_branch
        %122 = sbr.rel (%p119) target = $region12
      $region11: #{tpu_custom_call.1} parent=5 // pred_region
        %s123 = ssub.s32 %s15, 1
        // Predicated region
        $region13: #{tpu_custom_call.1} parent=11 // pred_check
          %p124 = pneg %p81
        $region14: #{tpu_custom_call.1} parent=11 // pred_check_branch
          %126 = sbr.rel (%p124) target = $region16
        $region15: #{tpu_custom_call.1} parent=11 // pred_region
          %s127 = smul.u32 4, %s25
          %129 = vsyncadd [#allocation6], 0
          %s130 = scalar_lea.hbm %s1, %s127
          %s132 = sshll.u32 %s130, 4
          %s133 = int_to_ptr.hbm [resolvable:$true] %s132
          %s134 = sshll.u32 [#allocation5], 4
          %s135 = int_to_ptr.vmem [resolvable:$true] %s134
          %137 = dma.hbm_to_vmem [thread:$0]  %s133, 64, %s135, [#allocation6]
        $region16: #{tpu_custom_call.1} parent=11 // pred_fallthru
          _
      $region12: #{tpu_custom_call.1} parent=5 // pred_fallthru
        _
      %p138 = scmp.lt.s32.totalorder %s15, 2
      // Predicated region
      $region17: #{tpu_custom_call.1} parent=5 // pred_check
        %p139 = pneg %p138
      $region18: #{tpu_custom_call.1} parent=5 // pred_check_branch
        %141 = sbr.rel (%p139) target = $region20
      $region19: #{tpu_custom_call.1} parent=5 // pred_region
        // Predicated region
        $region21: #{tpu_custom_call.1} parent=19 // pred_check
          %p142 = pneg %p49
        $region22: #{tpu_custom_call.1} parent=19 // pred_check_branch
          %144 = sbr.rel (%p142) target = $region24
        $region23: #{tpu_custom_call.1} parent=19 // pred_region
          %s145 = sand.u32 %s39, 1
          %s146 = scalar_lea.sflag [#allocation3], %s145
          %s147 = sand.u32 %s39, 1
          %s148 = smul.addr %s147, 12288
          %s149 = scalar_lea.vmem [#allocation2], %s148
          %s150 = smul.u32 384, %s22
          %s151 = smul.u32 4, %s23
          %s152 = ssub.s32 512, %s150
          %p153 = scmp.lt.s32.totalorder %s152, 384
          %s154 = scalar_select %p153, %s152, 384
          %s155 = smul.u32 8, %s154
          %s156 = smul.u32 %s155, 4
          %s157 = ssub.s32 12288, %s156
          %s158 = sshll.u32 %s157, 4
          %159 = vsyncadd %s146, %s158
          %p160 = scmp.ne.s32.totalorder 0, %s156
          %s161 = smul.addr %s150, 4
          %s162 = sadd.s32 %s151, %s161
          %s163 = smul.addr %s162, 8
          %s164 = scalar_lea.hbm %s0, %s163
          %s165 = smul.u32 32, %s154
          %s166 = sshll.u32 %s164, 4
          %s167 = int_to_ptr.hbm [resolvable:$true] %s166
          %s168 = sshll.u32 %s149, 4
          %s169 = int_to_ptr.vmem [resolvable:$true] %s168
          %s170 = sshll.u32 %s165, 4
          %174 = dma.hbm_to_vmem [thread:$0]  (%p160), %s167, %s170, %s169, %s146, 512, 512, 32
        $region24: #{tpu_custom_call.1} parent=19 // pred_fallthru
          _
      $region20: #{tpu_custom_call.1} parent=5 // pred_fallthru
        _
      %p175 = scmp.le.s32.totalorder 1, %s15
      %p176 = scmp.lt.s32.totalorder %s15, 3
      %p177 = pnand %p175, %p176
      %p178 = pneg %p177
      // Predicated region
      $region25: #{tpu_custom_call.1} parent=5 // pred_check
        _
      $region26: #{tpu_custom_call.1} parent=5 // pred_check_branch
        %180 = sbr.rel (%p177) target = $region28
      $region27: #{tpu_custom_call.1} parent=5 // pred_region
        %s181 = ssub.s32 %s15, 1
        %s182 = sand.u32 %s42, 1
        %s183 = scalar_lea.sflag [#allocation3], %s182
        %s184 = sand.u32 %s42, 1
        %s185 = smul.addr %s184, 12288
        %s186 = scalar_lea.vmem [#allocation2], %s185
        // Predicated region
        $region29: #{tpu_custom_call.1} parent=27 // pred_check
          %p187 = pneg %p55
        $region30: #{tpu_custom_call.1} parent=27 // pred_check_branch
          %189 = sbr.rel (%p187) target = $region32
        $region31: #{tpu_custom_call.1} parent=27 // pred_region
          %191 = dma.done %s183, 196608
        $region32: #{tpu_custom_call.1} parent=27 // pred_fallthru
          _
        // Predicated region
        $region33: #{tpu_custom_call.1} parent=27 // pred_check
          %p192 = pneg %p81
        $region34: #{tpu_custom_call.1} parent=27 // pred_check_branch
          %194 = sbr.rel (%p192) target = $region36
        $region35: #{tpu_custom_call.1} parent=27 // pred_region
          %196 = dma.done [#allocation6], 64
        $region36: #{tpu_custom_call.1} parent=27 // pred_fallthru
          _
        %s197 = sand.u32 %s42, 1
        %s198 = scalar_lea.sflag [#allocation3], %s197
        %s199 = sand.u32 %s42, 1
        %s200 = smul.addr %s199, 12288
        %s201 = scalar_lea.vmem [#allocation2], %s200
        %p202 = pneg %p55
        %p203 = pneg %p52
        %p204 = pneg %p81
        %p205 = pneg %p78
        %p206 = pneg %p109
        %p207 = pneg %p106
        %s208 = sand.u32 %s96, 1
        %s209 = scalar_lea.sflag [#allocation4], %s208
        %s210 = sand.u32 %s96, 1
        %s211 = smul.addr %s210, 12288
        %s212 = scalar_lea.vmem [#allocation7], %s211
        %s213 = smul.u32 384, %s24
        %s214 = smul.u32 4, %s25
        %s215 = ssub.s32 512, %s213
        %p216 = scmp.lt.s32.totalorder %s215, 384
        %s217 = scalar_select %p216, %s215, 384
        %s218 = smul.u32 8, %s217
        %s219 = smul.u32 %s218, 4
        %s220 = smul.u32 4, %s25
        %s221 = smul.u32 384, %s24
        %s222 = smul.u32 4, %s25
        %s223 = ssub.s32 512, %s221
        %p224 = scmp.lt.s32.totalorder %s223, 384
        %s225 = scalar_select %p224, %s223, 384
        %s226 = smul.u32 8, %s225
        %s227 = smul.u32 %s226, 4
        %v228 = vld [vmem:[%s186] sm:$0xff]
        %v229 = vld [vmem:[%s186 + $0x8] sm:$0xff]
        %v230 = vld [vmem:[%s186 + $0x10] sm:$0xff]
        %v231 = vld [vmem:[%s186 + $0x18] sm:$0xff]
        %v232 = vld [vmem:[%s186 + $0x20] sm:$0xff]
        %v233 = vld [vmem:[%s186 + $0x28] sm:$0xff]
        %v234 = vld [vmem:[%s186 + $0x30] sm:$0xff]
        %v235 = vld [vmem:[%s186 + $0x38] sm:$0xff]
        %v236 = vld [vmem:[%s186 + $0x40] sm:$0xff]
        %v237 = vld [vmem:[%s186 + $0x48] sm:$0xff]
        %v238 = vld [vmem:[%s186 + $0x50] sm:$0xff]
        %v239 = vld [vmem:[%s186 + $0x58] sm:$0xff]
        %v240 = vld [vmem:[%s186 + $0x60] sm:$0xff]
        %v241 = vld [vmem:[%s186 + $0x68] sm:$0xff]
        %v242 = vld [vmem:[%s186 + $0x70] sm:$0xff]
        %v243 = vld [vmem:[%s186 + $0x78] sm:$0xff]
        %v244 = vld [vmem:[%s186 + $0x80] sm:$0xff]
        %v245 = vld [vmem:[%s186 + $0x88] sm:$0xff]
        %v246 = vld [vmem:[%s186 + $0x90] sm:$0xff]
        %v247 = vld [vmem:[%s186 + $0x98] sm:$0xff]
        %v248 = vld [vmem:[%s186 + $0xa0] sm:$0xff]
        %v249 = vld [vmem:[%s186 + $0xa8] sm:$0xff]
        %v250 = vld [vmem:[%s186 + $0xb0] sm:$0xff]
        %v251 = vld [vmem:[%s186 + $0xb8] sm:$0xff]
        %v252 = vld [vmem:[%s186 + $0xc0] sm:$0xff]
        %v253 = vld [vmem:[%s186 + $0xc8] sm:$0xff]
        %v254 = vld [vmem:[%s186 + $0xd0] sm:$0xff]
        %v255 = vld [vmem:[%s186 + $0xd8] sm:$0xff]
        %v256 = vld [vmem:[%s186 + $0xe0] sm:$0xff]
        %v257 = vld [vmem:[%s186 + $0xe8] sm:$0xff]
        %v258 = vld [vmem:[%s186 + $0xf0] sm:$0xff]
        %v259 = vld [vmem:[%s186 + $0xf8] sm:$0xff]
        %v260 = vld [vmem:[%s186 + $0x100] sm:$0xff]
        %v261 = vld [vmem:[%s186 + $0x108] sm:$0xff]
        %v262 = vld [vmem:[%s186 + $0x110] sm:$0xff]
        %v263 = vld [vmem:[%s186 + $0x118] sm:$0xff]
        %v264 = vld [vmem:[%s186 + $0x120] sm:$0xff]
        %v265 = vld [vmem:[%s186 + $0x128] sm:$0xff]
        %v266 = vld [vmem:[%s186 + $0x130] sm:$0xff]
        %v267 = vld [vmem:[%s186 + $0x138] sm:$0xff]
        %v268 = vld [vmem:[%s186 + $0x140] sm:$0xff]
        %v269 = vld [vmem:[%s186 + $0x148] sm:$0xff]
        %v270 = vld [vmem:[%s186 + $0x150] sm:$0xff]
        %v271 = vld [vmem:[%s186 + $0x158] sm:$0xff]
        %v272 = vld [vmem:[%s186 + $0x160] sm:$0xff]
        %v273 = vld [vmem:[%s186 + $0x168] sm:$0xff]
        %v274 = vld [vmem:[%s186 + $0x170] sm:$0xff]
        %v275 = vld [vmem:[%s186 + $0x178] sm:$0xff]
        %v276 = vld [vmem:[%s186 + $0x180] sm:$0xff]
        %v277 = vld [vmem:[%s186 + $0x188] sm:$0xff]
        %v278 = vld [vmem:[%s186 + $0x190] sm:$0xff]
        %v279 = vld [vmem:[%s186 + $0x198] sm:$0xff]
        %v280 = vld [vmem:[%s186 + $0x1a0] sm:$0xff]
        %v281 = vld [vmem:[%s186 + $0x1a8] sm:$0xff]
        %v282 = vld [vmem:[%s186 + $0x1b0] sm:$0xff]
        %v283 = vld [vmem:[%s186 + $0x1b8] sm:$0xff]
        %v284 = vld [vmem:[%s186 + $0x1c0] sm:$0xff]
        %v285 = vld [vmem:[%s186 + $0x1c8] sm:$0xff]
        %v286 = vld [vmem:[%s186 + $0x1d0] sm:$0xff]
        %v287 = vld [vmem:[%s186 + $0x1d8] sm:$0xff]
        %v288 = vld [vmem:[%s186 + $0x1e0] sm:$0xff]
        %v289 = vld [vmem:[%s186 + $0x1e8] sm:$0xff]
        %v290 = vld [vmem:[%s186 + $0x1f0] sm:$0xff]
        %v291 = vld [vmem:[%s186 + $0x1f8] sm:$0xff]
        %v292 = vld [vmem:[%s186 + $0x200] sm:$0xff]
        %v293 = vld [vmem:[%s186 + $0x208] sm:$0xff]
        %v294 = vld [vmem:[%s186 + $0x210] sm:$0xff]
        %v295 = vld [vmem:[%s186 + $0x218] sm:$0xff]
        %v296 = vld [vmem:[%s186 + $0x220] sm:$0xff]
        %v297 = vld [vmem:[%s186 + $0x228] sm:$0xff]
        %v298 = vld [vmem:[%s186 + $0x230] sm:$0xff]
        %v299 = vld [vmem:[%s186 + $0x238] sm:$0xff]
        %v300 = vld [vmem:[%s186 + $0x240] sm:$0xff]
        %v301 = vld [vmem:[%s186 + $0x248] sm:$0xff]
        %v302 = vld [vmem:[%s186 + $0x250] sm:$0xff]
        %v303 = vld [vmem:[%s186 + $0x258] sm:$0xff]
        %v304 = vld [vmem:[%s186 + $0x260] sm:$0xff]
        %v305 = vld [vmem:[%s186 + $0x268] sm:$0xff]
        %v306 = vld [vmem:[%s186 + $0x270] sm:$0xff]
        %v307 = vld [vmem:[%s186 + $0x278] sm:$0xff]
        %v308 = vld [vmem:[%s186 + $0x280] sm:$0xff]
        %v309 = vld [vmem:[%s186 + $0x288] sm:$0xff]
        %v310 = vld [vmem:[%s186 + $0x290] sm:$0xff]
        %v311 = vld [vmem:[%s186 + $0x298] sm:$0xff]
        %v312 = vld [vmem:[%s186 + $0x2a0] sm:$0xff]
        %v313 = vld [vmem:[%s186 + $0x2a8] sm:$0xff]
        %v314 = vld [vmem:[%s186 + $0x2b0] sm:$0xff]
        %v315 = vld [vmem:[%s186 + $0x2b8] sm:$0xff]
        %v316 = vld [vmem:[%s186 + $0x2c0] sm:$0xff]
        %v317 = vld [vmem:[%s186 + $0x2c8] sm:$0xff]
        %v318 = vld [vmem:[%s186 + $0x2d0] sm:$0xff]
        %v319 = vld [vmem:[%s186 + $0x2d8] sm:$0xff]
        %v320 = vld [vmem:[%s186 + $0x2e0] sm:$0xff]
        %v321 = vld [vmem:[%s186 + $0x2e8] sm:$0xff]
        %v322 = vld [vmem:[%s186 + $0x2f0] sm:$0xff]
        %v323 = vld [vmem:[%s186 + $0x2f8] sm:$0xff]
        %v324 = vld [vmem:[%s186 + $0x300] sm:$0xff]
        %v325 = vld [vmem:[%s186 + $0x308] sm:$0xff]
        %v326 = vld [vmem:[%s186 + $0x310] sm:$0xff]
        %v327 = vld [vmem:[%s186 + $0x318] sm:$0xff]
        %v328 = vld [vmem:[%s186 + $0x320] sm:$0xff]
        %v329 = vld [vmem:[%s186 + $0x328] sm:$0xff]
        %v330 = vld [vmem:[%s186 + $0x330] sm:$0xff]
        %v331 = vld [vmem:[%s186 + $0x338] sm:$0xff]
        %v332 = vld [vmem:[%s186 + $0x340] sm:$0xff]
        %v333 = vld [vmem:[%s186 + $0x348] sm:$0xff]
        %v334 = vld [vmem:[%s186 + $0x350] sm:$0xff]
        %v335 = vld [vmem:[%s186 + $0x358] sm:$0xff]
        %v336 = vld [vmem:[%s186 + $0x360] sm:$0xff]
        %v337 = vld [vmem:[%s186 + $0x368] sm:$0xff]
        %v338 = vld [vmem:[%s186 + $0x370] sm:$0xff]
        %v339 = vld [vmem:[%s186 + $0x378] sm:$0xff]
        %v340 = vld [vmem:[%s186 + $0x380] sm:$0xff]
        %v341 = vld [vmem:[%s186 + $0x388] sm:$0xff]
        %v342 = vld [vmem:[%s186 + $0x390] sm:$0xff]
        %v343 = vld [vmem:[%s186 + $0x398] sm:$0xff]
        %v344 = vld [vmem:[%s186 + $0x3a0] sm:$0xff]
        %v345 = vld [vmem:[%s186 + $0x3a8] sm:$0xff]
        %v346 = vld [vmem:[%s186 + $0x3b0] sm:$0xff]
        %v347 = vld [vmem:[%s186 + $0x3b8] sm:$0xff]
        %v348 = vld [vmem:[%s186 + $0x3c0] sm:$0xff]
        %v349 = vld [vmem:[%s186 + $0x3c8] sm:$0xff]
        %v350 = vld [vmem:[%s186 + $0x3d0] sm:$0xff]
        %v351 = vld [vmem:[%s186 + $0x3d8] sm:$0xff]
        %v352 = vld [vmem:[%s186 + $0x3e0] sm:$0xff]
        %v353 = vld [vmem:[%s186 + $0x3e8] sm:$0xff]
        %v354 = vld [vmem:[%s186 + $0x3f0] sm:$0xff]
        %v355 = vld [vmem:[%s186 + $0x3f8] sm:$0xff]
        %v356 = vld [vmem:[%s186 + $0x400] sm:$0xff]
        %v357 = vld [vmem:[%s186 + $0x408] sm:$0xff]
        %v358 = vld [vmem:[%s186 + $0x410] sm:$0xff]
        %v359 = vld [vmem:[%s186 + $0x418] sm:$0xff]
        %v360 = vld [vmem:[%s186 + $0x420] sm:$0xff]
        %v361 = vld [vmem:[%s186 + $0x428] sm:$0xff]
        %v362 = vld [vmem:[%s186 + $0x430] sm:$0xff]
        %v363 = vld [vmem:[%s186 + $0x438] sm:$0xff]
        %v364 = vld [vmem:[%s186 + $0x440] sm:$0xff]
        %v365 = vld [vmem:[%s186 + $0x448] sm:$0xff]
        %v366 = vld [vmem:[%s186 + $0x450] sm:$0xff]
        %v367 = vld [vmem:[%s186 + $0x458] sm:$0xff]
        %v368 = vld [vmem:[%s186 + $0x460] sm:$0xff]
        %v369 = vld [vmem:[%s186 + $0x468] sm:$0xff]
        %v370 = vld [vmem:[%s186 + $0x470] sm:$0xff]
        %v371 = vld [vmem:[%s186 + $0x478] sm:$0xff]
        %v372 = vld [vmem:[%s186 + $0x480] sm:$0xff]
        %v373 = vld [vmem:[%s186 + $0x488] sm:$0xff]
        %v374 = vld [vmem:[%s186 + $0x490] sm:$0xff]
        %v375 = vld [vmem:[%s186 + $0x498] sm:$0xff]
        %v376 = vld [vmem:[%s186 + $0x4a0] sm:$0xff]
        %v377 = vld [vmem:[%s186 + $0x4a8] sm:$0xff]
        %v378 = vld [vmem:[%s186 + $0x4b0] sm:$0xff]
        %v379 = vld [vmem:[%s186 + $0x4b8] sm:$0xff]
        %v380 = vld [vmem:[%s186 + $0x4c0] sm:$0xff]
        %v381 = vld [vmem:[%s186 + $0x4c8] sm:$0xff]
        %v382 = vld [vmem:[%s186 + $0x4d0] sm:$0xff]
        %v383 = vld [vmem:[%s186 + $0x4d8] sm:$0xff]
        %v384 = vld [vmem:[%s186 + $0x4e0] sm:$0xff]
        %v385 = vld [vmem:[%s186 + $0x4e8] sm:$0xff]
        %v386 = vld [vmem:[%s186 + $0x4f0] sm:$0xff]
        %v387 = vld [vmem:[%s186 + $0x4f8] sm:$0xff]
        %v388 = vld [vmem:[%s186 + $0x500] sm:$0xff]
        %v389 = vld [vmem:[%s186 + $0x508] sm:$0xff]
        %v390 = vld [vmem:[%s186 + $0x510] sm:$0xff]
        %v391 = vld [vmem:[%s186 + $0x518] sm:$0xff]
        %v392 = vld [vmem:[%s186 + $0x520] sm:$0xff]
        %v393 = vld [vmem:[%s186 + $0x528] sm:$0xff]
        %v394 = vld [vmem:[%s186 + $0x530] sm:$0xff]
        %v395 = vld [vmem:[%s186 + $0x538] sm:$0xff]
        %v396 = vld [vmem:[%s186 + $0x540] sm:$0xff]
        %v397 = vld [vmem:[%s186 + $0x548] sm:$0xff]
        %v398 = vld [vmem:[%s186 + $0x550] sm:$0xff]
        %v399 = vld [vmem:[%s186 + $0x558] sm:$0xff]
        %v400 = vld [vmem:[%s186 + $0x560] sm:$0xff]
        %v401 = vld [vmem:[%s186 + $0x568] sm:$0xff]
        %v402 = vld [vmem:[%s186 + $0x570] sm:$0xff]
        %v403 = vld [vmem:[%s186 + $0x578] sm:$0xff]
        %v404 = vld [vmem:[%s186 + $0x580] sm:$0xff]
        %v405 = vld [vmem:[%s186 + $0x588] sm:$0xff]
        %v406 = vld [vmem:[%s186 + $0x590] sm:$0xff]
        %v407 = vld [vmem:[%s186 + $0x598] sm:$0xff]
        %v408 = vld [vmem:[%s186 + $0x5a0] sm:$0xff]
        %v409 = vld [vmem:[%s186 + $0x5a8] sm:$0xff]
        %v410 = vld [vmem:[%s186 + $0x5b0] sm:$0xff]
        %v411 = vld [vmem:[%s186 + $0x5b8] sm:$0xff]
        %v412 = vld [vmem:[%s186 + $0x5c0] sm:$0xff]
        %v413 = vld [vmem:[%s186 + $0x5c8] sm:$0xff]
        %v414 = vld [vmem:[%s186 + $0x5d0] sm:$0xff]
        %v415 = vld [vmem:[%s186 + $0x5d8] sm:$0xff]
        %v416 = vld [vmem:[%s186 + $0x5e0] sm:$0xff]
        %v417 = vld [vmem:[%s186 + $0x5e8] sm:$0xff]
        %v418 = vld [vmem:[%s186 + $0x5f0] sm:$0xff]
        %v419 = vld [vmem:[%s186 + $0x5f8] sm:$0xff]
        %v420 = vld [vmem:[%s186 + $0x600] sm:$0xff]
        %v421 = vld [vmem:[%s186 + $0x608] sm:$0xff]
        %v422 = vld [vmem:[%s186 + $0x610] sm:$0xff]
        %v423 = vld [vmem:[%s186 + $0x618] sm:$0xff]
        %v424 = vld [vmem:[%s186 + $0x620] sm:$0xff]
        %v425 = vld [vmem:[%s186 + $0x628] sm:$0xff]
        %v426 = vld [vmem:[%s186 + $0x630] sm:$0xff]
        %v427 = vld [vmem:[%s186 + $0x638] sm:$0xff]
        %v428 = vld [vmem:[%s186 + $0x640] sm:$0xff]
        %v429 = vld [vmem:[%s186 + $0x648] sm:$0xff]
        %v430 = vld [vmem:[%s186 + $0x650] sm:$0xff]
        %v431 = vld [vmem:[%s186 + $0x658] sm:$0xff]
        %v432 = vld [vmem:[%s186 + $0x660] sm:$0xff]
        %v433 = vld [vmem:[%s186 + $0x668] sm:$0xff]
        %v434 = vld [vmem:[%s186 + $0x670] sm:$0xff]
        %v435 = vld [vmem:[%s186 + $0x678] sm:$0xff]
        %v436 = vld [vmem:[%s186 + $0x680] sm:$0xff]
        %v437 = vld [vmem:[%s186 + $0x688] sm:$0xff]
        %v438 = vld [vmem:[%s186 + $0x690] sm:$0xff]
        %v439 = vld [vmem:[%s186 + $0x698] sm:$0xff]
        %v440 = vld [vmem:[%s186 + $0x6a0] sm:$0xff]
        %v441 = vld [vmem:[%s186 + $0x6a8] sm:$0xff]
        %v442 = vld [vmem:[%s186 + $0x6b0] sm:$0xff]
        %v443 = vld [vmem:[%s186 + $0x6b8] sm:$0xff]
        %v444 = vld [vmem:[%s186 + $0x6c0] sm:$0xff]
        %v445 = vld [vmem:[%s186 + $0x6c8] sm:$0xff]
        %v446 = vld [vmem:[%s186 + $0x6d0] sm:$0xff]
        %v447 = vld [vmem:[%s186 + $0x6d8] sm:$0xff]
        %v448 = vld [vmem:[%s186 + $0x6e0] sm:$0xff]
        %v449 = vld [vmem:[%s186 + $0x6e8] sm:$0xff]
        %v450 = vld [vmem:[%s186 + $0x6f0] sm:$0xff]
        %v451 = vld [vmem:[%s186 + $0x6f8] sm:$0xff]
        %v452 = vld [vmem:[%s186 + $0x700] sm:$0xff]
        %v453 = vld [vmem:[%s186 + $0x708] sm:$0xff]
        %v454 = vld [vmem:[%s186 + $0x710] sm:$0xff]
        %v455 = vld [vmem:[%s186 + $0x718] sm:$0xff]
        %v456 = vld [vmem:[%s186 + $0x720] sm:$0xff]
        %v457 = vld [vmem:[%s186 + $0x728] sm:$0xff]
        %v458 = vld [vmem:[%s186 + $0x730] sm:$0xff]
        %v459 = vld [vmem:[%s186 + $0x738] sm:$0xff]
        %v460 = vld [vmem:[%s186 + $0x740] sm:$0xff]
        %v461 = vld [vmem:[%s186 + $0x748] sm:$0xff]
        %v462 = vld [vmem:[%s186 + $0x750] sm:$0xff]
        %v463 = vld [vmem:[%s186 + $0x758] sm:$0xff]
        %v464 = vld [vmem:[%s186 + $0x760] sm:$0xff]
        %v465 = vld [vmem:[%s186 + $0x768] sm:$0xff]
        %v466 = vld [vmem:[%s186 + $0x770] sm:$0xff]
        %v467 = vld [vmem:[%s186 + $0x778] sm:$0xff]
        %v468 = vld [vmem:[%s186 + $0x780] sm:$0xff]
        %v469 = vld [vmem:[%s186 + $0x788] sm:$0xff]
        %v470 = vld [vmem:[%s186 + $0x790] sm:$0xff]
        %v471 = vld [vmem:[%s186 + $0x798] sm:$0xff]
        %v472 = vld [vmem:[%s186 + $0x7a0] sm:$0xff]
        %v473 = vld [vmem:[%s186 + $0x7a8] sm:$0xff]
        %v474 = vld [vmem:[%s186 + $0x7b0] sm:$0xff]
        %v475 = vld [vmem:[%s186 + $0x7b8] sm:$0xff]
        %v476 = vld [vmem:[%s186 + $0x7c0] sm:$0xff]
        %v477 = vld [vmem:[%s186 + $0x7c8] sm:$0xff]
        %v478 = vld [vmem:[%s186 + $0x7d0] sm:$0xff]
        %v479 = vld [vmem:[%s186 + $0x7d8] sm:$0xff]
        %v480 = vld [vmem:[%s186 + $0x7e0] sm:$0xff]
        %v481 = vld [vmem:[%s186 + $0x7e8] sm:$0xff]
        %v482 = vld [vmem:[%s186 + $0x7f0] sm:$0xff]
        %v483 = vld [vmem:[%s186 + $0x7f8] sm:$0xff]
        %v484 = vld [vmem:[%s186 + $0x800] sm:$0xff]
        %v485 = vld [vmem:[%s186 + $0x808] sm:$0xff]
        %v486 = vld [vmem:[%s186 + $0x810] sm:$0xff]
        %v487 = vld [vmem:[%s186 + $0x818] sm:$0xff]
        %v488 = vld [vmem:[%s186 + $0x820] sm:$0xff]
        %v489 = vld [vmem:[%s186 + $0x828] sm:$0xff]
        %v490 = vld [vmem:[%s186 + $0x830] sm:$0xff]
        %v491 = vld [vmem:[%s186 + $0x838] sm:$0xff]
        %v492 = vld [vmem:[%s186 + $0x840] sm:$0xff]
        %v493 = vld [vmem:[%s186 + $0x848] sm:$0xff]
        %v494 = vld [vmem:[%s186 + $0x850] sm:$0xff]
        %v495 = vld [vmem:[%s186 + $0x858] sm:$0xff]
        %v496 = vld [vmem:[%s186 + $0x860] sm:$0xff]
        %v497 = vld [vmem:[%s186 + $0x868] sm:$0xff]
        %v498 = vld [vmem:[%s186 + $0x870] sm:$0xff]
        %v499 = vld [vmem:[%s186 + $0x878] sm:$0xff]
        %v500 = vld [vmem:[%s186 + $0x880] sm:$0xff]
        %v501 = vld [vmem:[%s186 + $0x888] sm:$0xff]
        %v502 = vld [vmem:[%s186 + $0x890] sm:$0xff]
        %v503 = vld [vmem:[%s186 + $0x898] sm:$0xff]
        %v504 = vld [vmem:[%s186 + $0x8a0] sm:$0xff]
        %v505 = vld [vmem:[%s186 + $0x8a8] sm:$0xff]
        %v506 = vld [vmem:[%s186 + $0x8b0] sm:$0xff]
        %v507 = vld [vmem:[%s186 + $0x8b8] sm:$0xff]
        %v508 = vld [vmem:[%s186 + $0x8c0] sm:$0xff]
        %v509 = vld [vmem:[%s186 + $0x8c8] sm:$0xff]
        %v510 = vld [vmem:[%s186 + $0x8d0] sm:$0xff]
        %v511 = vld [vmem:[%s186 + $0x8d8] sm:$0xff]
        %v512 = vld [vmem:[%s186 + $0x8e0] sm:$0xff]
        %v513 = vld [vmem:[%s186 + $0x8e8] sm:$0xff]
        %v514 = vld [vmem:[%s186 + $0x8f0] sm:$0xff]
        %v515 = vld [vmem:[%s186 + $0x8f8] sm:$0xff]
        %v516 = vld [vmem:[%s186 + $0x900] sm:$0xff]
        %v517 = vld [vmem:[%s186 + $0x908] sm:$0xff]
        %v518 = vld [vmem:[%s186 + $0x910] sm:$0xff]
        %v519 = vld [vmem:[%s186 + $0x918] sm:$0xff]
        %v520 = vld [vmem:[%s186 + $0x920] sm:$0xff]
        %v521 = vld [vmem:[%s186 + $0x928] sm:$0xff]
        %v522 = vld [vmem:[%s186 + $0x930] sm:$0xff]
        %v523 = vld [vmem:[%s186 + $0x938] sm:$0xff]
        %v524 = vld [vmem:[%s186 + $0x940] sm:$0xff]
        %v525 = vld [vmem:[%s186 + $0x948] sm:$0xff]
        %v526 = vld [vmem:[%s186 + $0x950] sm:$0xff]
        %v527 = vld [vmem:[%s186 + $0x958] sm:$0xff]
        %v528 = vld [vmem:[%s186 + $0x960] sm:$0xff]
        %v529 = vld [vmem:[%s186 + $0x968] sm:$0xff]
        %v530 = vld [vmem:[%s186 + $0x970] sm:$0xff]
        %v531 = vld [vmem:[%s186 + $0x978] sm:$0xff]
        %v532 = vld [vmem:[%s186 + $0x980] sm:$0xff]
        %v533 = vld [vmem:[%s186 + $0x988] sm:$0xff]
        %v534 = vld [vmem:[%s186 + $0x990] sm:$0xff]
        %v535 = vld [vmem:[%s186 + $0x998] sm:$0xff]
        %v536 = vld [vmem:[%s186 + $0x9a0] sm:$0xff]
        %v537 = vld [vmem:[%s186 + $0x9a8] sm:$0xff]
        %v538 = vld [vmem:[%s186 + $0x9b0] sm:$0xff]
        %v539 = vld [vmem:[%s186 + $0x9b8] sm:$0xff]
        %v540 = vld [vmem:[%s186 + $0x9c0] sm:$0xff]
        %v541 = vld [vmem:[%s186 + $0x9c8] sm:$0xff]
        %v542 = vld [vmem:[%s186 + $0x9d0] sm:$0xff]
        %v543 = vld [vmem:[%s186 + $0x9d8] sm:$0xff]
        %v544 = vld [vmem:[%s186 + $0x9e0] sm:$0xff]
        %v545 = vld [vmem:[%s186 + $0x9e8] sm:$0xff]
        %v546 = vld [vmem:[%s186 + $0x9f0] sm:$0xff]
        %v547 = vld [vmem:[%s186 + $0x9f8] sm:$0xff]
        %v548 = vld [vmem:[%s186 + $0xa00] sm:$0xff]
        %v549 = vld [vmem:[%s186 + $0xa08] sm:$0xff]
        %v550 = vld [vmem:[%s186 + $0xa10] sm:$0xff]
        %v551 = vld [vmem:[%s186 + $0xa18] sm:$0xff]
        %v552 = vld [vmem:[%s186 + $0xa20] sm:$0xff]
        %v553 = vld [vmem:[%s186 + $0xa28] sm:$0xff]
        %v554 = vld [vmem:[%s186 + $0xa30] sm:$0xff]
        %v555 = vld [vmem:[%s186 + $0xa38] sm:$0xff]
        %v556 = vld [vmem:[%s186 + $0xa40] sm:$0xff]
        %v557 = vld [vmem:[%s186 + $0xa48] sm:$0xff]
        %v558 = vld [vmem:[%s186 + $0xa50] sm:$0xff]
        %v559 = vld [vmem:[%s186 + $0xa58] sm:$0xff]
        %v560 = vld [vmem:[%s186 + $0xa60] sm:$0xff]
        %v561 = vld [vmem:[%s186 + $0xa68] sm:$0xff]
        %v562 = vld [vmem:[%s186 + $0xa70] sm:$0xff]
        %v563 = vld [vmem:[%s186 + $0xa78] sm:$0xff]
        %v564 = vld [vmem:[%s186 + $0xa80] sm:$0xff]
        %v565 = vld [vmem:[%s186 + $0xa88] sm:$0xff]
        %v566 = vld [vmem:[%s186 + $0xa90] sm:$0xff]
        %v567 = vld [vmem:[%s186 + $0xa98] sm:$0xff]
        %v568 = vld [vmem:[%s186 + $0xaa0] sm:$0xff]
        %v569 = vld [vmem:[%s186 + $0xaa8] sm:$0xff]
        %v570 = vld [vmem:[%s186 + $0xab0] sm:$0xff]
        %v571 = vld [vmem:[%s186 + $0xab8] sm:$0xff]
        %v572 = vld [vmem:[%s186 + $0xac0] sm:$0xff]
        %v573 = vld [vmem:[%s186 + $0xac8] sm:$0xff]
        %v574 = vld [vmem:[%s186 + $0xad0] sm:$0xff]
        %v575 = vld [vmem:[%s186 + $0xad8] sm:$0xff]
        %v576 = vld [vmem:[%s186 + $0xae0] sm:$0xff]
        %v577 = vld [vmem:[%s186 + $0xae8] sm:$0xff]
        %v578 = vld [vmem:[%s186 + $0xaf0] sm:$0xff]
        %v579 = vld [vmem:[%s186 + $0xaf8] sm:$0xff]
        %v580 = vld [vmem:[%s186 + $0xb00] sm:$0xff]
        %v581 = vld [vmem:[%s186 + $0xb08] sm:$0xff]
        %v582 = vld [vmem:[%s186 + $0xb10] sm:$0xff]
        %v583 = vld [vmem:[%s186 + $0xb18] sm:$0xff]
        %v584 = vld [vmem:[%s186 + $0xb20] sm:$0xff]
        %v585 = vld [vmem:[%s186 + $0xb28] sm:$0xff]
        %v586 = vld [vmem:[%s186 + $0xb30] sm:$0xff]
        %v587 = vld [vmem:[%s186 + $0xb38] sm:$0xff]
        %v588 = vld [vmem:[%s186 + $0xb40] sm:$0xff]
        %v589 = vld [vmem:[%s186 + $0xb48] sm:$0xff]
        %v590 = vld [vmem:[%s186 + $0xb50] sm:$0xff]
        %v591 = vld [vmem:[%s186 + $0xb58] sm:$0xff]
        %v592 = vld [vmem:[%s186 + $0xb60] sm:$0xff]
        %v593 = vld [vmem:[%s186 + $0xb68] sm:$0xff]
        %v594 = vld [vmem:[%s186 + $0xb70] sm:$0xff]
        %v595 = vld [vmem:[%s186 + $0xb78] sm:$0xff]
        %v596 = vld [vmem:[%s186 + $0xb80] sm:$0xff]
        %v597 = vld [vmem:[%s186 + $0xb88] sm:$0xff]
        %v598 = vld [vmem:[%s186 + $0xb90] sm:$0xff]
        %v599 = vld [vmem:[%s186 + $0xb98] sm:$0xff]
        %v600 = vld [vmem:[%s186 + $0xba0] sm:$0xff]
        %v601 = vld [vmem:[%s186 + $0xba8] sm:$0xff]
        %v602 = vld [vmem:[%s186 + $0xbb0] sm:$0xff]
        %v603 = vld [vmem:[%s186 + $0xbb8] sm:$0xff]
        %v604 = vld [vmem:[%s186 + $0xbc0] sm:$0xff]
        %v605 = vld [vmem:[%s186 + $0xbc8] sm:$0xff]
        %v606 = vld [vmem:[%s186 + $0xbd0] sm:$0xff]
        %v607 = vld [vmem:[%s186 + $0xbd8] sm:$0xff]
        %v608 = vld [vmem:[%s186 + $0xbe0] sm:$0xff]
        %v609 = vld [vmem:[%s186 + $0xbe8] sm:$0xff]
        %v610 = vld [vmem:[%s186 + $0xbf0] sm:$0xff]
        %v611 = vld [vmem:[%s186 + $0xbf8] sm:$0xff]
        %v612 = vld [vmem:[%s186 + $0xc00] sm:$0xff]
        %v613 = vld [vmem:[%s186 + $0xc08] sm:$0xff]
        %v614 = vld [vmem:[%s186 + $0xc10] sm:$0xff]
        %v615 = vld [vmem:[%s186 + $0xc18] sm:$0xff]
        %v616 = vld [vmem:[%s186 + $0xc20] sm:$0xff]
        %v617 = vld [vmem:[%s186 + $0xc28] sm:$0xff]
        %v618 = vld [vmem:[%s186 + $0xc30] sm:$0xff]
        %v619 = vld [vmem:[%s186 + $0xc38] sm:$0xff]
        %v620 = vld [vmem:[%s186 + $0xc40] sm:$0xff]
        %v621 = vld [vmem:[%s186 + $0xc48] sm:$0xff]
        %v622 = vld [vmem:[%s186 + $0xc50] sm:$0xff]
        %v623 = vld [vmem:[%s186 + $0xc58] sm:$0xff]
        %v624 = vld [vmem:[%s186 + $0xc60] sm:$0xff]
        %v625 = vld [vmem:[%s186 + $0xc68] sm:$0xff]
        %v626 = vld [vmem:[%s186 + $0xc70] sm:$0xff]
        %v627 = vld [vmem:[%s186 + $0xc78] sm:$0xff]
        %v628 = vld [vmem:[%s186 + $0xc80] sm:$0xff]
        %v629 = vld [vmem:[%s186 + $0xc88] sm:$0xff]
        %v630 = vld [vmem:[%s186 + $0xc90] sm:$0xff]
        %v631 = vld [vmem:[%s186 + $0xc98] sm:$0xff]
        %v632 = vld [vmem:[%s186 + $0xca0] sm:$0xff]
        %v633 = vld [vmem:[%s186 + $0xca8] sm:$0xff]
        %v634 = vld [vmem:[%s186 + $0xcb0] sm:$0xff]
        %v635 = vld [vmem:[%s186 + $0xcb8] sm:$0xff]
        %v636 = vld [vmem:[%s186 + $0xcc0] sm:$0xff]
        %v637 = vld [vmem:[%s186 + $0xcc8] sm:$0xff]
        %v638 = vld [vmem:[%s186 + $0xcd0] sm:$0xff]
        %v639 = vld [vmem:[%s186 + $0xcd8] sm:$0xff]
        %v640 = vld [vmem:[%s186 + $0xce0] sm:$0xff]
        %v641 = vld [vmem:[%s186 + $0xce8] sm:$0xff]
        %v642 = vld [vmem:[%s186 + $0xcf0] sm:$0xff]
        %v643 = vld [vmem:[%s186 + $0xcf8] sm:$0xff]
        %v644 = vld [vmem:[%s186 + $0xd00] sm:$0xff]
        %v645 = vld [vmem:[%s186 + $0xd08] sm:$0xff]
        %v646 = vld [vmem:[%s186 + $0xd10] sm:$0xff]
        %v647 = vld [vmem:[%s186 + $0xd18] sm:$0xff]
        %v648 = vld [vmem:[%s186 + $0xd20] sm:$0xff]
        %v649 = vld [vmem:[%s186 + $0xd28] sm:$0xff]
        %v650 = vld [vmem:[%s186 + $0xd30] sm:$0xff]
        %v651 = vld [vmem:[%s186 + $0xd38] sm:$0xff]
        %v652 = vld [vmem:[%s186 + $0xd40] sm:$0xff]
        %v653 = vld [vmem:[%s186 + $0xd48] sm:$0xff]
        %v654 = vld [vmem:[%s186 + $0xd50] sm:$0xff]
        %v655 = vld [vmem:[%s186 + $0xd58] sm:$0xff]
        %v656 = vld [vmem:[%s186 + $0xd60] sm:$0xff]
        %v657 = vld [vmem:[%s186 + $0xd68] sm:$0xff]
        %v658 = vld [vmem:[%s186 + $0xd70] sm:$0xff]
        %v659 = vld [vmem:[%s186 + $0xd78] sm:$0xff]
        %v660 = vld [vmem:[%s186 + $0xd80] sm:$0xff]
        %v661 = vld [vmem:[%s186 + $0xd88] sm:$0xff]
        %v662 = vld [vmem:[%s186 + $0xd90] sm:$0xff]
        %v663 = vld [vmem:[%s186 + $0xd98] sm:$0xff]
        %v664 = vld [vmem:[%s186 + $0xda0] sm:$0xff]
        %v665 = vld [vmem:[%s186 + $0xda8] sm:$0xff]
        %v666 = vld [vmem:[%s186 + $0xdb0] sm:$0xff]
        %v667 = vld [vmem:[%s186 + $0xdb8] sm:$0xff]
        %v668 = vld [vmem:[%s186 + $0xdc0] sm:$0xff]
        %v669 = vld [vmem:[%s186 + $0xdc8] sm:$0xff]
        %v670 = vld [vmem:[%s186 + $0xdd0] sm:$0xff]
        %v671 = vld [vmem:[%s186 + $0xdd8] sm:$0xff]
        %v672 = vld [vmem:[%s186 + $0xde0] sm:$0xff]
        %v673 = vld [vmem:[%s186 + $0xde8] sm:$0xff]
        %v674 = vld [vmem:[%s186 + $0xdf0] sm:$0xff]
        %v675 = vld [vmem:[%s186 + $0xdf8] sm:$0xff]
        %v676 = vld [vmem:[%s186 + $0xe00] sm:$0xff]
        %v677 = vld [vmem:[%s186 + $0xe08] sm:$0xff]
        %v678 = vld [vmem:[%s186 + $0xe10] sm:$0xff]
        %v679 = vld [vmem:[%s186 + $0xe18] sm:$0xff]
        %v680 = vld [vmem:[%s186 + $0xe20] sm:$0xff]
        %v681 = vld [vmem:[%s186 + $0xe28] sm:$0xff]
        %v682 = vld [vmem:[%s186 + $0xe30] sm:$0xff]
        %v683 = vld [vmem:[%s186 + $0xe38] sm:$0xff]
        %v684 = vld [vmem:[%s186 + $0xe40] sm:$0xff]
        %v685 = vld [vmem:[%s186 + $0xe48] sm:$0xff]
        %v686 = vld [vmem:[%s186 + $0xe50] sm:$0xff]
        %v687 = vld [vmem:[%s186 + $0xe58] sm:$0xff]
        %v688 = vld [vmem:[%s186 + $0xe60] sm:$0xff]
        %v689 = vld [vmem:[%s186 + $0xe68] sm:$0xff]
        %v690 = vld [vmem:[%s186 + $0xe70] sm:$0xff]
        %v691 = vld [vmem:[%s186 + $0xe78] sm:$0xff]
        %v692 = vld [vmem:[%s186 + $0xe80] sm:$0xff]
        %v693 = vld [vmem:[%s186 + $0xe88] sm:$0xff]
        %v694 = vld [vmem:[%s186 + $0xe90] sm:$0xff]
        %v695 = vld [vmem:[%s186 + $0xe98] sm:$0xff]
        %v696 = vld [vmem:[%s186 + $0xea0] sm:$0xff]
        %v697 = vld [vmem:[%s186 + $0xea8] sm:$0xff]
        %v698 = vld [vmem:[%s186 + $0xeb0] sm:$0xff]
        %v699 = vld [vmem:[%s186 + $0xeb8] sm:$0xff]
        %v700 = vld [vmem:[%s186 + $0xec0] sm:$0xff]
        %v701 = vld [vmem:[%s186 + $0xec8] sm:$0xff]
        %v702 = vld [vmem:[%s186 + $0xed0] sm:$0xff]
        %v703 = vld [vmem:[%s186 + $0xed8] sm:$0xff]
        %v704 = vld [vmem:[%s186 + $0xee0] sm:$0xff]
        %v705 = vld [vmem:[%s186 + $0xee8] sm:$0xff]
        %v706 = vld [vmem:[%s186 + $0xef0] sm:$0xff]
        %v707 = vld [vmem:[%s186 + $0xef8] sm:$0xff]
        %v708 = vld [vmem:[%s186 + $0xf00] sm:$0xff]
        %v709 = vld [vmem:[%s186 + $0xf08] sm:$0xff]
        %v710 = vld [vmem:[%s186 + $0xf10] sm:$0xff]
        %v711 = vld [vmem:[%s186 + $0xf18] sm:$0xff]
        %v712 = vld [vmem:[%s186 + $0xf20] sm:$0xff]
        %v713 = vld [vmem:[%s186 + $0xf28] sm:$0xff]
        %v714 = vld [vmem:[%s186 + $0xf30] sm:$0xff]
        %v715 = vld [vmem:[%s186 + $0xf38] sm:$0xff]
        %v716 = vld [vmem:[%s186 + $0xf40] sm:$0xff]
        %v717 = vld [vmem:[%s186 + $0xf48] sm:$0xff]
        %v718 = vld [vmem:[%s186 + $0xf50] sm:$0xff]
        %v719 = vld [vmem:[%s186 + $0xf58] sm:$0xff]
        %v720 = vld [vmem:[%s186 + $0xf60] sm:$0xff]
        %v721 = vld [vmem:[%s186 + $0xf68] sm:$0xff]
        %v722 = vld [vmem:[%s186 + $0xf70] sm:$0xff]
        %v723 = vld [vmem:[%s186 + $0xf78] sm:$0xff]
        %v724 = vld [vmem:[%s186 + $0xf80] sm:$0xff]
        %v725 = vld [vmem:[%s186 + $0xf88] sm:$0xff]
        %v726 = vld [vmem:[%s186 + $0xf90] sm:$0xff]
        %v727 = vld [vmem:[%s186 + $0xf98] sm:$0xff]
        %v728 = vld [vmem:[%s186 + $0xfa0] sm:$0xff]
        %v729 = vld [vmem:[%s186 + $0xfa8] sm:$0xff]
        %v730 = vld [vmem:[%s186 + $0xfb0] sm:$0xff]
        %v731 = vld [vmem:[%s186 + $0xfb8] sm:$0xff]
        %v732 = vld [vmem:[%s186 + $0xfc0] sm:$0xff]
        %v733 = vld [vmem:[%s186 + $0xfc8] sm:$0xff]
        %v734 = vld [vmem:[%s186 + $0xfd0] sm:$0xff]
        %v735 = vld [vmem:[%s186 + $0xfd8] sm:$0xff]
        %v736 = vld [vmem:[%s186 + $0xfe0] sm:$0xff]
        %v737 = vld [vmem:[%s186 + $0xfe8] sm:$0xff]
        %v738 = vld [vmem:[%s186 + $0xff0] sm:$0xff]
        %v739 = vld [vmem:[%s186 + $0xff8] sm:$0xff]
        %v740 = vld [vmem:[%s186 + $0x1000] sm:$0xff]
        %v741 = vld [vmem:[%s186 + $0x1008] sm:$0xff]
        %v742 = vld [vmem:[%s186 + $0x1010] sm:$0xff]
        %v743 = vld [vmem:[%s186 + $0x1018] sm:$0xff]
        %v744 = vld [vmem:[%s186 + $0x1020] sm:$0xff]
        %v745 = vld [vmem:[%s186 + $0x1028] sm:$0xff]
        %v746 = vld [vmem:[%s186 + $0x1030] sm:$0xff]
        %v747 = vld [vmem:[%s186 + $0x1038] sm:$0xff]
        %v748 = vld [vmem:[%s186 + $0x1040] sm:$0xff]
        %v749 = vld [vmem:[%s186 + $0x1048] sm:$0xff]
        %v750 = vld [vmem:[%s186 + $0x1050] sm:$0xff]
        %v751 = vld [vmem:[%s186 + $0x1058] sm:$0xff]
        %v752 = vld [vmem:[%s186 + $0x1060] sm:$0xff]
        %v753 = vld [vmem:[%s186 + $0x1068] sm:$0xff]
        %v754 = vld [vmem:[%s186 + $0x1070] sm:$0xff]
        %v755 = vld [vmem:[%s186 + $0x1078] sm:$0xff]
        %v756 = vld [vmem:[%s186 + $0x1080] sm:$0xff]
        %v757 = vld [vmem:[%s186 + $0x1088] sm:$0xff]
        %v758 = vld [vmem:[%s186 + $0x1090] sm:$0xff]
        %v759 = vld [vmem:[%s186 + $0x1098] sm:$0xff]
        %v760 = vld [vmem:[%s186 + $0x10a0] sm:$0xff]
        %v761 = vld [vmem:[%s186 + $0x10a8] sm:$0xff]
        %v762 = vld [vmem:[%s186 + $0x10b0] sm:$0xff]
        %v763 = vld [vmem:[%s186 + $0x10b8] sm:$0xff]
        %v764 = vld [vmem:[%s186 + $0x10c0] sm:$0xff]
        %v765 = vld [vmem:[%s186 + $0x10c8] sm:$0xff]
        %v766 = vld [vmem:[%s186 + $0x10d0] sm:$0xff]
        %v767 = vld [vmem:[%s186 + $0x10d8] sm:$0xff]
        %v768 = vld [vmem:[%s186 + $0x10e0] sm:$0xff]
        %v769 = vld [vmem:[%s186 + $0x10e8] sm:$0xff]
        %v770 = vld [vmem:[%s186 + $0x10f0] sm:$0xff]
        %v771 = vld [vmem:[%s186 + $0x10f8] sm:$0xff]
        %v772 = vld [vmem:[%s186 + $0x1100] sm:$0xff]
        %v773 = vld [vmem:[%s186 + $0x1108] sm:$0xff]
        %v774 = vld [vmem:[%s186 + $0x1110] sm:$0xff]
        %v775 = vld [vmem:[%s186 + $0x1118] sm:$0xff]
        %v776 = vld [vmem:[%s186 + $0x1120] sm:$0xff]
        %v777 = vld [vmem:[%s186 + $0x1128] sm:$0xff]
        %v778 = vld [vmem:[%s186 + $0x1130] sm:$0xff]
        %v779 = vld [vmem:[%s186 + $0x1138] sm:$0xff]
        %v780 = vld [vmem:[%s186 + $0x1140] sm:$0xff]
        %v781 = vld [vmem:[%s186 + $0x1148] sm:$0xff]
        %v782 = vld [vmem:[%s186 + $0x1150] sm:$0xff]
        %v783 = vld [vmem:[%s186 + $0x1158] sm:$0xff]
        %v784 = vld [vmem:[%s186 + $0x1160] sm:$0xff]
        %v785 = vld [vmem:[%s186 + $0x1168] sm:$0xff]
        %v786 = vld [vmem:[%s186 + $0x1170] sm:$0xff]
        %v787 = vld [vmem:[%s186 + $0x1178] sm:$0xff]
        %v788 = vld [vmem:[%s186 + $0x1180] sm:$0xff]
        %v789 = vld [vmem:[%s186 + $0x1188] sm:$0xff]
        %v790 = vld [vmem:[%s186 + $0x1190] sm:$0xff]
        %v791 = vld [vmem:[%s186 + $0x1198] sm:$0xff]
        %v792 = vld [vmem:[%s186 + $0x11a0] sm:$0xff]
        %v793 = vld [vmem:[%s186 + $0x11a8] sm:$0xff]
        %v794 = vld [vmem:[%s186 + $0x11b0] sm:$0xff]
        %v795 = vld [vmem:[%s186 + $0x11b8] sm:$0xff]
        %v796 = vld [vmem:[%s186 + $0x11c0] sm:$0xff]
        %v797 = vld [vmem:[%s186 + $0x11c8] sm:$0xff]
        %v798 = vld [vmem:[%s186 + $0x11d0] sm:$0xff]
        %v799 = vld [vmem:[%s186 + $0x11d8] sm:$0xff]
        %v800 = vld [vmem:[%s186 + $0x11e0] sm:$0xff]
        %v801 = vld [vmem:[%s186 + $0x11e8] sm:$0xff]
        %v802 = vld [vmem:[%s186 + $0x11f0] sm:$0xff]
        %v803 = vld [vmem:[%s186 + $0x11f8] sm:$0xff]
        %v804 = vld [vmem:[%s186 + $0x1200] sm:$0xff]
        %v805 = vld [vmem:[%s186 + $0x1208] sm:$0xff]
        %v806 = vld [vmem:[%s186 + $0x1210] sm:$0xff]
        %v807 = vld [vmem:[%s186 + $0x1218] sm:$0xff]
        %v808 = vld [vmem:[%s186 + $0x1220] sm:$0xff]
        %v809 = vld [vmem:[%s186 + $0x1228] sm:$0xff]
        %v810 = vld [vmem:[%s186 + $0x1230] sm:$0xff]
        %v811 = vld [vmem:[%s186 + $0x1238] sm:$0xff]
        %v812 = vld [vmem:[%s186 + $0x1240] sm:$0xff]
        %v813 = vld [vmem:[%s186 + $0x1248] sm:$0xff]
        %v814 = vld [vmem:[%s186 + $0x1250] sm:$0xff]
        %v815 = vld [vmem:[%s186 + $0x1258] sm:$0xff]
        %v816 = vld [vmem:[%s186 + $0x1260] sm:$0xff]
        %v817 = vld [vmem:[%s186 + $0x1268] sm:$0xff]
        %v818 = vld [vmem:[%s186 + $0x1270] sm:$0xff]
        %v819 = vld [vmem:[%s186 + $0x1278] sm:$0xff]
        %v820 = vld [vmem:[%s186 + $0x1280] sm:$0xff]
        %v821 = vld [vmem:[%s186 + $0x1288] sm:$0xff]
        %v822 = vld [vmem:[%s186 + $0x1290] sm:$0xff]
        %v823 = vld [vmem:[%s186 + $0x1298] sm:$0xff]
        %v824 = vld [vmem:[%s186 + $0x12a0] sm:$0xff]
        %v825 = vld [vmem:[%s186 + $0x12a8] sm:$0xff]
        %v826 = vld [vmem:[%s186 + $0x12b0] sm:$0xff]
        %v827 = vld [vmem:[%s186 + $0x12b8] sm:$0xff]
        %v828 = vld [vmem:[%s186 + $0x12c0] sm:$0xff]
        %v829 = vld [vmem:[%s186 + $0x12c8] sm:$0xff]
        %v830 = vld [vmem:[%s186 + $0x12d0] sm:$0xff]
        %v831 = vld [vmem:[%s186 + $0x12d8] sm:$0xff]
        %v832 = vld [vmem:[%s186 + $0x12e0] sm:$0xff]
        %v833 = vld [vmem:[%s186 + $0x12e8] sm:$0xff]
        %v834 = vld [vmem:[%s186 + $0x12f0] sm:$0xff]
        %v835 = vld [vmem:[%s186 + $0x12f8] sm:$0xff]
        %v836 = vld [vmem:[%s186 + $0x1300] sm:$0xff]
        %v837 = vld [vmem:[%s186 + $0x1308] sm:$0xff]
        %v838 = vld [vmem:[%s186 + $0x1310] sm:$0xff]
        %v839 = vld [vmem:[%s186 + $0x1318] sm:$0xff]
        %v840 = vld [vmem:[%s186 + $0x1320] sm:$0xff]
        %v841 = vld [vmem:[%s186 + $0x1328] sm:$0xff]
        %v842 = vld [vmem:[%s186 + $0x1330] sm:$0xff]
        %v843 = vld [vmem:[%s186 + $0x1338] sm:$0xff]
        %v844 = vld [vmem:[%s186 + $0x1340] sm:$0xff]
        %v845 = vld [vmem:[%s186 + $0x1348] sm:$0xff]
        %v846 = vld [vmem:[%s186 + $0x1350] sm:$0xff]
        %v847 = vld [vmem:[%s186 + $0x1358] sm:$0xff]
        %v848 = vld [vmem:[%s186 + $0x1360] sm:$0xff]
        %v849 = vld [vmem:[%s186 + $0x1368] sm:$0xff]
        %v850 = vld [vmem:[%s186 + $0x1370] sm:$0xff]
        %v851 = vld [vmem:[%s186 + $0x1378] sm:$0xff]
        %v852 = vld [vmem:[%s186 + $0x1380] sm:$0xff]
        %v853 = vld [vmem:[%s186 + $0x1388] sm:$0xff]
        %v854 = vld [vmem:[%s186 + $0x1390] sm:$0xff]
        %v855 = vld [vmem:[%s186 + $0x1398] sm:$0xff]
        %v856 = vld [vmem:[%s186 + $0x13a0] sm:$0xff]
        %v857 = vld [vmem:[%s186 + $0x13a8] sm:$0xff]
        %v858 = vld [vmem:[%s186 + $0x13b0] sm:$0xff]
        %v859 = vld [vmem:[%s186 + $0x13b8] sm:$0xff]
        %v860 = vld [vmem:[%s186 + $0x13c0] sm:$0xff]
        %v861 = vld [vmem:[%s186 + $0x13c8] sm:$0xff]
        %v862 = vld [vmem:[%s186 + $0x13d0] sm:$0xff]
        %v863 = vld [vmem:[%s186 + $0x13d8] sm:$0xff]
        %v864 = vld [vmem:[%s186 + $0x13e0] sm:$0xff]
        %v865 = vld [vmem:[%s186 + $0x13e8] sm:$0xff]
        %v866 = vld [vmem:[%s186 + $0x13f0] sm:$0xff]
        %v867 = vld [vmem:[%s186 + $0x13f8] sm:$0xff]
        %v868 = vld [vmem:[%s186 + $0x1400] sm:$0xff]
        %v869 = vld [vmem:[%s186 + $0x1408] sm:$0xff]
        %v870 = vld [vmem:[%s186 + $0x1410] sm:$0xff]
        %v871 = vld [vmem:[%s186 + $0x1418] sm:$0xff]
        %v872 = vld [vmem:[%s186 + $0x1420] sm:$0xff]
        %v873 = vld [vmem:[%s186 + $0x1428] sm:$0xff]
        %v874 = vld [vmem:[%s186 + $0x1430] sm:$0xff]
        %v875 = vld [vmem:[%s186 + $0x1438] sm:$0xff]
        %v876 = vld [vmem:[%s186 + $0x1440] sm:$0xff]
        %v877 = vld [vmem:[%s186 + $0x1448] sm:$0xff]
        %v878 = vld [vmem:[%s186 + $0x1450] sm:$0xff]
        %v879 = vld [vmem:[%s186 + $0x1458] sm:$0xff]
        %v880 = vld [vmem:[%s186 + $0x1460] sm:$0xff]
        %v881 = vld [vmem:[%s186 + $0x1468] sm:$0xff]
        %v882 = vld [vmem:[%s186 + $0x1470] sm:$0xff]
        %v883 = vld [vmem:[%s186 + $0x1478] sm:$0xff]
        %v884 = vld [vmem:[%s186 + $0x1480] sm:$0xff]
        %v885 = vld [vmem:[%s186 + $0x1488] sm:$0xff]
        %v886 = vld [vmem:[%s186 + $0x1490] sm:$0xff]
        %v887 = vld [vmem:[%s186 + $0x1498] sm:$0xff]
        %v888 = vld [vmem:[%s186 + $0x14a0] sm:$0xff]
        %v889 = vld [vmem:[%s186 + $0x14a8] sm:$0xff]
        %v890 = vld [vmem:[%s186 + $0x14b0] sm:$0xff]
        %v891 = vld [vmem:[%s186 + $0x14b8] sm:$0xff]
        %v892 = vld [vmem:[%s186 + $0x14c0] sm:$0xff]
        %v893 = vld [vmem:[%s186 + $0x14c8] sm:$0xff]
        %v894 = vld [vmem:[%s186 + $0x14d0] sm:$0xff]
        %v895 = vld [vmem:[%s186 + $0x14d8] sm:$0xff]
        %v896 = vld [vmem:[%s186 + $0x14e0] sm:$0xff]
        %v897 = vld [vmem:[%s186 + $0x14e8] sm:$0xff]
        %v898 = vld [vmem:[%s186 + $0x14f0] sm:$0xff]
        %v899 = vld [vmem:[%s186 + $0x14f8] sm:$0xff]
        %v900 = vld [vmem:[%s186 + $0x1500] sm:$0xff]
        %v901 = vld [vmem:[%s186 + $0x1508] sm:$0xff]
        %v902 = vld [vmem:[%s186 + $0x1510] sm:$0xff]
        %v903 = vld [vmem:[%s186 + $0x1518] sm:$0xff]
        %v904 = vld [vmem:[%s186 + $0x1520] sm:$0xff]
        %v905 = vld [vmem:[%s186 + $0x1528] sm:$0xff]
        %v906 = vld [vmem:[%s186 + $0x1530] sm:$0xff]
        %v907 = vld [vmem:[%s186 + $0x1538] sm:$0xff]
        %v908 = vld [vmem:[%s186 + $0x1540] sm:$0xff]
        %v909 = vld [vmem:[%s186 + $0x1548] sm:$0xff]
        %v910 = vld [vmem:[%s186 + $0x1550] sm:$0xff]
        %v911 = vld [vmem:[%s186 + $0x1558] sm:$0xff]
        %v912 = vld [vmem:[%s186 + $0x1560] sm:$0xff]
        %v913 = vld [vmem:[%s186 + $0x1568] sm:$0xff]
        %v914 = vld [vmem:[%s186 + $0x1570] sm:$0xff]
        %v915 = vld [vmem:[%s186 + $0x1578] sm:$0xff]
        %v916 = vld [vmem:[%s186 + $0x1580] sm:$0xff]
        %v917 = vld [vmem:[%s186 + $0x1588] sm:$0xff]
        %v918 = vld [vmem:[%s186 + $0x1590] sm:$0xff]
        %v919 = vld [vmem:[%s186 + $0x1598] sm:$0xff]
        %v920 = vld [vmem:[%s186 + $0x15a0] sm:$0xff]
        %v921 = vld [vmem:[%s186 + $0x15a8] sm:$0xff]
        %v922 = vld [vmem:[%s186 + $0x15b0] sm:$0xff]
        %v923 = vld [vmem:[%s186 + $0x15b8] sm:$0xff]
        %v924 = vld [vmem:[%s186 + $0x15c0] sm:$0xff]
        %v925 = vld [vmem:[%s186 + $0x15c8] sm:$0xff]
        %v926 = vld [vmem:[%s186 + $0x15d0] sm:$0xff]
        %v927 = vld [vmem:[%s186 + $0x15d8] sm:$0xff]
        %v928 = vld [vmem:[%s186 + $0x15e0] sm:$0xff]
        %v929 = vld [vmem:[%s186 + $0x15e8] sm:$0xff]
        %v930 = vld [vmem:[%s186 + $0x15f0] sm:$0xff]
        %v931 = vld [vmem:[%s186 + $0x15f8] sm:$0xff]
        %v932 = vld [vmem:[%s186 + $0x1600] sm:$0xff]
        %v933 = vld [vmem:[%s186 + $0x1608] sm:$0xff]
        %v934 = vld [vmem:[%s186 + $0x1610] sm:$0xff]
        %v935 = vld [vmem:[%s186 + $0x1618] sm:$0xff]
        %v936 = vld [vmem:[%s186 + $0x1620] sm:$0xff]
        %v937 = vld [vmem:[%s186 + $0x1628] sm:$0xff]
        %v938 = vld [vmem:[%s186 + $0x1630] sm:$0xff]
        %v939 = vld [vmem:[%s186 + $0x1638] sm:$0xff]
        %v940 = vld [vmem:[%s186 + $0x1640] sm:$0xff]
        %v941 = vld [vmem:[%s186 + $0x1648] sm:$0xff]
        %v942 = vld [vmem:[%s186 + $0x1650] sm:$0xff]
        %v943 = vld [vmem:[%s186 + $0x1658] sm:$0xff]
        %v944 = vld [vmem:[%s186 + $0x1660] sm:$0xff]
        %v945 = vld [vmem:[%s186 + $0x1668] sm:$0xff]
        %v946 = vld [vmem:[%s186 + $0x1670] sm:$0xff]
        %v947 = vld [vmem:[%s186 + $0x1678] sm:$0xff]
        %v948 = vld [vmem:[%s186 + $0x1680] sm:$0xff]
        %v949 = vld [vmem:[%s186 + $0x1688] sm:$0xff]
        %v950 = vld [vmem:[%s186 + $0x1690] sm:$0xff]
        %v951 = vld [vmem:[%s186 + $0x1698] sm:$0xff]
        %v952 = vld [vmem:[%s186 + $0x16a0] sm:$0xff]
        %v953 = vld [vmem:[%s186 + $0x16a8] sm:$0xff]
        %v954 = vld [vmem:[%s186 + $0x16b0] sm:$0xff]
        %v955 = vld [vmem:[%s186 + $0x16b8] sm:$0xff]
        %v956 = vld [vmem:[%s186 + $0x16c0] sm:$0xff]
        %v957 = vld [vmem:[%s186 + $0x16c8] sm:$0xff]
        %v958 = vld [vmem:[%s186 + $0x16d0] sm:$0xff]
        %v959 = vld [vmem:[%s186 + $0x16d8] sm:$0xff]
        %v960 = vld [vmem:[%s186 + $0x16e0] sm:$0xff]
        %v961 = vld [vmem:[%s186 + $0x16e8] sm:$0xff]
        %v962 = vld [vmem:[%s186 + $0x16f0] sm:$0xff]
        %v963 = vld [vmem:[%s186 + $0x16f8] sm:$0xff]
        %v964 = vld [vmem:[%s186 + $0x1700] sm:$0xff]
        %v965 = vld [vmem:[%s186 + $0x1708] sm:$0xff]
        %v966 = vld [vmem:[%s186 + $0x1710] sm:$0xff]
        %v967 = vld [vmem:[%s186 + $0x1718] sm:$0xff]
        %v968 = vld [vmem:[%s186 + $0x1720] sm:$0xff]
        %v969 = vld [vmem:[%s186 + $0x1728] sm:$0xff]
        %v970 = vld [vmem:[%s186 + $0x1730] sm:$0xff]
        %v971 = vld [vmem:[%s186 + $0x1738] sm:$0xff]
        %v972 = vld [vmem:[%s186 + $0x1740] sm:$0xff]
        %v973 = vld [vmem:[%s186 + $0x1748] sm:$0xff]
        %v974 = vld [vmem:[%s186 + $0x1750] sm:$0xff]
        %v975 = vld [vmem:[%s186 + $0x1758] sm:$0xff]
        %v976 = vld [vmem:[%s186 + $0x1760] sm:$0xff]
        %v977 = vld [vmem:[%s186 + $0x1768] sm:$0xff]
        %v978 = vld [vmem:[%s186 + $0x1770] sm:$0xff]
        %v979 = vld [vmem:[%s186 + $0x1778] sm:$0xff]
        %v980 = vld [vmem:[%s186 + $0x1780] sm:$0xff]
        %v981 = vld [vmem:[%s186 + $0x1788] sm:$0xff]
        %v982 = vld [vmem:[%s186 + $0x1790] sm:$0xff]
        %v983 = vld [vmem:[%s186 + $0x1798] sm:$0xff]
        %v984 = vld [vmem:[%s186 + $0x17a0] sm:$0xff]
        %v985 = vld [vmem:[%s186 + $0x17a8] sm:$0xff]
        %v986 = vld [vmem:[%s186 + $0x17b0] sm:$0xff]
        %v987 = vld [vmem:[%s186 + $0x17b8] sm:$0xff]
        %v988 = vld [vmem:[%s186 + $0x17c0] sm:$0xff]
        %v989 = vld [vmem:[%s186 + $0x17c8] sm:$0xff]
        %v990 = vld [vmem:[%s186 + $0x17d0] sm:$0xff]
        %v991 = vld [vmem:[%s186 + $0x17d8] sm:$0xff]
        %v992 = vld [vmem:[%s186 + $0x17e0] sm:$0xff]
        %v993 = vld [vmem:[%s186 + $0x17e8] sm:$0xff]
        %v994 = vld [vmem:[%s186 + $0x17f0] sm:$0xff]
        %v995 = vld [vmem:[%s186 + $0x17f8] sm:$0xff]
        %v996 = vld [vmem:[%s186 + $0x1800] sm:$0xff]
        %v997 = vld [vmem:[%s186 + $0x1808] sm:$0xff]
        %v998 = vld [vmem:[%s186 + $0x1810] sm:$0xff]
        %v999 = vld [vmem:[%s186 + $0x1818] sm:$0xff]
        %v1000 = vld [vmem:[%s186 + $0x1820] sm:$0xff]
        %v1001 = vld [vmem:[%s186 + $0x1828] sm:$0xff]
        %v1002 = vld [vmem:[%s186 + $0x1830] sm:$0xff]
        %v1003 = vld [vmem:[%s186 + $0x1838] sm:$0xff]
        %v1004 = vld [vmem:[%s186 + $0x1840] sm:$0xff]
        %v1005 = vld [vmem:[%s186 + $0x1848] sm:$0xff]
        %v1006 = vld [vmem:[%s186 + $0x1850] sm:$0xff]
        %v1007 = vld [vmem:[%s186 + $0x1858] sm:$0xff]
        %v1008 = vld [vmem:[%s186 + $0x1860] sm:$0xff]
        %v1009 = vld [vmem:[%s186 + $0x1868] sm:$0xff]
        %v1010 = vld [vmem:[%s186 + $0x1870] sm:$0xff]
        %v1011 = vld [vmem:[%s186 + $0x1878] sm:$0xff]
        %v1012 = vld [vmem:[%s186 + $0x1880] sm:$0xff]
        %v1013 = vld [vmem:[%s186 + $0x1888] sm:$0xff]
        %v1014 = vld [vmem:[%s186 + $0x1890] sm:$0xff]
        %v1015 = vld [vmem:[%s186 + $0x1898] sm:$0xff]
        %v1016 = vld [vmem:[%s186 + $0x18a0] sm:$0xff]
        %v1017 = vld [vmem:[%s186 + $0x18a8] sm:$0xff]
        %v1018 = vld [vmem:[%s186 + $0x18b0] sm:$0xff]
        %v1019 = vld [vmem:[%s186 + $0x18b8] sm:$0xff]
        %v1020 = vld [vmem:[%s186 + $0x18c0] sm:$0xff]
        %v1021 = vld [vmem:[%s186 + $0x18c8] sm:$0xff]
        %v1022 = vld [vmem:[%s186 + $0x18d0] sm:$0xff]
        %v1023 = vld [vmem:[%s186 + $0x18d8] sm:$0xff]
        %v1024 = vld [vmem:[%s186 + $0x18e0] sm:$0xff]
        %v1025 = vld [vmem:[%s186 + $0x18e8] sm:$0xff]
        %v1026 = vld [vmem:[%s186 + $0x18f0] sm:$0xff]
        %v1027 = vld [vmem:[%s186 + $0x18f8] sm:$0xff]
        %v1028 = vld [vmem:[%s186 + $0x1900] sm:$0xff]
        %v1029 = vld [vmem:[%s186 + $0x1908] sm:$0xff]
        %v1030 = vld [vmem:[%s186 + $0x1910] sm:$0xff]
        %v1031 = vld [vmem:[%s186 + $0x1918] sm:$0xff]
        %v1032 = vld [vmem:[%s186 + $0x1920] sm:$0xff]
        %v1033 = vld [vmem:[%s186 + $0x1928] sm:$0xff]
        %v1034 = vld [vmem:[%s186 + $0x1930] sm:$0xff]
        %v1035 = vld [vmem:[%s186 + $0x1938] sm:$0xff]
        %v1036 = vld [vmem:[%s186 + $0x1940] sm:$0xff]
        %v1037 = vld [vmem:[%s186 + $0x1948] sm:$0xff]
        %v1038 = vld [vmem:[%s186 + $0x1950] sm:$0xff]
        %v1039 = vld [vmem:[%s186 + $0x1958] sm:$0xff]
        %v1040 = vld [vmem:[%s186 + $0x1960] sm:$0xff]
        %v1041 = vld [vmem:[%s186 + $0x1968] sm:$0xff]
        %v1042 = vld [vmem:[%s186 + $0x1970] sm:$0xff]
        %v1043 = vld [vmem:[%s186 + $0x1978] sm:$0xff]
        %v1044 = vld [vmem:[%s186 + $0x1980] sm:$0xff]
        %v1045 = vld [vmem:[%s186 + $0x1988] sm:$0xff]
        %v1046 = vld [vmem:[%s186 + $0x1990] sm:$0xff]
        %v1047 = vld [vmem:[%s186 + $0x1998] sm:$0xff]
        %v1048 = vld [vmem:[%s186 + $0x19a0] sm:$0xff]
        %v1049 = vld [vmem:[%s186 + $0x19a8] sm:$0xff]
        %v1050 = vld [vmem:[%s186 + $0x19b0] sm:$0xff]
        %v1051 = vld [vmem:[%s186 + $0x19b8] sm:$0xff]
        %v1052 = vld [vmem:[%s186 + $0x19c0] sm:$0xff]
        %v1053 = vld [vmem:[%s186 + $0x19c8] sm:$0xff]
        %v1054 = vld [vmem:[%s186 + $0x19d0] sm:$0xff]
        %v1055 = vld [vmem:[%s186 + $0x19d8] sm:$0xff]
        %v1056 = vld [vmem:[%s186 + $0x19e0] sm:$0xff]
        %v1057 = vld [vmem:[%s186 + $0x19e8] sm:$0xff]
        %v1058 = vld [vmem:[%s186 + $0x19f0] sm:$0xff]
        %v1059 = vld [vmem:[%s186 + $0x19f8] sm:$0xff]
        %v1060 = vld [vmem:[%s186 + $0x1a00] sm:$0xff]
        %v1061 = vld [vmem:[%s186 + $0x1a08] sm:$0xff]
        %v1062 = vld [vmem:[%s186 + $0x1a10] sm:$0xff]
        %v1063 = vld [vmem:[%s186 + $0x1a18] sm:$0xff]
        %v1064 = vld [vmem:[%s186 + $0x1a20] sm:$0xff]
        %v1065 = vld [vmem:[%s186 + $0x1a28] sm:$0xff]
        %v1066 = vld [vmem:[%s186 + $0x1a30] sm:$0xff]
        %v1067 = vld [vmem:[%s186 + $0x1a38] sm:$0xff]
        %v1068 = vld [vmem:[%s186 + $0x1a40] sm:$0xff]
        %v1069 = vld [vmem:[%s186 + $0x1a48] sm:$0xff]
        %v1070 = vld [vmem:[%s186 + $0x1a50] sm:$0xff]
        %v1071 = vld [vmem:[%s186 + $0x1a58] sm:$0xff]
        %v1072 = vld [vmem:[%s186 + $0x1a60] sm:$0xff]
        %v1073 = vld [vmem:[%s186 + $0x1a68] sm:$0xff]
        %v1074 = vld [vmem:[%s186 + $0x1a70] sm:$0xff]
        %v1075 = vld [vmem:[%s186 + $0x1a78] sm:$0xff]
        %v1076 = vld [vmem:[%s186 + $0x1a80] sm:$0xff]
        %v1077 = vld [vmem:[%s186 + $0x1a88] sm:$0xff]
        %v1078 = vld [vmem:[%s186 + $0x1a90] sm:$0xff]
        %v1079 = vld [vmem:[%s186 + $0x1a98] sm:$0xff]
        %v1080 = vld [vmem:[%s186 + $0x1aa0] sm:$0xff]
        %v1081 = vld [vmem:[%s186 + $0x1aa8] sm:$0xff]
        %v1082 = vld [vmem:[%s186 + $0x1ab0] sm:$0xff]
        %v1083 = vld [vmem:[%s186 + $0x1ab8] sm:$0xff]
        %v1084 = vld [vmem:[%s186 + $0x1ac0] sm:$0xff]
        %v1085 = vld [vmem:[%s186 + $0x1ac8] sm:$0xff]
        %v1086 = vld [vmem:[%s186 + $0x1ad0] sm:$0xff]
        %v1087 = vld [vmem:[%s186 + $0x1ad8] sm:$0xff]
        %v1088 = vld [vmem:[%s186 + $0x1ae0] sm:$0xff]
        %v1089 = vld [vmem:[%s186 + $0x1ae8] sm:$0xff]
        %v1090 = vld [vmem:[%s186 + $0x1af0] sm:$0xff]
        %v1091 = vld [vmem:[%s186 + $0x1af8] sm:$0xff]
        %v1092 = vld [vmem:[%s186 + $0x1b00] sm:$0xff]
        %v1093 = vld [vmem:[%s186 + $0x1b08] sm:$0xff]
        %v1094 = vld [vmem:[%s186 + $0x1b10] sm:$0xff]
        %v1095 = vld [vmem:[%s186 + $0x1b18] sm:$0xff]
        %v1096 = vld [vmem:[%s186 + $0x1b20] sm:$0xff]
        %v1097 = vld [vmem:[%s186 + $0x1b28] sm:$0xff]
        %v1098 = vld [vmem:[%s186 + $0x1b30] sm:$0xff]
        %v1099 = vld [vmem:[%s186 + $0x1b38] sm:$0xff]
        %v1100 = vld [vmem:[%s186 + $0x1b40] sm:$0xff]
        %v1101 = vld [vmem:[%s186 + $0x1b48] sm:$0xff]
        %v1102 = vld [vmem:[%s186 + $0x1b50] sm:$0xff]
        %v1103 = vld [vmem:[%s186 + $0x1b58] sm:$0xff]
        %v1104 = vld [vmem:[%s186 + $0x1b60] sm:$0xff]
        %v1105 = vld [vmem:[%s186 + $0x1b68] sm:$0xff]
        %v1106 = vld [vmem:[%s186 + $0x1b70] sm:$0xff]
        %v1107 = vld [vmem:[%s186 + $0x1b78] sm:$0xff]
        %v1108 = vld [vmem:[%s186 + $0x1b80] sm:$0xff]
        %v1109 = vld [vmem:[%s186 + $0x1b88] sm:$0xff]
        %v1110 = vld [vmem:[%s186 + $0x1b90] sm:$0xff]
        %v1111 = vld [vmem:[%s186 + $0x1b98] sm:$0xff]
        %v1112 = vld [vmem:[%s186 + $0x1ba0] sm:$0xff]
        %v1113 = vld [vmem:[%s186 + $0x1ba8] sm:$0xff]
        %v1114 = vld [vmem:[%s186 + $0x1bb0] sm:$0xff]
        %v1115 = vld [vmem:[%s186 + $0x1bb8] sm:$0xff]
        %v1116 = vld [vmem:[%s186 + $0x1bc0] sm:$0xff]
        %v1117 = vld [vmem:[%s186 + $0x1bc8] sm:$0xff]
        %v1118 = vld [vmem:[%s186 + $0x1bd0] sm:$0xff]
        %v1119 = vld [vmem:[%s186 + $0x1bd8] sm:$0xff]
        %v1120 = vld [vmem:[%s186 + $0x1be0] sm:$0xff]
        %v1121 = vld [vmem:[%s186 + $0x1be8] sm:$0xff]
        %v1122 = vld [vmem:[%s186 + $0x1bf0] sm:$0xff]
        %v1123 = vld [vmem:[%s186 + $0x1bf8] sm:$0xff]
        %v1124 = vld [vmem:[%s186 + $0x1c00] sm:$0xff]
        %v1125 = vld [vmem:[%s186 + $0x1c08] sm:$0xff]
        %v1126 = vld [vmem:[%s186 + $0x1c10] sm:$0xff]
        %v1127 = vld [vmem:[%s186 + $0x1c18] sm:$0xff]
        %v1128 = vld [vmem:[%s186 + $0x1c20] sm:$0xff]
        %v1129 = vld [vmem:[%s186 + $0x1c28] sm:$0xff]
        %v1130 = vld [vmem:[%s186 + $0x1c30] sm:$0xff]
        %v1131 = vld [vmem:[%s186 + $0x1c38] sm:$0xff]
        %v1132 = vld [vmem:[%s186 + $0x1c40] sm:$0xff]
        %v1133 = vld [vmem:[%s186 + $0x1c48] sm:$0xff]
        %v1134 = vld [vmem:[%s186 + $0x1c50] sm:$0xff]
        %v1135 = vld [vmem:[%s186 + $0x1c58] sm:$0xff]
        %v1136 = vld [vmem:[%s186 + $0x1c60] sm:$0xff]
        %v1137 = vld [vmem:[%s186 + $0x1c68] sm:$0xff]
        %v1138 = vld [vmem:[%s186 + $0x1c70] sm:$0xff]
        %v1139 = vld [vmem:[%s186 + $0x1c78] sm:$0xff]
        %v1140 = vld [vmem:[%s186 + $0x1c80] sm:$0xff]
        %v1141 = vld [vmem:[%s186 + $0x1c88] sm:$0xff]
        %v1142 = vld [vmem:[%s186 + $0x1c90] sm:$0xff]
        %v1143 = vld [vmem:[%s186 + $0x1c98] sm:$0xff]
        %v1144 = vld [vmem:[%s186 + $0x1ca0] sm:$0xff]
        %v1145 = vld [vmem:[%s186 + $0x1ca8] sm:$0xff]
        %v1146 = vld [vmem:[%s186 + $0x1cb0] sm:$0xff]
        %v1147 = vld [vmem:[%s186 + $0x1cb8] sm:$0xff]
        %v1148 = vld [vmem:[%s186 + $0x1cc0] sm:$0xff]
        %v1149 = vld [vmem:[%s186 + $0x1cc8] sm:$0xff]
        %v1150 = vld [vmem:[%s186 + $0x1cd0] sm:$0xff]
        %v1151 = vld [vmem:[%s186 + $0x1cd8] sm:$0xff]
        %v1152 = vld [vmem:[%s186 + $0x1ce0] sm:$0xff]
        %v1153 = vld [vmem:[%s186 + $0x1ce8] sm:$0xff]
        %v1154 = vld [vmem:[%s186 + $0x1cf0] sm:$0xff]
        %v1155 = vld [vmem:[%s186 + $0x1cf8] sm:$0xff]
        %v1156 = vld [vmem:[%s186 + $0x1d00] sm:$0xff]
        %v1157 = vld [vmem:[%s186 + $0x1d08] sm:$0xff]
        %v1158 = vld [vmem:[%s186 + $0x1d10] sm:$0xff]
        %v1159 = vld [vmem:[%s186 + $0x1d18] sm:$0xff]
        %v1160 = vld [vmem:[%s186 + $0x1d20] sm:$0xff]
        %v1161 = vld [vmem:[%s186 + $0x1d28] sm:$0xff]
        %v1162 = vld [vmem:[%s186 + $0x1d30] sm:$0xff]
        %v1163 = vld [vmem:[%s186 + $0x1d38] sm:$0xff]
        %v1164 = vld [vmem:[%s186 + $0x1d40] sm:$0xff]
        %v1165 = vld [vmem:[%s186 + $0x1d48] sm:$0xff]
        %v1166 = vld [vmem:[%s186 + $0x1d50] sm:$0xff]
        %v1167 = vld [vmem:[%s186 + $0x1d58] sm:$0xff]
        %v1168 = vld [vmem:[%s186 + $0x1d60] sm:$0xff]
        %v1169 = vld [vmem:[%s186 + $0x1d68] sm:$0xff]
        %v1170 = vld [vmem:[%s186 + $0x1d70] sm:$0xff]
        %v1171 = vld [vmem:[%s186 + $0x1d78] sm:$0xff]
        %v1172 = vld [vmem:[%s186 + $0x1d80] sm:$0xff]
        %v1173 = vld [vmem:[%s186 + $0x1d88] sm:$0xff]
        %v1174 = vld [vmem:[%s186 + $0x1d90] sm:$0xff]
        %v1175 = vld [vmem:[%s186 + $0x1d98] sm:$0xff]
        %v1176 = vld [vmem:[%s186 + $0x1da0] sm:$0xff]
        %v1177 = vld [vmem:[%s186 + $0x1da8] sm:$0xff]
        %v1178 = vld [vmem:[%s186 + $0x1db0] sm:$0xff]
        %v1179 = vld [vmem:[%s186 + $0x1db8] sm:$0xff]
        %v1180 = vld [vmem:[%s186 + $0x1dc0] sm:$0xff]
        %v1181 = vld [vmem:[%s186 + $0x1dc8] sm:$0xff]
        %v1182 = vld [vmem:[%s186 + $0x1dd0] sm:$0xff]
        %v1183 = vld [vmem:[%s186 + $0x1dd8] sm:$0xff]
        %v1184 = vld [vmem:[%s186 + $0x1de0] sm:$0xff]
        %v1185 = vld [vmem:[%s186 + $0x1de8] sm:$0xff]
        %v1186 = vld [vmem:[%s186 + $0x1df0] sm:$0xff]
        %v1187 = vld [vmem:[%s186 + $0x1df8] sm:$0xff]
        %v1188 = vld [vmem:[%s186 + $0x1e00] sm:$0xff]
        %v1189 = vld [vmem:[%s186 + $0x1e08] sm:$0xff]
        %v1190 = vld [vmem:[%s186 + $0x1e10] sm:$0xff]
        %v1191 = vld [vmem:[%s186 + $0x1e18] sm:$0xff]
        %v1192 = vld [vmem:[%s186 + $0x1e20] sm:$0xff]
        %v1193 = vld [vmem:[%s186 + $0x1e28] sm:$0xff]
        %v1194 = vld [vmem:[%s186 + $0x1e30] sm:$0xff]
        %v1195 = vld [vmem:[%s186 + $0x1e38] sm:$0xff]
        %v1196 = vld [vmem:[%s186 + $0x1e40] sm:$0xff]
        %v1197 = vld [vmem:[%s186 + $0x1e48] sm:$0xff]
        %v1198 = vld [vmem:[%s186 + $0x1e50] sm:$0xff]
        %v1199 = vld [vmem:[%s186 + $0x1e58] sm:$0xff]
        %v1200 = vld [vmem:[%s186 + $0x1e60] sm:$0xff]
        %v1201 = vld [vmem:[%s186 + $0x1e68] sm:$0xff]
        %v1202 = vld [vmem:[%s186 + $0x1e70] sm:$0xff]
        %v1203 = vld [vmem:[%s186 + $0x1e78] sm:$0xff]
        %v1204 = vld [vmem:[%s186 + $0x1e80] sm:$0xff]
        %v1205 = vld [vmem:[%s186 + $0x1e88] sm:$0xff]
        %v1206 = vld [vmem:[%s186 + $0x1e90] sm:$0xff]
        %v1207 = vld [vmem:[%s186 + $0x1e98] sm:$0xff]
        %v1208 = vld [vmem:[%s186 + $0x1ea0] sm:$0xff]
        %v1209 = vld [vmem:[%s186 + $0x1ea8] sm:$0xff]
        %v1210 = vld [vmem:[%s186 + $0x1eb0] sm:$0xff]
        %v1211 = vld [vmem:[%s186 + $0x1eb8] sm:$0xff]
        %v1212 = vld [vmem:[%s186 + $0x1ec0] sm:$0xff]
        %v1213 = vld [vmem:[%s186 + $0x1ec8] sm:$0xff]
        %v1214 = vld [vmem:[%s186 + $0x1ed0] sm:$0xff]
        %v1215 = vld [vmem:[%s186 + $0x1ed8] sm:$0xff]
        %v1216 = vld [vmem:[%s186 + $0x1ee0] sm:$0xff]
        %v1217 = vld [vmem:[%s186 + $0x1ee8] sm:$0xff]
        %v1218 = vld [vmem:[%s186 + $0x1ef0] sm:$0xff]
        %v1219 = vld [vmem:[%s186 + $0x1ef8] sm:$0xff]
        %v1220 = vld [vmem:[%s186 + $0x1f00] sm:$0xff]
        %v1221 = vld [vmem:[%s186 + $0x1f08] sm:$0xff]
        %v1222 = vld [vmem:[%s186 + $0x1f10] sm:$0xff]
        %v1223 = vld [vmem:[%s186 + $0x1f18] sm:$0xff]
        %v1224 = vld [vmem:[%s186 + $0x1f20] sm:$0xff]
        %v1225 = vld [vmem:[%s186 + $0x1f28] sm:$0xff]
        %v1226 = vld [vmem:[%s186 + $0x1f30] sm:$0xff]
        %v1227 = vld [vmem:[%s186 + $0x1f38] sm:$0xff]
        %v1228 = vld [vmem:[%s186 + $0x1f40] sm:$0xff]
        %v1229 = vld [vmem:[%s186 + $0x1f48] sm:$0xff]
        %v1230 = vld [vmem:[%s186 + $0x1f50] sm:$0xff]
        %v1231 = vld [vmem:[%s186 + $0x1f58] sm:$0xff]
        %v1232 = vld [vmem:[%s186 + $0x1f60] sm:$0xff]
        %v1233 = vld [vmem:[%s186 + $0x1f68] sm:$0xff]
        %v1234 = vld [vmem:[%s186 + $0x1f70] sm:$0xff]
        %v1235 = vld [vmem:[%s186 + $0x1f78] sm:$0xff]
        %v1236 = vld [vmem:[%s186 + $0x1f80] sm:$0xff]
        %v1237 = vld [vmem:[%s186 + $0x1f88] sm:$0xff]
        %v1238 = vld [vmem:[%s186 + $0x1f90] sm:$0xff]
        %v1239 = vld [vmem:[%s186 + $0x1f98] sm:$0xff]
        %v1240 = vld [vmem:[%s186 + $0x1fa0] sm:$0xff]
        %v1241 = vld [vmem:[%s186 + $0x1fa8] sm:$0xff]
        %v1242 = vld [vmem:[%s186 + $0x1fb0] sm:$0xff]
        %v1243 = vld [vmem:[%s186 + $0x1fb8] sm:$0xff]
        %v1244 = vld [vmem:[%s186 + $0x1fc0] sm:$0xff]
        %v1245 = vld [vmem:[%s186 + $0x1fc8] sm:$0xff]
        %v1246 = vld [vmem:[%s186 + $0x1fd0] sm:$0xff]
        %v1247 = vld [vmem:[%s186 + $0x1fd8] sm:$0xff]
        %v1248 = vld [vmem:[%s186 + $0x1fe0] sm:$0xff]
        %v1249 = vld [vmem:[%s186 + $0x1fe8] sm:$0xff]
        %v1250 = vld [vmem:[%s186 + $0x1ff0] sm:$0xff]
        %v1251 = vld [vmem:[%s186 + $0x1ff8] sm:$0xff]
        %v1252 = vld [vmem:[%s186 + $0x2000] sm:$0xff]
        %v1253 = vld [vmem:[%s186 + $0x2008] sm:$0xff]
        %v1254 = vld [vmem:[%s186 + $0x2010] sm:$0xff]
        %v1255 = vld [vmem:[%s186 + $0x2018] sm:$0xff]
        %v1256 = vld [vmem:[%s186 + $0x2020] sm:$0xff]
        %v1257 = vld [vmem:[%s186 + $0x2028] sm:$0xff]
        %v1258 = vld [vmem:[%s186 + $0x2030] sm:$0xff]
        %v1259 = vld [vmem:[%s186 + $0x2038] sm:$0xff]
        %v1260 = vld [vmem:[%s186 + $0x2040] sm:$0xff]
        %v1261 = vld [vmem:[%s186 + $0x2048] sm:$0xff]
        %v1262 = vld [vmem:[%s186 + $0x2050] sm:$0xff]
        %v1263 = vld [vmem:[%s186 + $0x2058] sm:$0xff]
        %v1264 = vld [vmem:[%s186 + $0x2060] sm:$0xff]
        %v1265 = vld [vmem:[%s186 + $0x2068] sm:$0xff]
        %v1266 = vld [vmem:[%s186 + $0x2070] sm:$0xff]
        %v1267 = vld [vmem:[%s186 + $0x2078] sm:$0xff]
        %v1268 = vld [vmem:[%s186 + $0x2080] sm:$0xff]
        %v1269 = vld [vmem:[%s186 + $0x2088] sm:$0xff]
        %v1270 = vld [vmem:[%s186 + $0x2090] sm:$0xff]
        %v1271 = vld [vmem:[%s186 + $0x2098] sm:$0xff]
        %v1272 = vld [vmem:[%s186 + $0x20a0] sm:$0xff]
        %v1273 = vld [vmem:[%s186 + $0x20a8] sm:$0xff]
        %v1274 = vld [vmem:[%s186 + $0x20b0] sm:$0xff]
        %v1275 = vld [vmem:[%s186 + $0x20b8] sm:$0xff]
        %v1276 = vld [vmem:[%s186 + $0x20c0] sm:$0xff]
        %v1277 = vld [vmem:[%s186 + $0x20c8] sm:$0xff]
        %v1278 = vld [vmem:[%s186 + $0x20d0] sm:$0xff]
        %v1279 = vld [vmem:[%s186 + $0x20d8] sm:$0xff]
        %v1280 = vld [vmem:[%s186 + $0x20e0] sm:$0xff]
        %v1281 = vld [vmem:[%s186 + $0x20e8] sm:$0xff]
        %v1282 = vld [vmem:[%s186 + $0x20f0] sm:$0xff]
        %v1283 = vld [vmem:[%s186 + $0x20f8] sm:$0xff]
        %v1284 = vld [vmem:[%s186 + $0x2100] sm:$0xff]
        %v1285 = vld [vmem:[%s186 + $0x2108] sm:$0xff]
        %v1286 = vld [vmem:[%s186 + $0x2110] sm:$0xff]
        %v1287 = vld [vmem:[%s186 + $0x2118] sm:$0xff]
        %v1288 = vld [vmem:[%s186 + $0x2120] sm:$0xff]
        %v1289 = vld [vmem:[%s186 + $0x2128] sm:$0xff]
        %v1290 = vld [vmem:[%s186 + $0x2130] sm:$0xff]
        %v1291 = vld [vmem:[%s186 + $0x2138] sm:$0xff]
        %v1292 = vld [vmem:[%s186 + $0x2140] sm:$0xff]
        %v1293 = vld [vmem:[%s186 + $0x2148] sm:$0xff]
        %v1294 = vld [vmem:[%s186 + $0x2150] sm:$0xff]
        %v1295 = vld [vmem:[%s186 + $0x2158] sm:$0xff]
        %v1296 = vld [vmem:[%s186 + $0x2160] sm:$0xff]
        %v1297 = vld [vmem:[%s186 + $0x2168] sm:$0xff]
        %v1298 = vld [vmem:[%s186 + $0x2170] sm:$0xff]
        %v1299 = vld [vmem:[%s186 + $0x2178] sm:$0xff]
        %v1300 = vld [vmem:[%s186 + $0x2180] sm:$0xff]
        %v1301 = vld [vmem:[%s186 + $0x2188] sm:$0xff]
        %v1302 = vld [vmem:[%s186 + $0x2190] sm:$0xff]
        %v1303 = vld [vmem:[%s186 + $0x2198] sm:$0xff]
        %v1304 = vld [vmem:[%s186 + $0x21a0] sm:$0xff]
        %v1305 = vld [vmem:[%s186 + $0x21a8] sm:$0xff]
        %v1306 = vld [vmem:[%s186 + $0x21b0] sm:$0xff]
        %v1307 = vld [vmem:[%s186 + $0x21b8] sm:$0xff]
        %v1308 = vld [vmem:[%s186 + $0x21c0] sm:$0xff]
        %v1309 = vld [vmem:[%s186 + $0x21c8] sm:$0xff]
        %v1310 = vld [vmem:[%s186 + $0x21d0] sm:$0xff]
        %v1311 = vld [vmem:[%s186 + $0x21d8] sm:$0xff]
        %v1312 = vld [vmem:[%s186 + $0x21e0] sm:$0xff]
        %v1313 = vld [vmem:[%s186 + $0x21e8] sm:$0xff]
        %v1314 = vld [vmem:[%s186 + $0x21f0] sm:$0xff]
        %v1315 = vld [vmem:[%s186 + $0x21f8] sm:$0xff]
        %v1316 = vld [vmem:[%s186 + $0x2200] sm:$0xff]
        %v1317 = vld [vmem:[%s186 + $0x2208] sm:$0xff]
        %v1318 = vld [vmem:[%s186 + $0x2210] sm:$0xff]
        %v1319 = vld [vmem:[%s186 + $0x2218] sm:$0xff]
        %v1320 = vld [vmem:[%s186 + $0x2220] sm:$0xff]
        %v1321 = vld [vmem:[%s186 + $0x2228] sm:$0xff]
        %v1322 = vld [vmem:[%s186 + $0x2230] sm:$0xff]
        %v1323 = vld [vmem:[%s186 + $0x2238] sm:$0xff]
        %v1324 = vld [vmem:[%s186 + $0x2240] sm:$0xff]
        %v1325 = vld [vmem:[%s186 + $0x2248] sm:$0xff]
        %v1326 = vld [vmem:[%s186 + $0x2250] sm:$0xff]
        %v1327 = vld [vmem:[%s186 + $0x2258] sm:$0xff]
        %v1328 = vld [vmem:[%s186 + $0x2260] sm:$0xff]
        %v1329 = vld [vmem:[%s186 + $0x2268] sm:$0xff]
        %v1330 = vld [vmem:[%s186 + $0x2270] sm:$0xff]
        %v1331 = vld [vmem:[%s186 + $0x2278] sm:$0xff]
        %v1332 = vld [vmem:[%s186 + $0x2280] sm:$0xff]
        %v1333 = vld [vmem:[%s186 + $0x2288] sm:$0xff]
        %v1334 = vld [vmem:[%s186 + $0x2290] sm:$0xff]
        %v1335 = vld [vmem:[%s186 + $0x2298] sm:$0xff]
        %v1336 = vld [vmem:[%s186 + $0x22a0] sm:$0xff]
        %v1337 = vld [vmem:[%s186 + $0x22a8] sm:$0xff]
        %v1338 = vld [vmem:[%s186 + $0x22b0] sm:$0xff]
        %v1339 = vld [vmem:[%s186 + $0x22b8] sm:$0xff]
        %v1340 = vld [vmem:[%s186 + $0x22c0] sm:$0xff]
        %v1341 = vld [vmem:[%s186 + $0x22c8] sm:$0xff]
        %v1342 = vld [vmem:[%s186 + $0x22d0] sm:$0xff]
        %v1343 = vld [vmem:[%s186 + $0x22d8] sm:$0xff]
        %v1344 = vld [vmem:[%s186 + $0x22e0] sm:$0xff]
        %v1345 = vld [vmem:[%s186 + $0x22e8] sm:$0xff]
        %v1346 = vld [vmem:[%s186 + $0x22f0] sm:$0xff]
        %v1347 = vld [vmem:[%s186 + $0x22f8] sm:$0xff]
        %v1348 = vld [vmem:[%s186 + $0x2300] sm:$0xff]
        %v1349 = vld [vmem:[%s186 + $0x2308] sm:$0xff]
        %v1350 = vld [vmem:[%s186 + $0x2310] sm:$0xff]
        %v1351 = vld [vmem:[%s186 + $0x2318] sm:$0xff]
        %v1352 = vld [vmem:[%s186 + $0x2320] sm:$0xff]
        %v1353 = vld [vmem:[%s186 + $0x2328] sm:$0xff]
        %v1354 = vld [vmem:[%s186 + $0x2330] sm:$0xff]
        %v1355 = vld [vmem:[%s186 + $0x2338] sm:$0xff]
        %v1356 = vld [vmem:[%s186 + $0x2340] sm:$0xff]
        %v1357 = vld [vmem:[%s186 + $0x2348] sm:$0xff]
        %v1358 = vld [vmem:[%s186 + $0x2350] sm:$0xff]
        %v1359 = vld [vmem:[%s186 + $0x2358] sm:$0xff]
        %v1360 = vld [vmem:[%s186 + $0x2360] sm:$0xff]
        %v1361 = vld [vmem:[%s186 + $0x2368] sm:$0xff]
        %v1362 = vld [vmem:[%s186 + $0x2370] sm:$0xff]
        %v1363 = vld [vmem:[%s186 + $0x2378] sm:$0xff]
        %v1364 = vld [vmem:[%s186 + $0x2380] sm:$0xff]
        %v1365 = vld [vmem:[%s186 + $0x2388] sm:$0xff]
        %v1366 = vld [vmem:[%s186 + $0x2390] sm:$0xff]
        %v1367 = vld [vmem:[%s186 + $0x2398] sm:$0xff]
        %v1368 = vld [vmem:[%s186 + $0x23a0] sm:$0xff]
        %v1369 = vld [vmem:[%s186 + $0x23a8] sm:$0xff]
        %v1370 = vld [vmem:[%s186 + $0x23b0] sm:$0xff]
        %v1371 = vld [vmem:[%s186 + $0x23b8] sm:$0xff]
        %v1372 = vld [vmem:[%s186 + $0x23c0] sm:$0xff]
        %v1373 = vld [vmem:[%s186 + $0x23c8] sm:$0xff]
        %v1374 = vld [vmem:[%s186 + $0x23d0] sm:$0xff]
        %v1375 = vld [vmem:[%s186 + $0x23d8] sm:$0xff]
        %v1376 = vld [vmem:[%s186 + $0x23e0] sm:$0xff]
        %v1377 = vld [vmem:[%s186 + $0x23e8] sm:$0xff]
        %v1378 = vld [vmem:[%s186 + $0x23f0] sm:$0xff]
        %v1379 = vld [vmem:[%s186 + $0x23f8] sm:$0xff]
        %v1380 = vld [vmem:[%s186 + $0x2400] sm:$0xff]
        %v1381 = vld [vmem:[%s186 + $0x2408] sm:$0xff]
        %v1382 = vld [vmem:[%s186 + $0x2410] sm:$0xff]
        %v1383 = vld [vmem:[%s186 + $0x2418] sm:$0xff]
        %v1384 = vld [vmem:[%s186 + $0x2420] sm:$0xff]
        %v1385 = vld [vmem:[%s186 + $0x2428] sm:$0xff]
        %v1386 = vld [vmem:[%s186 + $0x2430] sm:$0xff]
        %v1387 = vld [vmem:[%s186 + $0x2438] sm:$0xff]
        %v1388 = vld [vmem:[%s186 + $0x2440] sm:$0xff]
        %v1389 = vld [vmem:[%s186 + $0x2448] sm:$0xff]
        %v1390 = vld [vmem:[%s186 + $0x2450] sm:$0xff]
        %v1391 = vld [vmem:[%s186 + $0x2458] sm:$0xff]
        %v1392 = vld [vmem:[%s186 + $0x2460] sm:$0xff]
        %v1393 = vld [vmem:[%s186 + $0x2468] sm:$0xff]
        %v1394 = vld [vmem:[%s186 + $0x2470] sm:$0xff]
        %v1395 = vld [vmem:[%s186 + $0x2478] sm:$0xff]
        %v1396 = vld [vmem:[%s186 + $0x2480] sm:$0xff]
        %v1397 = vld [vmem:[%s186 + $0x2488] sm:$0xff]
        %v1398 = vld [vmem:[%s186 + $0x2490] sm:$0xff]
        %v1399 = vld [vmem:[%s186 + $0x2498] sm:$0xff]
        %v1400 = vld [vmem:[%s186 + $0x24a0] sm:$0xff]
        %v1401 = vld [vmem:[%s186 + $0x24a8] sm:$0xff]
        %v1402 = vld [vmem:[%s186 + $0x24b0] sm:$0xff]
        %v1403 = vld [vmem:[%s186 + $0x24b8] sm:$0xff]
        %v1404 = vld [vmem:[%s186 + $0x24c0] sm:$0xff]
        %v1405 = vld [vmem:[%s186 + $0x24c8] sm:$0xff]
        %v1406 = vld [vmem:[%s186 + $0x24d0] sm:$0xff]
        %v1407 = vld [vmem:[%s186 + $0x24d8] sm:$0xff]
        %v1408 = vld [vmem:[%s186 + $0x24e0] sm:$0xff]
        %v1409 = vld [vmem:[%s186 + $0x24e8] sm:$0xff]
        %v1410 = vld [vmem:[%s186 + $0x24f0] sm:$0xff]
        %v1411 = vld [vmem:[%s186 + $0x24f8] sm:$0xff]
        %v1412 = vld [vmem:[%s186 + $0x2500] sm:$0xff]
        %v1413 = vld [vmem:[%s186 + $0x2508] sm:$0xff]
        %v1414 = vld [vmem:[%s186 + $0x2510] sm:$0xff]
        %v1415 = vld [vmem:[%s186 + $0x2518] sm:$0xff]
        %v1416 = vld [vmem:[%s186 + $0x2520] sm:$0xff]
        %v1417 = vld [vmem:[%s186 + $0x2528] sm:$0xff]
        %v1418 = vld [vmem:[%s186 + $0x2530] sm:$0xff]
        %v1419 = vld [vmem:[%s186 + $0x2538] sm:$0xff]
        %v1420 = vld [vmem:[%s186 + $0x2540] sm:$0xff]
        %v1421 = vld [vmem:[%s186 + $0x2548] sm:$0xff]
        %v1422 = vld [vmem:[%s186 + $0x2550] sm:$0xff]
        %v1423 = vld [vmem:[%s186 + $0x2558] sm:$0xff]
        %v1424 = vld [vmem:[%s186 + $0x2560] sm:$0xff]
        %v1425 = vld [vmem:[%s186 + $0x2568] sm:$0xff]
        %v1426 = vld [vmem:[%s186 + $0x2570] sm:$0xff]
        %v1427 = vld [vmem:[%s186 + $0x2578] sm:$0xff]
        %v1428 = vld [vmem:[%s186 + $0x2580] sm:$0xff]
        %v1429 = vld [vmem:[%s186 + $0x2588] sm:$0xff]
        %v1430 = vld [vmem:[%s186 + $0x2590] sm:$0xff]
        %v1431 = vld [vmem:[%s186 + $0x2598] sm:$0xff]
        %v1432 = vld [vmem:[%s186 + $0x25a0] sm:$0xff]
        %v1433 = vld [vmem:[%s186 + $0x25a8] sm:$0xff]
        %v1434 = vld [vmem:[%s186 + $0x25b0] sm:$0xff]
        %v1435 = vld [vmem:[%s186 + $0x25b8] sm:$0xff]
        %v1436 = vld [vmem:[%s186 + $0x25c0] sm:$0xff]
        %v1437 = vld [vmem:[%s186 + $0x25c8] sm:$0xff]
        %v1438 = vld [vmem:[%s186 + $0x25d0] sm:$0xff]
        %v1439 = vld [vmem:[%s186 + $0x25d8] sm:$0xff]
        %v1440 = vld [vmem:[%s186 + $0x25e0] sm:$0xff]
        %v1441 = vld [vmem:[%s186 + $0x25e8] sm:$0xff]
        %v1442 = vld [vmem:[%s186 + $0x25f0] sm:$0xff]
        %v1443 = vld [vmem:[%s186 + $0x25f8] sm:$0xff]
        %v1444 = vld [vmem:[%s186 + $0x2600] sm:$0xff]
        %v1445 = vld [vmem:[%s186 + $0x2608] sm:$0xff]
        %v1446 = vld [vmem:[%s186 + $0x2610] sm:$0xff]
        %v1447 = vld [vmem:[%s186 + $0x2618] sm:$0xff]
        %v1448 = vld [vmem:[%s186 + $0x2620] sm:$0xff]
        %v1449 = vld [vmem:[%s186 + $0x2628] sm:$0xff]
        %v1450 = vld [vmem:[%s186 + $0x2630] sm:$0xff]
        %v1451 = vld [vmem:[%s186 + $0x2638] sm:$0xff]
        %v1452 = vld [vmem:[%s186 + $0x2640] sm:$0xff]
        %v1453 = vld [vmem:[%s186 + $0x2648] sm:$0xff]
        %v1454 = vld [vmem:[%s186 + $0x2650] sm:$0xff]
        %v1455 = vld [vmem:[%s186 + $0x2658] sm:$0xff]
        %v1456 = vld [vmem:[%s186 + $0x2660] sm:$0xff]
        %v1457 = vld [vmem:[%s186 + $0x2668] sm:$0xff]
        %v1458 = vld [vmem:[%s186 + $0x2670] sm:$0xff]
        %v1459 = vld [vmem:[%s186 + $0x2678] sm:$0xff]
        %v1460 = vld [vmem:[%s186 + $0x2680] sm:$0xff]
        %v1461 = vld [vmem:[%s186 + $0x2688] sm:$0xff]
        %v1462 = vld [vmem:[%s186 + $0x2690] sm:$0xff]
        %v1463 = vld [vmem:[%s186 + $0x2698] sm:$0xff]
        %v1464 = vld [vmem:[%s186 + $0x26a0] sm:$0xff]
        %v1465 = vld [vmem:[%s186 + $0x26a8] sm:$0xff]
        %v1466 = vld [vmem:[%s186 + $0x26b0] sm:$0xff]
        %v1467 = vld [vmem:[%s186 + $0x26b8] sm:$0xff]
        %v1468 = vld [vmem:[%s186 + $0x26c0] sm:$0xff]
        %v1469 = vld [vmem:[%s186 + $0x26c8] sm:$0xff]
        %v1470 = vld [vmem:[%s186 + $0x26d0] sm:$0xff]
        %v1471 = vld [vmem:[%s186 + $0x26d8] sm:$0xff]
        %v1472 = vld [vmem:[%s186 + $0x26e0] sm:$0xff]
        %v1473 = vld [vmem:[%s186 + $0x26e8] sm:$0xff]
        %v1474 = vld [vmem:[%s186 + $0x26f0] sm:$0xff]
        %v1475 = vld [vmem:[%s186 + $0x26f8] sm:$0xff]
        %v1476 = vld [vmem:[%s186 + $0x2700] sm:$0xff]
        %v1477 = vld [vmem:[%s186 + $0x2708] sm:$0xff]
        %v1478 = vld [vmem:[%s186 + $0x2710] sm:$0xff]
        %v1479 = vld [vmem:[%s186 + $0x2718] sm:$0xff]
        %v1480 = vld [vmem:[%s186 + $0x2720] sm:$0xff]
        %v1481 = vld [vmem:[%s186 + $0x2728] sm:$0xff]
        %v1482 = vld [vmem:[%s186 + $0x2730] sm:$0xff]
        %v1483 = vld [vmem:[%s186 + $0x2738] sm:$0xff]
        %v1484 = vld [vmem:[%s186 + $0x2740] sm:$0xff]
        %v1485 = vld [vmem:[%s186 + $0x2748] sm:$0xff]
        %v1486 = vld [vmem:[%s186 + $0x2750] sm:$0xff]
        %v1487 = vld [vmem:[%s186 + $0x2758] sm:$0xff]
        %v1488 = vld [vmem:[%s186 + $0x2760] sm:$0xff]
        %v1489 = vld [vmem:[%s186 + $0x2768] sm:$0xff]
        %v1490 = vld [vmem:[%s186 + $0x2770] sm:$0xff]
        %v1491 = vld [vmem:[%s186 + $0x2778] sm:$0xff]
        %v1492 = vld [vmem:[%s186 + $0x2780] sm:$0xff]
        %v1493 = vld [vmem:[%s186 + $0x2788] sm:$0xff]
        %v1494 = vld [vmem:[%s186 + $0x2790] sm:$0xff]
        %v1495 = vld [vmem:[%s186 + $0x2798] sm:$0xff]
        %v1496 = vld [vmem:[%s186 + $0x27a0] sm:$0xff]
        %v1497 = vld [vmem:[%s186 + $0x27a8] sm:$0xff]
        %v1498 = vld [vmem:[%s186 + $0x27b0] sm:$0xff]
        %v1499 = vld [vmem:[%s186 + $0x27b8] sm:$0xff]
        %v1500 = vld [vmem:[%s186 + $0x27c0] sm:$0xff]
        %v1501 = vld [vmem:[%s186 + $0x27c8] sm:$0xff]
        %v1502 = vld [vmem:[%s186 + $0x27d0] sm:$0xff]
        %v1503 = vld [vmem:[%s186 + $0x27d8] sm:$0xff]
        %v1504 = vld [vmem:[%s186 + $0x27e0] sm:$0xff]
        %v1505 = vld [vmem:[%s186 + $0x27e8] sm:$0xff]
        %v1506 = vld [vmem:[%s186 + $0x27f0] sm:$0xff]
        %v1507 = vld [vmem:[%s186 + $0x27f8] sm:$0xff]
        %v1508 = vld [vmem:[%s186 + $0x2800] sm:$0xff]
        %v1509 = vld [vmem:[%s186 + $0x2808] sm:$0xff]
        %v1510 = vld [vmem:[%s186 + $0x2810] sm:$0xff]
        %v1511 = vld [vmem:[%s186 + $0x2818] sm:$0xff]
        %v1512 = vld [vmem:[%s186 + $0x2820] sm:$0xff]
        %v1513 = vld [vmem:[%s186 + $0x2828] sm:$0xff]
        %v1514 = vld [vmem:[%s186 + $0x2830] sm:$0xff]
        %v1515 = vld [vmem:[%s186 + $0x2838] sm:$0xff]
        %v1516 = vld [vmem:[%s186 + $0x2840] sm:$0xff]
        %v1517 = vld [vmem:[%s186 + $0x2848] sm:$0xff]
        %v1518 = vld [vmem:[%s186 + $0x2850] sm:$0xff]
        %v1519 = vld [vmem:[%s186 + $0x2858] sm:$0xff]
        %v1520 = vld [vmem:[%s186 + $0x2860] sm:$0xff]
        %v1521 = vld [vmem:[%s186 + $0x2868] sm:$0xff]
        %v1522 = vld [vmem:[%s186 + $0x2870] sm:$0xff]
        %v1523 = vld [vmem:[%s186 + $0x2878] sm:$0xff]
        %v1524 = vld [vmem:[%s186 + $0x2880] sm:$0xff]
        %v1525 = vld [vmem:[%s186 + $0x2888] sm:$0xff]
        %v1526 = vld [vmem:[%s186 + $0x2890] sm:$0xff]
        %v1527 = vld [vmem:[%s186 + $0x2898] sm:$0xff]
        %v1528 = vld [vmem:[%s186 + $0x28a0] sm:$0xff]
        %v1529 = vld [vmem:[%s186 + $0x28a8] sm:$0xff]
        %v1530 = vld [vmem:[%s186 + $0x28b0] sm:$0xff]
        %v1531 = vld [vmem:[%s186 + $0x28b8] sm:$0xff]
        %v1532 = vld [vmem:[%s186 + $0x28c0] sm:$0xff]
        %v1533 = vld [vmem:[%s186 + $0x28c8] sm:$0xff]
        %v1534 = vld [vmem:[%s186 + $0x28d0] sm:$0xff]
        %v1535 = vld [vmem:[%s186 + $0x28d8] sm:$0xff]
        %v1536 = vld [vmem:[%s186 + $0x28e0] sm:$0xff]
        %v1537 = vld [vmem:[%s186 + $0x28e8] sm:$0xff]
        %v1538 = vld [vmem:[%s186 + $0x28f0] sm:$0xff]
        %v1539 = vld [vmem:[%s186 + $0x28f8] sm:$0xff]
        %v1540 = vld [vmem:[%s186 + $0x2900] sm:$0xff]
        %v1541 = vld [vmem:[%s186 + $0x2908] sm:$0xff]
        %v1542 = vld [vmem:[%s186 + $0x2910] sm:$0xff]
        %v1543 = vld [vmem:[%s186 + $0x2918] sm:$0xff]
        %v1544 = vld [vmem:[%s186 + $0x2920] sm:$0xff]
        %v1545 = vld [vmem:[%s186 + $0x2928] sm:$0xff]
        %v1546 = vld [vmem:[%s186 + $0x2930] sm:$0xff]
        %v1547 = vld [vmem:[%s186 + $0x2938] sm:$0xff]
        %v1548 = vld [vmem:[%s186 + $0x2940] sm:$0xff]
        %v1549 = vld [vmem:[%s186 + $0x2948] sm:$0xff]
        %v1550 = vld [vmem:[%s186 + $0x2950] sm:$0xff]
        %v1551 = vld [vmem:[%s186 + $0x2958] sm:$0xff]
        %v1552 = vld [vmem:[%s186 + $0x2960] sm:$0xff]
        %v1553 = vld [vmem:[%s186 + $0x2968] sm:$0xff]
        %v1554 = vld [vmem:[%s186 + $0x2970] sm:$0xff]
        %v1555 = vld [vmem:[%s186 + $0x2978] sm:$0xff]
        %v1556 = vld [vmem:[%s186 + $0x2980] sm:$0xff]
        %v1557 = vld [vmem:[%s186 + $0x2988] sm:$0xff]
        %v1558 = vld [vmem:[%s186 + $0x2990] sm:$0xff]
        %v1559 = vld [vmem:[%s186 + $0x2998] sm:$0xff]
        %v1560 = vld [vmem:[%s186 + $0x29a0] sm:$0xff]
        %v1561 = vld [vmem:[%s186 + $0x29a8] sm:$0xff]
        %v1562 = vld [vmem:[%s186 + $0x29b0] sm:$0xff]
        %v1563 = vld [vmem:[%s186 + $0x29b8] sm:$0xff]
        %v1564 = vld [vmem:[%s186 + $0x29c0] sm:$0xff]
        %v1565 = vld [vmem:[%s186 + $0x29c8] sm:$0xff]
        %v1566 = vld [vmem:[%s186 + $0x29d0] sm:$0xff]
        %v1567 = vld [vmem:[%s186 + $0x29d8] sm:$0xff]
        %v1568 = vld [vmem:[%s186 + $0x29e0] sm:$0xff]
        %v1569 = vld [vmem:[%s186 + $0x29e8] sm:$0xff]
        %v1570 = vld [vmem:[%s186 + $0x29f0] sm:$0xff]
        %v1571 = vld [vmem:[%s186 + $0x29f8] sm:$0xff]
        %v1572 = vld [vmem:[%s186 + $0x2a00] sm:$0xff]
        %v1573 = vld [vmem:[%s186 + $0x2a08] sm:$0xff]
        %v1574 = vld [vmem:[%s186 + $0x2a10] sm:$0xff]
        %v1575 = vld [vmem:[%s186 + $0x2a18] sm:$0xff]
        %v1576 = vld [vmem:[%s186 + $0x2a20] sm:$0xff]
        %v1577 = vld [vmem:[%s186 + $0x2a28] sm:$0xff]
        %v1578 = vld [vmem:[%s186 + $0x2a30] sm:$0xff]
        %v1579 = vld [vmem:[%s186 + $0x2a38] sm:$0xff]
        %v1580 = vld [vmem:[%s186 + $0x2a40] sm:$0xff]
        %v1581 = vld [vmem:[%s186 + $0x2a48] sm:$0xff]
        %v1582 = vld [vmem:[%s186 + $0x2a50] sm:$0xff]
        %v1583 = vld [vmem:[%s186 + $0x2a58] sm:$0xff]
        %v1584 = vld [vmem:[%s186 + $0x2a60] sm:$0xff]
        %v1585 = vld [vmem:[%s186 + $0x2a68] sm:$0xff]
        %v1586 = vld [vmem:[%s186 + $0x2a70] sm:$0xff]
        %v1587 = vld [vmem:[%s186 + $0x2a78] sm:$0xff]
        %v1588 = vld [vmem:[%s186 + $0x2a80] sm:$0xff]
        %v1589 = vld [vmem:[%s186 + $0x2a88] sm:$0xff]
        %v1590 = vld [vmem:[%s186 + $0x2a90] sm:$0xff]
        %v1591 = vld [vmem:[%s186 + $0x2a98] sm:$0xff]
        %v1592 = vld [vmem:[%s186 + $0x2aa0] sm:$0xff]
        %v1593 = vld [vmem:[%s186 + $0x2aa8] sm:$0xff]
        %v1594 = vld [vmem:[%s186 + $0x2ab0] sm:$0xff]
        %v1595 = vld [vmem:[%s186 + $0x2ab8] sm:$0xff]
        %v1596 = vld [vmem:[%s186 + $0x2ac0] sm:$0xff]
        %v1597 = vld [vmem:[%s186 + $0x2ac8] sm:$0xff]
        %v1598 = vld [vmem:[%s186 + $0x2ad0] sm:$0xff]
        %v1599 = vld [vmem:[%s186 + $0x2ad8] sm:$0xff]
        %v1600 = vld [vmem:[%s186 + $0x2ae0] sm:$0xff]
        %v1601 = vld [vmem:[%s186 + $0x2ae8] sm:$0xff]
        %v1602 = vld [vmem:[%s186 + $0x2af0] sm:$0xff]
        %v1603 = vld [vmem:[%s186 + $0x2af8] sm:$0xff]
        %v1604 = vld [vmem:[%s186 + $0x2b00] sm:$0xff]
        %v1605 = vld [vmem:[%s186 + $0x2b08] sm:$0xff]
        %v1606 = vld [vmem:[%s186 + $0x2b10] sm:$0xff]
        %v1607 = vld [vmem:[%s186 + $0x2b18] sm:$0xff]
        %v1608 = vld [vmem:[%s186 + $0x2b20] sm:$0xff]
        %v1609 = vld [vmem:[%s186 + $0x2b28] sm:$0xff]
        %v1610 = vld [vmem:[%s186 + $0x2b30] sm:$0xff]
        %v1611 = vld [vmem:[%s186 + $0x2b38] sm:$0xff]
        %v1612 = vld [vmem:[%s186 + $0x2b40] sm:$0xff]
        %v1613 = vld [vmem:[%s186 + $0x2b48] sm:$0xff]
        %v1614 = vld [vmem:[%s186 + $0x2b50] sm:$0xff]
        %v1615 = vld [vmem:[%s186 + $0x2b58] sm:$0xff]
        %v1616 = vld [vmem:[%s186 + $0x2b60] sm:$0xff]
        %v1617 = vld [vmem:[%s186 + $0x2b68] sm:$0xff]
        %v1618 = vld [vmem:[%s186 + $0x2b70] sm:$0xff]
        %v1619 = vld [vmem:[%s186 + $0x2b78] sm:$0xff]
        %v1620 = vld [vmem:[%s186 + $0x2b80] sm:$0xff]
        %v1621 = vld [vmem:[%s186 + $0x2b88] sm:$0xff]
        %v1622 = vld [vmem:[%s186 + $0x2b90] sm:$0xff]
        %v1623 = vld [vmem:[%s186 + $0x2b98] sm:$0xff]
        %v1624 = vld [vmem:[%s186 + $0x2ba0] sm:$0xff]
        %v1625 = vld [vmem:[%s186 + $0x2ba8] sm:$0xff]
        %v1626 = vld [vmem:[%s186 + $0x2bb0] sm:$0xff]
        %v1627 = vld [vmem:[%s186 + $0x2bb8] sm:$0xff]
        %v1628 = vld [vmem:[%s186 + $0x2bc0] sm:$0xff]
        %v1629 = vld [vmem:[%s186 + $0x2bc8] sm:$0xff]
        %v1630 = vld [vmem:[%s186 + $0x2bd0] sm:$0xff]
        %v1631 = vld [vmem:[%s186 + $0x2bd8] sm:$0xff]
        %v1632 = vld [vmem:[%s186 + $0x2be0] sm:$0xff]
        %v1633 = vld [vmem:[%s186 + $0x2be8] sm:$0xff]
        %v1634 = vld [vmem:[%s186 + $0x2bf0] sm:$0xff]
        %v1635 = vld [vmem:[%s186 + $0x2bf8] sm:$0xff]
        %v1636 = vld [vmem:[%s186 + $0x2c00] sm:$0xff]
        %v1637 = vld [vmem:[%s186 + $0x2c08] sm:$0xff]
        %v1638 = vld [vmem:[%s186 + $0x2c10] sm:$0xff]
        %v1639 = vld [vmem:[%s186 + $0x2c18] sm:$0xff]
        %v1640 = vld [vmem:[%s186 + $0x2c20] sm:$0xff]
        %v1641 = vld [vmem:[%s186 + $0x2c28] sm:$0xff]
        %v1642 = vld [vmem:[%s186 + $0x2c30] sm:$0xff]
        %v1643 = vld [vmem:[%s186 + $0x2c38] sm:$0xff]
        %v1644 = vld [vmem:[%s186 + $0x2c40] sm:$0xff]
        %v1645 = vld [vmem:[%s186 + $0x2c48] sm:$0xff]
        %v1646 = vld [vmem:[%s186 + $0x2c50] sm:$0xff]
        %v1647 = vld [vmem:[%s186 + $0x2c58] sm:$0xff]
        %v1648 = vld [vmem:[%s186 + $0x2c60] sm:$0xff]
        %v1649 = vld [vmem:[%s186 + $0x2c68] sm:$0xff]
        %v1650 = vld [vmem:[%s186 + $0x2c70] sm:$0xff]
        %v1651 = vld [vmem:[%s186 + $0x2c78] sm:$0xff]
        %v1652 = vld [vmem:[%s186 + $0x2c80] sm:$0xff]
        %v1653 = vld [vmem:[%s186 + $0x2c88] sm:$0xff]
        %v1654 = vld [vmem:[%s186 + $0x2c90] sm:$0xff]
        %v1655 = vld [vmem:[%s186 + $0x2c98] sm:$0xff]
        %v1656 = vld [vmem:[%s186 + $0x2ca0] sm:$0xff]
        %v1657 = vld [vmem:[%s186 + $0x2ca8] sm:$0xff]
        %v1658 = vld [vmem:[%s186 + $0x2cb0] sm:$0xff]
        %v1659 = vld [vmem:[%s186 + $0x2cb8] sm:$0xff]
        %v1660 = vld [vmem:[%s186 + $0x2cc0] sm:$0xff]
        %v1661 = vld [vmem:[%s186 + $0x2cc8] sm:$0xff]
        %v1662 = vld [vmem:[%s186 + $0x2cd0] sm:$0xff]
        %v1663 = vld [vmem:[%s186 + $0x2cd8] sm:$0xff]
        %v1664 = vld [vmem:[%s186 + $0x2ce0] sm:$0xff]
        %v1665 = vld [vmem:[%s186 + $0x2ce8] sm:$0xff]
        %v1666 = vld [vmem:[%s186 + $0x2cf0] sm:$0xff]
        %v1667 = vld [vmem:[%s186 + $0x2cf8] sm:$0xff]
        %v1668 = vld [vmem:[%s186 + $0x2d00] sm:$0xff]
        %v1669 = vld [vmem:[%s186 + $0x2d08] sm:$0xff]
        %v1670 = vld [vmem:[%s186 + $0x2d10] sm:$0xff]
        %v1671 = vld [vmem:[%s186 + $0x2d18] sm:$0xff]
        %v1672 = vld [vmem:[%s186 + $0x2d20] sm:$0xff]
        %v1673 = vld [vmem:[%s186 + $0x2d28] sm:$0xff]
        %v1674 = vld [vmem:[%s186 + $0x2d30] sm:$0xff]
        %v1675 = vld [vmem:[%s186 + $0x2d38] sm:$0xff]
        %v1676 = vld [vmem:[%s186 + $0x2d40] sm:$0xff]
        %v1677 = vld [vmem:[%s186 + $0x2d48] sm:$0xff]
        %v1678 = vld [vmem:[%s186 + $0x2d50] sm:$0xff]
        %v1679 = vld [vmem:[%s186 + $0x2d58] sm:$0xff]
        %v1680 = vld [vmem:[%s186 + $0x2d60] sm:$0xff]
        %v1681 = vld [vmem:[%s186 + $0x2d68] sm:$0xff]
        %v1682 = vld [vmem:[%s186 + $0x2d70] sm:$0xff]
        %v1683 = vld [vmem:[%s186 + $0x2d78] sm:$0xff]
        %v1684 = vld [vmem:[%s186 + $0x2d80] sm:$0xff]
        %v1685 = vld [vmem:[%s186 + $0x2d88] sm:$0xff]
        %v1686 = vld [vmem:[%s186 + $0x2d90] sm:$0xff]
        %v1687 = vld [vmem:[%s186 + $0x2d98] sm:$0xff]
        %v1688 = vld [vmem:[%s186 + $0x2da0] sm:$0xff]
        %v1689 = vld [vmem:[%s186 + $0x2da8] sm:$0xff]
        %v1690 = vld [vmem:[%s186 + $0x2db0] sm:$0xff]
        %v1691 = vld [vmem:[%s186 + $0x2db8] sm:$0xff]
        %v1692 = vld [vmem:[%s186 + $0x2dc0] sm:$0xff]
        %v1693 = vld [vmem:[%s186 + $0x2dc8] sm:$0xff]
        %v1694 = vld [vmem:[%s186 + $0x2dd0] sm:$0xff]
        %v1695 = vld [vmem:[%s186 + $0x2dd8] sm:$0xff]
        %v1696 = vld [vmem:[%s186 + $0x2de0] sm:$0xff]
        %v1697 = vld [vmem:[%s186 + $0x2de8] sm:$0xff]
        %v1698 = vld [vmem:[%s186 + $0x2df0] sm:$0xff]
        %v1699 = vld [vmem:[%s186 + $0x2df8] sm:$0xff]
        %v1700 = vld [vmem:[%s186 + $0x2e00] sm:$0xff]
        %v1701 = vld [vmem:[%s186 + $0x2e08] sm:$0xff]
        %v1702 = vld [vmem:[%s186 + $0x2e10] sm:$0xff]
        %v1703 = vld [vmem:[%s186 + $0x2e18] sm:$0xff]
        %v1704 = vld [vmem:[%s186 + $0x2e20] sm:$0xff]
        %v1705 = vld [vmem:[%s186 + $0x2e28] sm:$0xff]
        %v1706 = vld [vmem:[%s186 + $0x2e30] sm:$0xff]
        %v1707 = vld [vmem:[%s186 + $0x2e38] sm:$0xff]
        %v1708 = vld [vmem:[%s186 + $0x2e40] sm:$0xff]
        %v1709 = vld [vmem:[%s186 + $0x2e48] sm:$0xff]
        %v1710 = vld [vmem:[%s186 + $0x2e50] sm:$0xff]
        %v1711 = vld [vmem:[%s186 + $0x2e58] sm:$0xff]
        %v1712 = vld [vmem:[%s186 + $0x2e60] sm:$0xff]
        %v1713 = vld [vmem:[%s186 + $0x2e68] sm:$0xff]
        %v1714 = vld [vmem:[%s186 + $0x2e70] sm:$0xff]
        %v1715 = vld [vmem:[%s186 + $0x2e78] sm:$0xff]
        %v1716 = vld [vmem:[%s186 + $0x2e80] sm:$0xff]
        %v1717 = vld [vmem:[%s186 + $0x2e88] sm:$0xff]
        %v1718 = vld [vmem:[%s186 + $0x2e90] sm:$0xff]
        %v1719 = vld [vmem:[%s186 + $0x2e98] sm:$0xff]
        %v1720 = vld [vmem:[%s186 + $0x2ea0] sm:$0xff]
        %v1721 = vld [vmem:[%s186 + $0x2ea8] sm:$0xff]
        %v1722 = vld [vmem:[%s186 + $0x2eb0] sm:$0xff]
        %v1723 = vld [vmem:[%s186 + $0x2eb8] sm:$0xff]
        %v1724 = vld [vmem:[%s186 + $0x2ec0] sm:$0xff]
        %v1725 = vld [vmem:[%s186 + $0x2ec8] sm:$0xff]
        %v1726 = vld [vmem:[%s186 + $0x2ed0] sm:$0xff]
        %v1727 = vld [vmem:[%s186 + $0x2ed8] sm:$0xff]
        %v1728 = vld [vmem:[%s186 + $0x2ee0] sm:$0xff]
        %v1729 = vld [vmem:[%s186 + $0x2ee8] sm:$0xff]
        %v1730 = vld [vmem:[%s186 + $0x2ef0] sm:$0xff]
        %v1731 = vld [vmem:[%s186 + $0x2ef8] sm:$0xff]
        %v1732 = vld [vmem:[%s186 + $0x2f00] sm:$0xff]
        %v1733 = vld [vmem:[%s186 + $0x2f08] sm:$0xff]
        %v1734 = vld [vmem:[%s186 + $0x2f10] sm:$0xff]
        %v1735 = vld [vmem:[%s186 + $0x2f18] sm:$0xff]
        %v1736 = vld [vmem:[%s186 + $0x2f20] sm:$0xff]
        %v1737 = vld [vmem:[%s186 + $0x2f28] sm:$0xff]
        %v1738 = vld [vmem:[%s186 + $0x2f30] sm:$0xff]
        %v1739 = vld [vmem:[%s186 + $0x2f38] sm:$0xff]
        %v1740 = vld [vmem:[%s186 + $0x2f40] sm:$0xff]
        %v1741 = vld [vmem:[%s186 + $0x2f48] sm:$0xff]
        %v1742 = vld [vmem:[%s186 + $0x2f50] sm:$0xff]
        %v1743 = vld [vmem:[%s186 + $0x2f58] sm:$0xff]
        %v1744 = vld [vmem:[%s186 + $0x2f60] sm:$0xff]
        %v1745 = vld [vmem:[%s186 + $0x2f68] sm:$0xff]
        %v1746 = vld [vmem:[%s186 + $0x2f70] sm:$0xff]
        %v1747 = vld [vmem:[%s186 + $0x2f78] sm:$0xff]
        %v1748 = vld [vmem:[%s186 + $0x2f80] sm:$0xff]
        %v1749 = vld [vmem:[%s186 + $0x2f88] sm:$0xff]
        %v1750 = vld [vmem:[%s186 + $0x2f90] sm:$0xff]
        %v1751 = vld [vmem:[%s186 + $0x2f98] sm:$0xff]
        %v1752 = vld [vmem:[%s186 + $0x2fa0] sm:$0xff]
        %v1753 = vld [vmem:[%s186 + $0x2fa8] sm:$0xff]
        %v1754 = vld [vmem:[%s186 + $0x2fb0] sm:$0xff]
        %v1755 = vld [vmem:[%s186 + $0x2fb8] sm:$0xff]
        %v1756 = vld [vmem:[%s186 + $0x2fc0] sm:$0xff]
        %v1757 = vld [vmem:[%s186 + $0x2fc8] sm:$0xff]
        %v1758 = vld [vmem:[%s186 + $0x2fd0] sm:$0xff]
        %v1759 = vld [vmem:[%s186 + $0x2fd8] sm:$0xff]
        %v1760 = vld [vmem:[%s186 + $0x2fe0] sm:$0xff]
        %v1761 = vld [vmem:[%s186 + $0x2fe8] sm:$0xff]
        %v1762 = vld [vmem:[%s186 + $0x2ff0] sm:$0xff]
        %v1763 = vld [vmem:[%s186 + $0x2ff8] sm:$0xff]
        %v1764 = vld [vmem:[#allocation5] sm:$0xf]
        %v1766 = vperm.slane %v1764, 0
        %v1767 = vperm.slane %v1764, 1
        %v1768 = vperm.slane %v1764, 2
        %v1769 = vperm.slane %v1764, 3
        %v1774 = vmul.f32 %v228, %v1766
        %v1775 = vmul.f32 %v229, %v1767
        %v1776 = vmul.f32 %v230, %v1768
        %v1777 = vmul.f32 %v231, %v1769
        %v1778 = vmul.f32 %v232, %v1766
        %v1779 = vmul.f32 %v233, %v1767
        %v1780 = vmul.f32 %v234, %v1768
        %v1781 = vmul.f32 %v235, %v1769
        %v1782 = vmul.f32 %v236, %v1766
        %v1783 = vmul.f32 %v237, %v1767
        %v1784 = vmul.f32 %v238, %v1768
        %v1785 = vmul.f32 %v239, %v1769
        %v1786 = vmul.f32 %v240, %v1766
        %v1787 = vmul.f32 %v241, %v1767
        %v1788 = vmul.f32 %v242, %v1768
        %v1789 = vmul.f32 %v243, %v1769
        %v1790 = vmul.f32 %v244, %v1766
        %v1791 = vmul.f32 %v245, %v1767
        %v1792 = vmul.f32 %v246, %v1768
        %v1793 = vmul.f32 %v247, %v1769
        %v1794 = vmul.f32 %v248, %v1766
        %v1795 = vmul.f32 %v249, %v1767
        %v1796 = vmul.f32 %v250, %v1768
        %v1797 = vmul.f32 %v251, %v1769
        %v1798 = vmul.f32 %v252, %v1766
        %v1799 = vmul.f32 %v253, %v1767
        %v1800 = vmul.f32 %v254, %v1768
        %v1801 = vmul.f32 %v255, %v1769
        %v1802 = vmul.f32 %v256, %v1766
        %v1803 = vmul.f32 %v257, %v1767
        %v1804 = vmul.f32 %v258, %v1768
        %v1805 = vmul.f32 %v259, %v1769
        %v1806 = vmul.f32 %v260, %v1766
        %v1807 = vmul.f32 %v261, %v1767
        %v1808 = vmul.f32 %v262, %v1768
        %v1809 = vmul.f32 %v263, %v1769
        %v1810 = vmul.f32 %v264, %v1766
        %v1811 = vmul.f32 %v265, %v1767
        %v1812 = vmul.f32 %v266, %v1768
        %v1813 = vmul.f32 %v267, %v1769
        %v1814 = vmul.f32 %v268, %v1766
        %v1815 = vmul.f32 %v269, %v1767
        %v1816 = vmul.f32 %v270, %v1768
        %v1817 = vmul.f32 %v271, %v1769
        %v1818 = vmul.f32 %v272, %v1766
        %v1819 = vmul.f32 %v273, %v1767
        %v1820 = vmul.f32 %v274, %v1768
        %v1821 = vmul.f32 %v275, %v1769
        %v1822 = vmul.f32 %v276, %v1766
        %v1823 = vmul.f32 %v277, %v1767
        %v1824 = vmul.f32 %v278, %v1768
        %v1825 = vmul.f32 %v279, %v1769
        %v1826 = vmul.f32 %v280, %v1766
        %v1827 = vmul.f32 %v281, %v1767
        %v1828 = vmul.f32 %v282, %v1768
        %v1829 = vmul.f32 %v283, %v1769
        %v1830 = vmul.f32 %v284, %v1766
        %v1831 = vmul.f32 %v285, %v1767
        %v1832 = vmul.f32 %v286, %v1768
        %v1833 = vmul.f32 %v287, %v1769
        %v1834 = vmul.f32 %v288, %v1766
        %v1835 = vmul.f32 %v289, %v1767
        %v1836 = vmul.f32 %v290, %v1768
        %v1837 = vmul.f32 %v291, %v1769
        %v1838 = vmul.f32 %v292, %v1766
        %v1839 = vmul.f32 %v293, %v1767
        %v1840 = vmul.f32 %v294, %v1768
        %v1841 = vmul.f32 %v295, %v1769
        %v1842 = vmul.f32 %v296, %v1766
        %v1843 = vmul.f32 %v297, %v1767
        %v1844 = vmul.f32 %v298, %v1768
        %v1845 = vmul.f32 %v299, %v1769
        %v1846 = vmul.f32 %v300, %v1766
        %v1847 = vmul.f32 %v301, %v1767
        %v1848 = vmul.f32 %v302, %v1768
        %v1849 = vmul.f32 %v303, %v1769
        %v1850 = vmul.f32 %v304, %v1766
        %v1851 = vmul.f32 %v305, %v1767
        %v1852 = vmul.f32 %v306, %v1768
        %v1853 = vmul.f32 %v307, %v1769
        %v1854 = vmul.f32 %v308, %v1766
        %v1855 = vmul.f32 %v309, %v1767
        %v1856 = vmul.f32 %v310, %v1768
        %v1857 = vmul.f32 %v311, %v1769
        %v1858 = vmul.f32 %v312, %v1766
        %v1859 = vmul.f32 %v313, %v1767
        %v1860 = vmul.f32 %v314, %v1768
        %v1861 = vmul.f32 %v315, %v1769
        %v1862 = vmul.f32 %v316, %v1766
        %v1863 = vmul.f32 %v317, %v1767
        %v1864 = vmul.f32 %v318, %v1768
        %v1865 = vmul.f32 %v319, %v1769
        %v1866 = vmul.f32 %v320, %v1766
        %v1867 = vmul.f32 %v321, %v1767
        %v1868 = vmul.f32 %v322, %v1768
        %v1869 = vmul.f32 %v323, %v1769
        %v1870 = vmul.f32 %v324, %v1766
        %v1871 = vmul.f32 %v325, %v1767
        %v1872 = vmul.f32 %v326, %v1768
        %v1873 = vmul.f32 %v327, %v1769
        %v1874 = vmul.f32 %v328, %v1766
        %v1875 = vmul.f32 %v329, %v1767
        %v1876 = vmul.f32 %v330, %v1768
        %v1877 = vmul.f32 %v331, %v1769
        %v1878 = vmul.f32 %v332, %v1766
        %v1879 = vmul.f32 %v333, %v1767
        %v1880 = vmul.f32 %v334, %v1768
        %v1881 = vmul.f32 %v335, %v1769
        %v1882 = vmul.f32 %v336, %v1766
        %v1883 = vmul.f32 %v337, %v1767
        %v1884 = vmul.f32 %v338, %v1768
        %v1885 = vmul.f32 %v339, %v1769
        %v1886 = vmul.f32 %v340, %v1766
        %v1887 = vmul.f32 %v341, %v1767
        %v1888 = vmul.f32 %v342, %v1768
        %v1889 = vmul.f32 %v343, %v1769
        %v1890 = vmul.f32 %v344, %v1766
        %v1891 = vmul.f32 %v345, %v1767
        %v1892 = vmul.f32 %v346, %v1768
        %v1893 = vmul.f32 %v347, %v1769
        %v1894 = vmul.f32 %v348, %v1766
        %v1895 = vmul.f32 %v349, %v1767
        %v1896 = vmul.f32 %v350, %v1768
        %v1897 = vmul.f32 %v351, %v1769
        %v1898 = vmul.f32 %v352, %v1766
        %v1899 = vmul.f32 %v353, %v1767
        %v1900 = vmul.f32 %v354, %v1768
        %v1901 = vmul.f32 %v355, %v1769
        %v1902 = vmul.f32 %v356, %v1766
        %v1903 = vmul.f32 %v357, %v1767
        %v1904 = vmul.f32 %v358, %v1768
        %v1905 = vmul.f32 %v359, %v1769
        %v1906 = vmul.f32 %v360, %v1766
        %v1907 = vmul.f32 %v361, %v1767
        %v1908 = vmul.f32 %v362, %v1768
        %v1909 = vmul.f32 %v363, %v1769
        %v1910 = vmul.f32 %v364, %v1766
        %v1911 = vmul.f32 %v365, %v1767
        %v1912 = vmul.f32 %v366, %v1768
        %v1913 = vmul.f32 %v367, %v1769
        %v1914 = vmul.f32 %v368, %v1766
        %v1915 = vmul.f32 %v369, %v1767
        %v1916 = vmul.f32 %v370, %v1768
        %v1917 = vmul.f32 %v371, %v1769
        %v1918 = vmul.f32 %v372, %v1766
        %v1919 = vmul.f32 %v373, %v1767
        %v1920 = vmul.f32 %v374, %v1768
        %v1921 = vmul.f32 %v375, %v1769
        %v1922 = vmul.f32 %v376, %v1766
        %v1923 = vmul.f32 %v377, %v1767
        %v1924 = vmul.f32 %v378, %v1768
        %v1925 = vmul.f32 %v379, %v1769
        %v1926 = vmul.f32 %v380, %v1766
        %v1927 = vmul.f32 %v381, %v1767
        %v1928 = vmul.f32 %v382, %v1768
        %v1929 = vmul.f32 %v383, %v1769
        %v1930 = vmul.f32 %v384, %v1766
        %v1931 = vmul.f32 %v385, %v1767
        %v1932 = vmul.f32 %v386, %v1768
        %v1933 = vmul.f32 %v387, %v1769
        %v1934 = vmul.f32 %v388, %v1766
        %v1935 = vmul.f32 %v389, %v1767
        %v1936 = vmul.f32 %v390, %v1768
        %v1937 = vmul.f32 %v391, %v1769
        %v1938 = vmul.f32 %v392, %v1766
        %v1939 = vmul.f32 %v393, %v1767
        %v1940 = vmul.f32 %v394, %v1768
        %v1941 = vmul.f32 %v395, %v1769
        %v1942 = vmul.f32 %v396, %v1766
        %v1943 = vmul.f32 %v397, %v1767
        %v1944 = vmul.f32 %v398, %v1768
        %v1945 = vmul.f32 %v399, %v1769
        %v1946 = vmul.f32 %v400, %v1766
        %v1947 = vmul.f32 %v401, %v1767
        %v1948 = vmul.f32 %v402, %v1768
        %v1949 = vmul.f32 %v403, %v1769
        %v1950 = vmul.f32 %v404, %v1766
        %v1951 = vmul.f32 %v405, %v1767
        %v1952 = vmul.f32 %v406, %v1768
        %v1953 = vmul.f32 %v407, %v1769
        %v1954 = vmul.f32 %v408, %v1766
        %v1955 = vmul.f32 %v409, %v1767
        %v1956 = vmul.f32 %v410, %v1768
        %v1957 = vmul.f32 %v411, %v1769
        %v1958 = vmul.f32 %v412, %v1766
        %v1959 = vmul.f32 %v413, %v1767
        %v1960 = vmul.f32 %v414, %v1768
        %v1961 = vmul.f32 %v415, %v1769
        %v1962 = vmul.f32 %v416, %v1766
        %v1963 = vmul.f32 %v417, %v1767
        %v1964 = vmul.f32 %v418, %v1768
        %v1965 = vmul.f32 %v419, %v1769
        %v1966 = vmul.f32 %v420, %v1766
        %v1967 = vmul.f32 %v421, %v1767
        %v1968 = vmul.f32 %v422, %v1768
        %v1969 = vmul.f32 %v423, %v1769
        %v1970 = vmul.f32 %v424, %v1766
        %v1971 = vmul.f32 %v425, %v1767
        %v1972 = vmul.f32 %v426, %v1768
        %v1973 = vmul.f32 %v427, %v1769
        %v1974 = vmul.f32 %v428, %v1766
        %v1975 = vmul.f32 %v429, %v1767
        %v1976 = vmul.f32 %v430, %v1768
        %v1977 = vmul.f32 %v431, %v1769
        %v1978 = vmul.f32 %v432, %v1766
        %v1979 = vmul.f32 %v433, %v1767
        %v1980 = vmul.f32 %v434, %v1768
        %v1981 = vmul.f32 %v435, %v1769
        %v1982 = vmul.f32 %v436, %v1766
        %v1983 = vmul.f32 %v437, %v1767
        %v1984 = vmul.f32 %v438, %v1768
        %v1985 = vmul.f32 %v439, %v1769
        %v1986 = vmul.f32 %v440, %v1766
        %v1987 = vmul.f32 %v441, %v1767
        %v1988 = vmul.f32 %v442, %v1768
        %v1989 = vmul.f32 %v443, %v1769
        %v1990 = vmul.f32 %v444, %v1766
        %v1991 = vmul.f32 %v445, %v1767
        %v1992 = vmul.f32 %v446, %v1768
        %v1993 = vmul.f32 %v447, %v1769
        %v1994 = vmul.f32 %v448, %v1766
        %v1995 = vmul.f32 %v449, %v1767
        %v1996 = vmul.f32 %v450, %v1768
        %v1997 = vmul.f32 %v451, %v1769
        %v1998 = vmul.f32 %v452, %v1766
        %v1999 = vmul.f32 %v453, %v1767
        %v2000 = vmul.f32 %v454, %v1768
        %v2001 = vmul.f32 %v455, %v1769
        %v2002 = vmul.f32 %v456, %v1766
        %v2003 = vmul.f32 %v457, %v1767
        %v2004 = vmul.f32 %v458, %v1768
        %v2005 = vmul.f32 %v459, %v1769
        %v2006 = vmul.f32 %v460, %v1766
        %v2007 = vmul.f32 %v461, %v1767
        %v2008 = vmul.f32 %v462, %v1768
        %v2009 = vmul.f32 %v463, %v1769
        %v2010 = vmul.f32 %v464, %v1766
        %v2011 = vmul.f32 %v465, %v1767
        %v2012 = vmul.f32 %v466, %v1768
        %v2013 = vmul.f32 %v467, %v1769
        %v2014 = vmul.f32 %v468, %v1766
        %v2015 = vmul.f32 %v469, %v1767
        %v2016 = vmul.f32 %v470, %v1768
        %v2017 = vmul.f32 %v471, %v1769
        %v2018 = vmul.f32 %v472, %v1766
        %v2019 = vmul.f32 %v473, %v1767
        %v2020 = vmul.f32 %v474, %v1768
        %v2021 = vmul.f32 %v475, %v1769
        %v2022 = vmul.f32 %v476, %v1766
        %v2023 = vmul.f32 %v477, %v1767
        %v2024 = vmul.f32 %v478, %v1768
        %v2025 = vmul.f32 %v479, %v1769
        %v2026 = vmul.f32 %v480, %v1766
        %v2027 = vmul.f32 %v481, %v1767
        %v2028 = vmul.f32 %v482, %v1768
        %v2029 = vmul.f32 %v483, %v1769
        %v2030 = vmul.f32 %v484, %v1766
        %v2031 = vmul.f32 %v485, %v1767
        %v2032 = vmul.f32 %v486, %v1768
        %v2033 = vmul.f32 %v487, %v1769
        %v2034 = vmul.f32 %v488, %v1766
        %v2035 = vmul.f32 %v489, %v1767
        %v2036 = vmul.f32 %v490, %v1768
        %v2037 = vmul.f32 %v491, %v1769
        %v2038 = vmul.f32 %v492, %v1766
        %v2039 = vmul.f32 %v493, %v1767
        %v2040 = vmul.f32 %v494, %v1768
        %v2041 = vmul.f32 %v495, %v1769
        %v2042 = vmul.f32 %v496, %v1766
        %v2043 = vmul.f32 %v497, %v1767
        %v2044 = vmul.f32 %v498, %v1768
        %v2045 = vmul.f32 %v499, %v1769
        %v2046 = vmul.f32 %v500, %v1766
        %v2047 = vmul.f32 %v501, %v1767
        %v2048 = vmul.f32 %v502, %v1768
        %v2049 = vmul.f32 %v503, %v1769
        %v2050 = vmul.f32 %v504, %v1766
        %v2051 = vmul.f32 %v505, %v1767
        %v2052 = vmul.f32 %v506, %v1768
        %v2053 = vmul.f32 %v507, %v1769
        %v2054 = vmul.f32 %v508, %v1766
        %v2055 = vmul.f32 %v509, %v1767
        %v2056 = vmul.f32 %v510, %v1768
        %v2057 = vmul.f32 %v511, %v1769
        %v2058 = vmul.f32 %v512, %v1766
        %v2059 = vmul.f32 %v513, %v1767
        %v2060 = vmul.f32 %v514, %v1768
        %v2061 = vmul.f32 %v515, %v1769
        %v2062 = vmul.f32 %v516, %v1766
        %v2063 = vmul.f32 %v517, %v1767
        %v2064 = vmul.f32 %v518, %v1768
        %v2065 = vmul.f32 %v519, %v1769
        %v2066 = vmul.f32 %v520, %v1766
        %v2067 = vmul.f32 %v521, %v1767
        %v2068 = vmul.f32 %v522, %v1768
        %v2069 = vmul.f32 %v523, %v1769
        %v2070 = vmul.f32 %v524, %v1766
        %v2071 = vmul.f32 %v525, %v1767
        %v2072 = vmul.f32 %v526, %v1768
        %v2073 = vmul.f32 %v527, %v1769
        %v2074 = vmul.f32 %v528, %v1766
        %v2075 = vmul.f32 %v529, %v1767
        %v2076 = vmul.f32 %v530, %v1768
        %v2077 = vmul.f32 %v531, %v1769
        %v2078 = vmul.f32 %v532, %v1766
        %v2079 = vmul.f32 %v533, %v1767
        %v2080 = vmul.f32 %v534, %v1768
        %v2081 = vmul.f32 %v535, %v1769
        %v2082 = vmul.f32 %v536, %v1766
        %v2083 = vmul.f32 %v537, %v1767
        %v2084 = vmul.f32 %v538, %v1768
        %v2085 = vmul.f32 %v539, %v1769
        %v2086 = vmul.f32 %v540, %v1766
        %v2087 = vmul.f32 %v541, %v1767
        %v2088 = vmul.f32 %v542, %v1768
        %v2089 = vmul.f32 %v543, %v1769
        %v2090 = vmul.f32 %v544, %v1766
        %v2091 = vmul.f32 %v545, %v1767
        %v2092 = vmul.f32 %v546, %v1768
        %v2093 = vmul.f32 %v547, %v1769
        %v2094 = vmul.f32 %v548, %v1766
        %v2095 = vmul.f32 %v549, %v1767
        %v2096 = vmul.f32 %v550, %v1768
        %v2097 = vmul.f32 %v551, %v1769
        %v2098 = vmul.f32 %v552, %v1766
        %v2099 = vmul.f32 %v553, %v1767
        %v2100 = vmul.f32 %v554, %v1768
        %v2101 = vmul.f32 %v555, %v1769
        %v2102 = vmul.f32 %v556, %v1766
        %v2103 = vmul.f32 %v557, %v1767
        %v2104 = vmul.f32 %v558, %v1768
        %v2105 = vmul.f32 %v559, %v1769
        %v2106 = vmul.f32 %v560, %v1766
        %v2107 = vmul.f32 %v561, %v1767
        %v2108 = vmul.f32 %v562, %v1768
        %v2109 = vmul.f32 %v563, %v1769
        %v2110 = vmul.f32 %v564, %v1766
        %v2111 = vmul.f32 %v565, %v1767
        %v2112 = vmul.f32 %v566, %v1768
        %v2113 = vmul.f32 %v567, %v1769
        %v2114 = vmul.f32 %v568, %v1766
        %v2115 = vmul.f32 %v569, %v1767
        %v2116 = vmul.f32 %v570, %v1768
        %v2117 = vmul.f32 %v571, %v1769
        %v2118 = vmul.f32 %v572, %v1766
        %v2119 = vmul.f32 %v573, %v1767
        %v2120 = vmul.f32 %v574, %v1768
        %v2121 = vmul.f32 %v575, %v1769
        %v2122 = vmul.f32 %v576, %v1766
        %v2123 = vmul.f32 %v577, %v1767
        %v2124 = vmul.f32 %v578, %v1768
        %v2125 = vmul.f32 %v579, %v1769
        %v2126 = vmul.f32 %v580, %v1766
        %v2127 = vmul.f32 %v581, %v1767
        %v2128 = vmul.f32 %v582, %v1768
        %v2129 = vmul.f32 %v583, %v1769
        %v2130 = vmul.f32 %v584, %v1766
        %v2131 = vmul.f32 %v585, %v1767
        %v2132 = vmul.f32 %v586, %v1768
        %v2133 = vmul.f32 %v587, %v1769
        %v2134 = vmul.f32 %v588, %v1766
        %v2135 = vmul.f32 %v589, %v1767
        %v2136 = vmul.f32 %v590, %v1768
        %v2137 = vmul.f32 %v591, %v1769
        %v2138 = vmul.f32 %v592, %v1766
        %v2139 = vmul.f32 %v593, %v1767
        %v2140 = vmul.f32 %v594, %v1768
        %v2141 = vmul.f32 %v595, %v1769
        %v2142 = vmul.f32 %v596, %v1766
        %v2143 = vmul.f32 %v597, %v1767
        %v2144 = vmul.f32 %v598, %v1768
        %v2145 = vmul.f32 %v599, %v1769
        %v2146 = vmul.f32 %v600, %v1766
        %v2147 = vmul.f32 %v601, %v1767
        %v2148 = vmul.f32 %v602, %v1768
        %v2149 = vmul.f32 %v603, %v1769
        %v2150 = vmul.f32 %v604, %v1766
        %v2151 = vmul.f32 %v605, %v1767
        %v2152 = vmul.f32 %v606, %v1768
        %v2153 = vmul.f32 %v607, %v1769
        %v2154 = vmul.f32 %v608, %v1766
        %v2155 = vmul.f32 %v609, %v1767
        %v2156 = vmul.f32 %v610, %v1768
        %v2157 = vmul.f32 %v611, %v1769
        %v2158 = vmul.f32 %v612, %v1766
        %v2159 = vmul.f32 %v613, %v1767
        %v2160 = vmul.f32 %v614, %v1768
        %v2161 = vmul.f32 %v615, %v1769
        %v2162 = vmul.f32 %v616, %v1766
        %v2163 = vmul.f32 %v617, %v1767
        %v2164 = vmul.f32 %v618, %v1768
        %v2165 = vmul.f32 %v619, %v1769
        %v2166 = vmul.f32 %v620, %v1766
        %v2167 = vmul.f32 %v621, %v1767
        %v2168 = vmul.f32 %v622, %v1768
        %v2169 = vmul.f32 %v623, %v1769
        %v2170 = vmul.f32 %v624, %v1766
        %v2171 = vmul.f32 %v625, %v1767
        %v2172 = vmul.f32 %v626, %v1768
        %v2173 = vmul.f32 %v627, %v1769
        %v2174 = vmul.f32 %v628, %v1766
        %v2175 = vmul.f32 %v629, %v1767
        %v2176 = vmul.f32 %v630, %v1768
        %v2177 = vmul.f32 %v631, %v1769
        %v2178 = vmul.f32 %v632, %v1766
        %v2179 = vmul.f32 %v633, %v1767
        %v2180 = vmul.f32 %v634, %v1768
        %v2181 = vmul.f32 %v635, %v1769
        %v2182 = vmul.f32 %v636, %v1766
        %v2183 = vmul.f32 %v637, %v1767
        %v2184 = vmul.f32 %v638, %v1768
        %v2185 = vmul.f32 %v639, %v1769
        %v2186 = vmul.f32 %v640, %v1766
        %v2187 = vmul.f32 %v641, %v1767
        %v2188 = vmul.f32 %v642, %v1768
        %v2189 = vmul.f32 %v643, %v1769
        %v2190 = vmul.f32 %v644, %v1766
        %v2191 = vmul.f32 %v645, %v1767
        %v2192 = vmul.f32 %v646, %v1768
        %v2193 = vmul.f32 %v647, %v1769
        %v2194 = vmul.f32 %v648, %v1766
        %v2195 = vmul.f32 %v649, %v1767
        %v2196 = vmul.f32 %v650, %v1768
        %v2197 = vmul.f32 %v651, %v1769
        %v2198 = vmul.f32 %v652, %v1766
        %v2199 = vmul.f32 %v653, %v1767
        %v2200 = vmul.f32 %v654, %v1768
        %v2201 = vmul.f32 %v655, %v1769
        %v2202 = vmul.f32 %v656, %v1766
        %v2203 = vmul.f32 %v657, %v1767
        %v2204 = vmul.f32 %v658, %v1768
        %v2205 = vmul.f32 %v659, %v1769
        %v2206 = vmul.f32 %v660, %v1766
        %v2207 = vmul.f32 %v661, %v1767
        %v2208 = vmul.f32 %v662, %v1768
        %v2209 = vmul.f32 %v663, %v1769
        %v2210 = vmul.f32 %v664, %v1766
        %v2211 = vmul.f32 %v665, %v1767
        %v2212 = vmul.f32 %v666, %v1768
        %v2213 = vmul.f32 %v667, %v1769
        %v2214 = vmul.f32 %v668, %v1766
        %v2215 = vmul.f32 %v669, %v1767
        %v2216 = vmul.f32 %v670, %v1768
        %v2217 = vmul.f32 %v671, %v1769
        %v2218 = vmul.f32 %v672, %v1766
        %v2219 = vmul.f32 %v673, %v1767
        %v2220 = vmul.f32 %v674, %v1768
        %v2221 = vmul.f32 %v675, %v1769
        %v2222 = vmul.f32 %v676, %v1766
        %v2223 = vmul.f32 %v677, %v1767
        %v2224 = vmul.f32 %v678, %v1768
        %v2225 = vmul.f32 %v679, %v1769
        %v2226 = vmul.f32 %v680, %v1766
        %v2227 = vmul.f32 %v681, %v1767
        %v2228 = vmul.f32 %v682, %v1768
        %v2229 = vmul.f32 %v683, %v1769
        %v2230 = vmul.f32 %v684, %v1766
        %v2231 = vmul.f32 %v685, %v1767
        %v2232 = vmul.f32 %v686, %v1768
        %v2233 = vmul.f32 %v687, %v1769
        %v2234 = vmul.f32 %v688, %v1766
        %v2235 = vmul.f32 %v689, %v1767
        %v2236 = vmul.f32 %v690, %v1768
        %v2237 = vmul.f32 %v691, %v1769
        %v2238 = vmul.f32 %v692, %v1766
        %v2239 = vmul.f32 %v693, %v1767
        %v2240 = vmul.f32 %v694, %v1768
        %v2241 = vmul.f32 %v695, %v1769
        %v2242 = vmul.f32 %v696, %v1766
        %v2243 = vmul.f32 %v697, %v1767
        %v2244 = vmul.f32 %v698, %v1768
        %v2245 = vmul.f32 %v699, %v1769
        %v2246 = vmul.f32 %v700, %v1766
        %v2247 = vmul.f32 %v701, %v1767
        %v2248 = vmul.f32 %v702, %v1768
        %v2249 = vmul.f32 %v703, %v1769
        %v2250 = vmul.f32 %v704, %v1766
        %v2251 = vmul.f32 %v705, %v1767
        %v2252 = vmul.f32 %v706, %v1768
        %v2253 = vmul.f32 %v707, %v1769
        %v2254 = vmul.f32 %v708, %v1766
        %v2255 = vmul.f32 %v709, %v1767
        %v2256 = vmul.f32 %v710, %v1768
        %v2257 = vmul.f32 %v711, %v1769
        %v2258 = vmul.f32 %v712, %v1766
        %v2259 = vmul.f32 %v713, %v1767
        %v2260 = vmul.f32 %v714, %v1768
        %v2261 = vmul.f32 %v715, %v1769
        %v2262 = vmul.f32 %v716, %v1766
        %v2263 = vmul.f32 %v717, %v1767
        %v2264 = vmul.f32 %v718, %v1768
        %v2265 = vmul.f32 %v719, %v1769
        %v2266 = vmul.f32 %v720, %v1766
        %v2267 = vmul.f32 %v721, %v1767
        %v2268 = vmul.f32 %v722, %v1768
        %v2269 = vmul.f32 %v723, %v1769
        %v2270 = vmul.f32 %v724, %v1766
        %v2271 = vmul.f32 %v725, %v1767
        %v2272 = vmul.f32 %v726, %v1768
        %v2273 = vmul.f32 %v727, %v1769
        %v2274 = vmul.f32 %v728, %v1766
        %v2275 = vmul.f32 %v729, %v1767
        %v2276 = vmul.f32 %v730, %v1768
        %v2277 = vmul.f32 %v731, %v1769
        %v2278 = vmul.f32 %v732, %v1766
        %v2279 = vmul.f32 %v733, %v1767
        %v2280 = vmul.f32 %v734, %v1768
        %v2281 = vmul.f32 %v735, %v1769
        %v2282 = vmul.f32 %v736, %v1766
        %v2283 = vmul.f32 %v737, %v1767
        %v2284 = vmul.f32 %v738, %v1768
        %v2285 = vmul.f32 %v739, %v1769
        %v2286 = vmul.f32 %v740, %v1766
        %v2287 = vmul.f32 %v741, %v1767
        %v2288 = vmul.f32 %v742, %v1768
        %v2289 = vmul.f32 %v743, %v1769
        %v2290 = vmul.f32 %v744, %v1766
        %v2291 = vmul.f32 %v745, %v1767
        %v2292 = vmul.f32 %v746, %v1768
        %v2293 = vmul.f32 %v747, %v1769
        %v2294 = vmul.f32 %v748, %v1766
        %v2295 = vmul.f32 %v749, %v1767
        %v2296 = vmul.f32 %v750, %v1768
        %v2297 = vmul.f32 %v751, %v1769
        %v2298 = vmul.f32 %v752, %v1766
        %v2299 = vmul.f32 %v753, %v1767
        %v2300 = vmul.f32 %v754, %v1768
        %v2301 = vmul.f32 %v755, %v1769
        %v2302 = vmul.f32 %v756, %v1766
        %v2303 = vmul.f32 %v757, %v1767
        %v2304 = vmul.f32 %v758, %v1768
        %v2305 = vmul.f32 %v759, %v1769
        %v2306 = vmul.f32 %v760, %v1766
        %v2307 = vmul.f32 %v761, %v1767
        %v2308 = vmul.f32 %v762, %v1768
        %v2309 = vmul.f32 %v763, %v1769
        %v2310 = vmul.f32 %v764, %v1766
        %v2311 = vmul.f32 %v765, %v1767
        %v2312 = vmul.f32 %v766, %v1768
        %v2313 = vmul.f32 %v767, %v1769
        %v2314 = vmul.f32 %v768, %v1766
        %v2315 = vmul.f32 %v769, %v1767
        %v2316 = vmul.f32 %v770, %v1768
        %v2317 = vmul.f32 %v771, %v1769
        %v2318 = vmul.f32 %v772, %v1766
        %v2319 = vmul.f32 %v773, %v1767
        %v2320 = vmul.f32 %v774, %v1768
        %v2321 = vmul.f32 %v775, %v1769
        %v2322 = vmul.f32 %v776, %v1766
        %v2323 = vmul.f32 %v777, %v1767
        %v2324 = vmul.f32 %v778, %v1768
        %v2325 = vmul.f32 %v779, %v1769
        %v2326 = vmul.f32 %v780, %v1766
        %v2327 = vmul.f32 %v781, %v1767
        %v2328 = vmul.f32 %v782, %v1768
        %v2329 = vmul.f32 %v783, %v1769
        %v2330 = vmul.f32 %v784, %v1766
        %v2331 = vmul.f32 %v785, %v1767
        %v2332 = vmul.f32 %v786, %v1768
        %v2333 = vmul.f32 %v787, %v1769
        %v2334 = vmul.f32 %v788, %v1766
        %v2335 = vmul.f32 %v789, %v1767
        %v2336 = vmul.f32 %v790, %v1768
        %v2337 = vmul.f32 %v791, %v1769
        %v2338 = vmul.f32 %v792, %v1766
        %v2339 = vmul.f32 %v793, %v1767
        %v2340 = vmul.f32 %v794, %v1768
        %v2341 = vmul.f32 %v795, %v1769
        %v2342 = vmul.f32 %v796, %v1766
        %v2343 = vmul.f32 %v797, %v1767
        %v2344 = vmul.f32 %v798, %v1768
        %v2345 = vmul.f32 %v799, %v1769
        %v2346 = vmul.f32 %v800, %v1766
        %v2347 = vmul.f32 %v801, %v1767
        %v2348 = vmul.f32 %v802, %v1768
        %v2349 = vmul.f32 %v803, %v1769
        %v2350 = vmul.f32 %v804, %v1766
        %v2351 = vmul.f32 %v805, %v1767
        %v2352 = vmul.f32 %v806, %v1768
        %v2353 = vmul.f32 %v807, %v1769
        %v2354 = vmul.f32 %v808, %v1766
        %v2355 = vmul.f32 %v809, %v1767
        %v2356 = vmul.f32 %v810, %v1768
        %v2357 = vmul.f32 %v811, %v1769
        %v2358 = vmul.f32 %v812, %v1766
        %v2359 = vmul.f32 %v813, %v1767
        %v2360 = vmul.f32 %v814, %v1768
        %v2361 = vmul.f32 %v815, %v1769
        %v2362 = vmul.f32 %v816, %v1766
        %v2363 = vmul.f32 %v817, %v1767
        %v2364 = vmul.f32 %v818, %v1768
        %v2365 = vmul.f32 %v819, %v1769
        %v2366 = vmul.f32 %v820, %v1766
        %v2367 = vmul.f32 %v821, %v1767
        %v2368 = vmul.f32 %v822, %v1768
        %v2369 = vmul.f32 %v823, %v1769
        %v2370 = vmul.f32 %v824, %v1766
        %v2371 = vmul.f32 %v825, %v1767
        %v2372 = vmul.f32 %v826, %v1768
        %v2373 = vmul.f32 %v827, %v1769
        %v2374 = vmul.f32 %v828, %v1766
        %v2375 = vmul.f32 %v829, %v1767
        %v2376 = vmul.f32 %v830, %v1768
        %v2377 = vmul.f32 %v831, %v1769
        %v2378 = vmul.f32 %v832, %v1766
        %v2379 = vmul.f32 %v833, %v1767
        %v2380 = vmul.f32 %v834, %v1768
        %v2381 = vmul.f32 %v835, %v1769
        %v2382 = vmul.f32 %v836, %v1766
        %v2383 = vmul.f32 %v837, %v1767
        %v2384 = vmul.f32 %v838, %v1768
        %v2385 = vmul.f32 %v839, %v1769
        %v2386 = vmul.f32 %v840, %v1766
        %v2387 = vmul.f32 %v841, %v1767
        %v2388 = vmul.f32 %v842, %v1768
        %v2389 = vmul.f32 %v843, %v1769
        %v2390 = vmul.f32 %v844, %v1766
        %v2391 = vmul.f32 %v845, %v1767
        %v2392 = vmul.f32 %v846, %v1768
        %v2393 = vmul.f32 %v847, %v1769
        %v2394 = vmul.f32 %v848, %v1766
        %v2395 = vmul.f32 %v849, %v1767
        %v2396 = vmul.f32 %v850, %v1768
        %v2397 = vmul.f32 %v851, %v1769
        %v2398 = vmul.f32 %v852, %v1766
        %v2399 = vmul.f32 %v853, %v1767
        %v2400 = vmul.f32 %v854, %v1768
        %v2401 = vmul.f32 %v855, %v1769
        %v2402 = vmul.f32 %v856, %v1766
        %v2403 = vmul.f32 %v857, %v1767
        %v2404 = vmul.f32 %v858, %v1768
        %v2405 = vmul.f32 %v859, %v1769
        %v2406 = vmul.f32 %v860, %v1766
        %v2407 = vmul.f32 %v861, %v1767
        %v2408 = vmul.f32 %v862, %v1768
        %v2409 = vmul.f32 %v863, %v1769
        %v2410 = vmul.f32 %v864, %v1766
        %v2411 = vmul.f32 %v865, %v1767
        %v2412 = vmul.f32 %v866, %v1768
        %v2413 = vmul.f32 %v867, %v1769
        %v2414 = vmul.f32 %v868, %v1766
        %v2415 = vmul.f32 %v869, %v1767
        %v2416 = vmul.f32 %v870, %v1768
        %v2417 = vmul.f32 %v871, %v1769
        %v2418 = vmul.f32 %v872, %v1766
        %v2419 = vmul.f32 %v873, %v1767
        %v2420 = vmul.f32 %v874, %v1768
        %v2421 = vmul.f32 %v875, %v1769
        %v2422 = vmul.f32 %v876, %v1766
        %v2423 = vmul.f32 %v877, %v1767
        %v2424 = vmul.f32 %v878, %v1768
        %v2425 = vmul.f32 %v879, %v1769
        %v2426 = vmul.f32 %v880, %v1766
        %v2427 = vmul.f32 %v881, %v1767
        %v2428 = vmul.f32 %v882, %v1768
        %v2429 = vmul.f32 %v883, %v1769
        %v2430 = vmul.f32 %v884, %v1766
        %v2431 = vmul.f32 %v885, %v1767
        %v2432 = vmul.f32 %v886, %v1768
        %v2433 = vmul.f32 %v887, %v1769
        %v2434 = vmul.f32 %v888, %v1766
        %v2435 = vmul.f32 %v889, %v1767
        %v2436 = vmul.f32 %v890, %v1768
        %v2437 = vmul.f32 %v891, %v1769
        %v2438 = vmul.f32 %v892, %v1766
        %v2439 = vmul.f32 %v893, %v1767
        %v2440 = vmul.f32 %v894, %v1768
        %v2441 = vmul.f32 %v895, %v1769
        %v2442 = vmul.f32 %v896, %v1766
        %v2443 = vmul.f32 %v897, %v1767
        %v2444 = vmul.f32 %v898, %v1768
        %v2445 = vmul.f32 %v899, %v1769
        %v2446 = vmul.f32 %v900, %v1766
        %v2447 = vmul.f32 %v901, %v1767
        %v2448 = vmul.f32 %v902, %v1768
        %v2449 = vmul.f32 %v903, %v1769
        %v2450 = vmul.f32 %v904, %v1766
        %v2451 = vmul.f32 %v905, %v1767
        %v2452 = vmul.f32 %v906, %v1768
        %v2453 = vmul.f32 %v907, %v1769
        %v2454 = vmul.f32 %v908, %v1766
        %v2455 = vmul.f32 %v909, %v1767
        %v2456 = vmul.f32 %v910, %v1768
        %v2457 = vmul.f32 %v911, %v1769
        %v2458 = vmul.f32 %v912, %v1766
        %v2459 = vmul.f32 %v913, %v1767
        %v2460 = vmul.f32 %v914, %v1768
        %v2461 = vmul.f32 %v915, %v1769
        %v2462 = vmul.f32 %v916, %v1766
        %v2463 = vmul.f32 %v917, %v1767
        %v2464 = vmul.f32 %v918, %v1768
        %v2465 = vmul.f32 %v919, %v1769
        %v2466 = vmul.f32 %v920, %v1766
        %v2467 = vmul.f32 %v921, %v1767
        %v2468 = vmul.f32 %v922, %v1768
        %v2469 = vmul.f32 %v923, %v1769
        %v2470 = vmul.f32 %v924, %v1766
        %v2471 = vmul.f32 %v925, %v1767
        %v2472 = vmul.f32 %v926, %v1768
        %v2473 = vmul.f32 %v927, %v1769
        %v2474 = vmul.f32 %v928, %v1766
        %v2475 = vmul.f32 %v929, %v1767
        %v2476 = vmul.f32 %v930, %v1768
        %v2477 = vmul.f32 %v931, %v1769
        %v2478 = vmul.f32 %v932, %v1766
        %v2479 = vmul.f32 %v933, %v1767
        %v2480 = vmul.f32 %v934, %v1768
        %v2481 = vmul.f32 %v935, %v1769
        %v2482 = vmul.f32 %v936, %v1766
        %v2483 = vmul.f32 %v937, %v1767
        %v2484 = vmul.f32 %v938, %v1768
        %v2485 = vmul.f32 %v939, %v1769
        %v2486 = vmul.f32 %v940, %v1766
        %v2487 = vmul.f32 %v941, %v1767
        %v2488 = vmul.f32 %v942, %v1768
        %v2489 = vmul.f32 %v943, %v1769
        %v2490 = vmul.f32 %v944, %v1766
        %v2491 = vmul.f32 %v945, %v1767
        %v2492 = vmul.f32 %v946, %v1768
        %v2493 = vmul.f32 %v947, %v1769
        %v2494 = vmul.f32 %v948, %v1766
        %v2495 = vmul.f32 %v949, %v1767
        %v2496 = vmul.f32 %v950, %v1768
        %v2497 = vmul.f32 %v951, %v1769
        %v2498 = vmul.f32 %v952, %v1766
        %v2499 = vmul.f32 %v953, %v1767
        %v2500 = vmul.f32 %v954, %v1768
        %v2501 = vmul.f32 %v955, %v1769
        %v2502 = vmul.f32 %v956, %v1766
        %v2503 = vmul.f32 %v957, %v1767
        %v2504 = vmul.f32 %v958, %v1768
        %v2505 = vmul.f32 %v959, %v1769
        %v2506 = vmul.f32 %v960, %v1766
        %v2507 = vmul.f32 %v961, %v1767
        %v2508 = vmul.f32 %v962, %v1768
        %v2509 = vmul.f32 %v963, %v1769
        %v2510 = vmul.f32 %v964, %v1766
        %v2511 = vmul.f32 %v965, %v1767
        %v2512 = vmul.f32 %v966, %v1768
        %v2513 = vmul.f32 %v967, %v1769
        %v2514 = vmul.f32 %v968, %v1766
        %v2515 = vmul.f32 %v969, %v1767
        %v2516 = vmul.f32 %v970, %v1768
        %v2517 = vmul.f32 %v971, %v1769
        %v2518 = vmul.f32 %v972, %v1766
        %v2519 = vmul.f32 %v973, %v1767
        %v2520 = vmul.f32 %v974, %v1768
        %v2521 = vmul.f32 %v975, %v1769
        %v2522 = vmul.f32 %v976, %v1766
        %v2523 = vmul.f32 %v977, %v1767
        %v2524 = vmul.f32 %v978, %v1768
        %v2525 = vmul.f32 %v979, %v1769
        %v2526 = vmul.f32 %v980, %v1766
        %v2527 = vmul.f32 %v981, %v1767
        %v2528 = vmul.f32 %v982, %v1768
        %v2529 = vmul.f32 %v983, %v1769
        %v2530 = vmul.f32 %v984, %v1766
        %v2531 = vmul.f32 %v985, %v1767
        %v2532 = vmul.f32 %v986, %v1768
        %v2533 = vmul.f32 %v987, %v1769
        %v2534 = vmul.f32 %v988, %v1766
        %v2535 = vmul.f32 %v989, %v1767
        %v2536 = vmul.f32 %v990, %v1768
        %v2537 = vmul.f32 %v991, %v1769
        %v2538 = vmul.f32 %v992, %v1766
        %v2539 = vmul.f32 %v993, %v1767
        %v2540 = vmul.f32 %v994, %v1768
        %v2541 = vmul.f32 %v995, %v1769
        %v2542 = vmul.f32 %v996, %v1766
        %v2543 = vmul.f32 %v997, %v1767
        %v2544 = vmul.f32 %v998, %v1768
        %v2545 = vmul.f32 %v999, %v1769
        %v2546 = vmul.f32 %v1000, %v1766
        %v2547 = vmul.f32 %v1001, %v1767
        %v2548 = vmul.f32 %v1002, %v1768
        %v2549 = vmul.f32 %v1003, %v1769
        %v2550 = vmul.f32 %v1004, %v1766
        %v2551 = vmul.f32 %v1005, %v1767
        %v2552 = vmul.f32 %v1006, %v1768
        %v2553 = vmul.f32 %v1007, %v1769
        %v2554 = vmul.f32 %v1008, %v1766
        %v2555 = vmul.f32 %v1009, %v1767
        %v2556 = vmul.f32 %v1010, %v1768
        %v2557 = vmul.f32 %v1011, %v1769
        %v2558 = vmul.f32 %v1012, %v1766
        %v2559 = vmul.f32 %v1013, %v1767
        %v2560 = vmul.f32 %v1014, %v1768
        %v2561 = vmul.f32 %v1015, %v1769
        %v2562 = vmul.f32 %v1016, %v1766
        %v2563 = vmul.f32 %v1017, %v1767
        %v2564 = vmul.f32 %v1018, %v1768
        %v2565 = vmul.f32 %v1019, %v1769
        %v2566 = vmul.f32 %v1020, %v1766
        %v2567 = vmul.f32 %v1021, %v1767
        %v2568 = vmul.f32 %v1022, %v1768
        %v2569 = vmul.f32 %v1023, %v1769
        %v2570 = vmul.f32 %v1024, %v1766
        %v2571 = vmul.f32 %v1025, %v1767
        %v2572 = vmul.f32 %v1026, %v1768
        %v2573 = vmul.f32 %v1027, %v1769
        %v2574 = vmul.f32 %v1028, %v1766
        %v2575 = vmul.f32 %v1029, %v1767
        %v2576 = vmul.f32 %v1030, %v1768
        %v2577 = vmul.f32 %v1031, %v1769
        %v2578 = vmul.f32 %v1032, %v1766
        %v2579 = vmul.f32 %v1033, %v1767
        %v2580 = vmul.f32 %v1034, %v1768
        %v2581 = vmul.f32 %v1035, %v1769
        %v2582 = vmul.f32 %v1036, %v1766
        %v2583 = vmul.f32 %v1037, %v1767
        %v2584 = vmul.f32 %v1038, %v1768
        %v2585 = vmul.f32 %v1039, %v1769
        %v2586 = vmul.f32 %v1040, %v1766
        %v2587 = vmul.f32 %v1041, %v1767
        %v2588 = vmul.f32 %v1042, %v1768
        %v2589 = vmul.f32 %v1043, %v1769
        %v2590 = vmul.f32 %v1044, %v1766
        %v2591 = vmul.f32 %v1045, %v1767
        %v2592 = vmul.f32 %v1046, %v1768
        %v2593 = vmul.f32 %v1047, %v1769
        %v2594 = vmul.f32 %v1048, %v1766
        %v2595 = vmul.f32 %v1049, %v1767
        %v2596 = vmul.f32 %v1050, %v1768
        %v2597 = vmul.f32 %v1051, %v1769
        %v2598 = vmul.f32 %v1052, %v1766
        %v2599 = vmul.f32 %v1053, %v1767
        %v2600 = vmul.f32 %v1054, %v1768
        %v2601 = vmul.f32 %v1055, %v1769
        %v2602 = vmul.f32 %v1056, %v1766
        %v2603 = vmul.f32 %v1057, %v1767
        %v2604 = vmul.f32 %v1058, %v1768
        %v2605 = vmul.f32 %v1059, %v1769
        %v2606 = vmul.f32 %v1060, %v1766
        %v2607 = vmul.f32 %v1061, %v1767
        %v2608 = vmul.f32 %v1062, %v1768
        %v2609 = vmul.f32 %v1063, %v1769
        %v2610 = vmul.f32 %v1064, %v1766
        %v2611 = vmul.f32 %v1065, %v1767
        %v2612 = vmul.f32 %v1066, %v1768
        %v2613 = vmul.f32 %v1067, %v1769
        %v2614 = vmul.f32 %v1068, %v1766
        %v2615 = vmul.f32 %v1069, %v1767
        %v2616 = vmul.f32 %v1070, %v1768
        %v2617 = vmul.f32 %v1071, %v1769
        %v2618 = vmul.f32 %v1072, %v1766
        %v2619 = vmul.f32 %v1073, %v1767
        %v2620 = vmul.f32 %v1074, %v1768
        %v2621 = vmul.f32 %v1075, %v1769
        %v2622 = vmul.f32 %v1076, %v1766
        %v2623 = vmul.f32 %v1077, %v1767
        %v2624 = vmul.f32 %v1078, %v1768
        %v2625 = vmul.f32 %v1079, %v1769
        %v2626 = vmul.f32 %v1080, %v1766
        %v2627 = vmul.f32 %v1081, %v1767
        %v2628 = vmul.f32 %v1082, %v1768
        %v2629 = vmul.f32 %v1083, %v1769
        %v2630 = vmul.f32 %v1084, %v1766
        %v2631 = vmul.f32 %v1085, %v1767
        %v2632 = vmul.f32 %v1086, %v1768
        %v2633 = vmul.f32 %v1087, %v1769
        %v2634 = vmul.f32 %v1088, %v1766
        %v2635 = vmul.f32 %v1089, %v1767
        %v2636 = vmul.f32 %v1090, %v1768
        %v2637 = vmul.f32 %v1091, %v1769
        %v2638 = vmul.f32 %v1092, %v1766
        %v2639 = vmul.f32 %v1093, %v1767
        %v2640 = vmul.f32 %v1094, %v1768
        %v2641 = vmul.f32 %v1095, %v1769
        %v2642 = vmul.f32 %v1096, %v1766
        %v2643 = vmul.f32 %v1097, %v1767
        %v2644 = vmul.f32 %v1098, %v1768
        %v2645 = vmul.f32 %v1099, %v1769
        %v2646 = vmul.f32 %v1100, %v1766
        %v2647 = vmul.f32 %v1101, %v1767
        %v2648 = vmul.f32 %v1102, %v1768
        %v2649 = vmul.f32 %v1103, %v1769
        %v2650 = vmul.f32 %v1104, %v1766
        %v2651 = vmul.f32 %v1105, %v1767
        %v2652 = vmul.f32 %v1106, %v1768
        %v2653 = vmul.f32 %v1107, %v1769
        %v2654 = vmul.f32 %v1108, %v1766
        %v2655 = vmul.f32 %v1109, %v1767
        %v2656 = vmul.f32 %v1110, %v1768
        %v2657 = vmul.f32 %v1111, %v1769
        %v2658 = vmul.f32 %v1112, %v1766
        %v2659 = vmul.f32 %v1113, %v1767
        %v2660 = vmul.f32 %v1114, %v1768
        %v2661 = vmul.f32 %v1115, %v1769
        %v2662 = vmul.f32 %v1116, %v1766
        %v2663 = vmul.f32 %v1117, %v1767
        %v2664 = vmul.f32 %v1118, %v1768
        %v2665 = vmul.f32 %v1119, %v1769
        %v2666 = vmul.f32 %v1120, %v1766
        %v2667 = vmul.f32 %v1121, %v1767
        %v2668 = vmul.f32 %v1122, %v1768
        %v2669 = vmul.f32 %v1123, %v1769
        %v2670 = vmul.f32 %v1124, %v1766
        %v2671 = vmul.f32 %v1125, %v1767
        %v2672 = vmul.f32 %v1126, %v1768
        %v2673 = vmul.f32 %v1127, %v1769
        %v2674 = vmul.f32 %v1128, %v1766
        %v2675 = vmul.f32 %v1129, %v1767
        %v2676 = vmul.f32 %v1130, %v1768
        %v2677 = vmul.f32 %v1131, %v1769
        %v2678 = vmul.f32 %v1132, %v1766
        %v2679 = vmul.f32 %v1133, %v1767
        %v2680 = vmul.f32 %v1134, %v1768
        %v2681 = vmul.f32 %v1135, %v1769
        %v2682 = vmul.f32 %v1136, %v1766
        %v2683 = vmul.f32 %v1137, %v1767
        %v2684 = vmul.f32 %v1138, %v1768
        %v2685 = vmul.f32 %v1139, %v1769
        %v2686 = vmul.f32 %v1140, %v1766
        %v2687 = vmul.f32 %v1141, %v1767
        %v2688 = vmul.f32 %v1142, %v1768
        %v2689 = vmul.f32 %v1143, %v1769
        %v2690 = vmul.f32 %v1144, %v1766
        %v2691 = vmul.f32 %v1145, %v1767
        %v2692 = vmul.f32 %v1146, %v1768
        %v2693 = vmul.f32 %v1147, %v1769
        %v2694 = vmul.f32 %v1148, %v1766
        %v2695 = vmul.f32 %v1149, %v1767
        %v2696 = vmul.f32 %v1150, %v1768
        %v2697 = vmul.f32 %v1151, %v1769
        %v2698 = vmul.f32 %v1152, %v1766
        %v2699 = vmul.f32 %v1153, %v1767
        %v2700 = vmul.f32 %v1154, %v1768
        %v2701 = vmul.f32 %v1155, %v1769
        %v2702 = vmul.f32 %v1156, %v1766
        %v2703 = vmul.f32 %v1157, %v1767
        %v2704 = vmul.f32 %v1158, %v1768
        %v2705 = vmul.f32 %v1159, %v1769
        %v2706 = vmul.f32 %v1160, %v1766
        %v2707 = vmul.f32 %v1161, %v1767
        %v2708 = vmul.f32 %v1162, %v1768
        %v2709 = vmul.f32 %v1163, %v1769
        %v2710 = vmul.f32 %v1164, %v1766
        %v2711 = vmul.f32 %v1165, %v1767
        %v2712 = vmul.f32 %v1166, %v1768
        %v2713 = vmul.f32 %v1167, %v1769
        %v2714 = vmul.f32 %v1168, %v1766
        %v2715 = vmul.f32 %v1169, %v1767
        %v2716 = vmul.f32 %v1170, %v1768
        %v2717 = vmul.f32 %v1171, %v1769
        %v2718 = vmul.f32 %v1172, %v1766
        %v2719 = vmul.f32 %v1173, %v1767
        %v2720 = vmul.f32 %v1174, %v1768
        %v2721 = vmul.f32 %v1175, %v1769
        %v2722 = vmul.f32 %v1176, %v1766
        %v2723 = vmul.f32 %v1177, %v1767
        %v2724 = vmul.f32 %v1178, %v1768
        %v2725 = vmul.f32 %v1179, %v1769
        %v2726 = vmul.f32 %v1180, %v1766
        %v2727 = vmul.f32 %v1181, %v1767
        %v2728 = vmul.f32 %v1182, %v1768
        %v2729 = vmul.f32 %v1183, %v1769
        %v2730 = vmul.f32 %v1184, %v1766
        %v2731 = vmul.f32 %v1185, %v1767
        %v2732 = vmul.f32 %v1186, %v1768
        %v2733 = vmul.f32 %v1187, %v1769
        %v2734 = vmul.f32 %v1188, %v1766
        %v2735 = vmul.f32 %v1189, %v1767
        %v2736 = vmul.f32 %v1190, %v1768
        %v2737 = vmul.f32 %v1191, %v1769
        %v2738 = vmul.f32 %v1192, %v1766
        %v2739 = vmul.f32 %v1193, %v1767
        %v2740 = vmul.f32 %v1194, %v1768
        %v2741 = vmul.f32 %v1195, %v1769
        %v2742 = vmul.f32 %v1196, %v1766
        %v2743 = vmul.f32 %v1197, %v1767
        %v2744 = vmul.f32 %v1198, %v1768
        %v2745 = vmul.f32 %v1199, %v1769
        %v2746 = vmul.f32 %v1200, %v1766
        %v2747 = vmul.f32 %v1201, %v1767
        %v2748 = vmul.f32 %v1202, %v1768
        %v2749 = vmul.f32 %v1203, %v1769
        %v2750 = vmul.f32 %v1204, %v1766
        %v2751 = vmul.f32 %v1205, %v1767
        %v2752 = vmul.f32 %v1206, %v1768
        %v2753 = vmul.f32 %v1207, %v1769
        %v2754 = vmul.f32 %v1208, %v1766
        %v2755 = vmul.f32 %v1209, %v1767
        %v2756 = vmul.f32 %v1210, %v1768
        %v2757 = vmul.f32 %v1211, %v1769
        %v2758 = vmul.f32 %v1212, %v1766
        %v2759 = vmul.f32 %v1213, %v1767
        %v2760 = vmul.f32 %v1214, %v1768
        %v2761 = vmul.f32 %v1215, %v1769
        %v2762 = vmul.f32 %v1216, %v1766
        %v2763 = vmul.f32 %v1217, %v1767
        %v2764 = vmul.f32 %v1218, %v1768
        %v2765 = vmul.f32 %v1219, %v1769
        %v2766 = vmul.f32 %v1220, %v1766
        %v2767 = vmul.f32 %v1221, %v1767
        %v2768 = vmul.f32 %v1222, %v1768
        %v2769 = vmul.f32 %v1223, %v1769
        %v2770 = vmul.f32 %v1224, %v1766
        %v2771 = vmul.f32 %v1225, %v1767
        %v2772 = vmul.f32 %v1226, %v1768
        %v2773 = vmul.f32 %v1227, %v1769
        %v2774 = vmul.f32 %v1228, %v1766
        %v2775 = vmul.f32 %v1229, %v1767
        %v2776 = vmul.f32 %v1230, %v1768
        %v2777 = vmul.f32 %v1231, %v1769
        %v2778 = vmul.f32 %v1232, %v1766
        %v2779 = vmul.f32 %v1233, %v1767
        %v2780 = vmul.f32 %v1234, %v1768
        %v2781 = vmul.f32 %v1235, %v1769
        %v2782 = vmul.f32 %v1236, %v1766
        %v2783 = vmul.f32 %v1237, %v1767
        %v2784 = vmul.f32 %v1238, %v1768
        %v2785 = vmul.f32 %v1239, %v1769
        %v2786 = vmul.f32 %v1240, %v1766
        %v2787 = vmul.f32 %v1241, %v1767
        %v2788 = vmul.f32 %v1242, %v1768
        %v2789 = vmul.f32 %v1243, %v1769
        %v2790 = vmul.f32 %v1244, %v1766
        %v2791 = vmul.f32 %v1245, %v1767
        %v2792 = vmul.f32 %v1246, %v1768
        %v2793 = vmul.f32 %v1247, %v1769
        %v2794 = vmul.f32 %v1248, %v1766
        %v2795 = vmul.f32 %v1249, %v1767
        %v2796 = vmul.f32 %v1250, %v1768
        %v2797 = vmul.f32 %v1251, %v1769
        %v2798 = vmul.f32 %v1252, %v1766
        %v2799 = vmul.f32 %v1253, %v1767
        %v2800 = vmul.f32 %v1254, %v1768
        %v2801 = vmul.f32 %v1255, %v1769
        %v2802 = vmul.f32 %v1256, %v1766
        %v2803 = vmul.f32 %v1257, %v1767
        %v2804 = vmul.f32 %v1258, %v1768
        %v2805 = vmul.f32 %v1259, %v1769
        %v2806 = vmul.f32 %v1260, %v1766
        %v2807 = vmul.f32 %v1261, %v1767
        %v2808 = vmul.f32 %v1262, %v1768
        %v2809 = vmul.f32 %v1263, %v1769
        %v2810 = vmul.f32 %v1264, %v1766
        %v2811 = vmul.f32 %v1265, %v1767
        %v2812 = vmul.f32 %v1266, %v1768
        %v2813 = vmul.f32 %v1267, %v1769
        %v2814 = vmul.f32 %v1268, %v1766
        %v2815 = vmul.f32 %v1269, %v1767
        %v2816 = vmul.f32 %v1270, %v1768
        %v2817 = vmul.f32 %v1271, %v1769
        %v2818 = vmul.f32 %v1272, %v1766
        %v2819 = vmul.f32 %v1273, %v1767
        %v2820 = vmul.f32 %v1274, %v1768
        %v2821 = vmul.f32 %v1275, %v1769
        %v2822 = vmul.f32 %v1276, %v1766
        %v2823 = vmul.f32 %v1277, %v1767
        %v2824 = vmul.f32 %v1278, %v1768
        %v2825 = vmul.f32 %v1279, %v1769
        %v2826 = vmul.f32 %v1280, %v1766
        %v2827 = vmul.f32 %v1281, %v1767
        %v2828 = vmul.f32 %v1282, %v1768
        %v2829 = vmul.f32 %v1283, %v1769
        %v2830 = vmul.f32 %v1284, %v1766
        %v2831 = vmul.f32 %v1285, %v1767
        %v2832 = vmul.f32 %v1286, %v1768
        %v2833 = vmul.f32 %v1287, %v1769
        %v2834 = vmul.f32 %v1288, %v1766
        %v2835 = vmul.f32 %v1289, %v1767
        %v2836 = vmul.f32 %v1290, %v1768
        %v2837 = vmul.f32 %v1291, %v1769
        %v2838 = vmul.f32 %v1292, %v1766
        %v2839 = vmul.f32 %v1293, %v1767
        %v2840 = vmul.f32 %v1294, %v1768
        %v2841 = vmul.f32 %v1295, %v1769
        %v2842 = vmul.f32 %v1296, %v1766
        %v2843 = vmul.f32 %v1297, %v1767
        %v2844 = vmul.f32 %v1298, %v1768
        %v2845 = vmul.f32 %v1299, %v1769
        %v2846 = vmul.f32 %v1300, %v1766
        %v2847 = vmul.f32 %v1301, %v1767
        %v2848 = vmul.f32 %v1302, %v1768
        %v2849 = vmul.f32 %v1303, %v1769
        %v2850 = vmul.f32 %v1304, %v1766
        %v2851 = vmul.f32 %v1305, %v1767
        %v2852 = vmul.f32 %v1306, %v1768
        %v2853 = vmul.f32 %v1307, %v1769
        %v2854 = vmul.f32 %v1308, %v1766
        %v2855 = vmul.f32 %v1309, %v1767
        %v2856 = vmul.f32 %v1310, %v1768
        %v2857 = vmul.f32 %v1311, %v1769
        %v2858 = vmul.f32 %v1312, %v1766
        %v2859 = vmul.f32 %v1313, %v1767
        %v2860 = vmul.f32 %v1314, %v1768
        %v2861 = vmul.f32 %v1315, %v1769
        %v2862 = vmul.f32 %v1316, %v1766
        %v2863 = vmul.f32 %v1317, %v1767
        %v2864 = vmul.f32 %v1318, %v1768
        %v2865 = vmul.f32 %v1319, %v1769
        %v2866 = vmul.f32 %v1320, %v1766
        %v2867 = vmul.f32 %v1321, %v1767
        %v2868 = vmul.f32 %v1322, %v1768
        %v2869 = vmul.f32 %v1323, %v1769
        %v2870 = vmul.f32 %v1324, %v1766
        %v2871 = vmul.f32 %v1325, %v1767
        %v2872 = vmul.f32 %v1326, %v1768
        %v2873 = vmul.f32 %v1327, %v1769
        %v2874 = vmul.f32 %v1328, %v1766
        %v2875 = vmul.f32 %v1329, %v1767
        %v2876 = vmul.f32 %v1330, %v1768
        %v2877 = vmul.f32 %v1331, %v1769
        %v2878 = vmul.f32 %v1332, %v1766
        %v2879 = vmul.f32 %v1333, %v1767
        %v2880 = vmul.f32 %v1334, %v1768
        %v2881 = vmul.f32 %v1335, %v1769
        %v2882 = vmul.f32 %v1336, %v1766
        %v2883 = vmul.f32 %v1337, %v1767
        %v2884 = vmul.f32 %v1338, %v1768
        %v2885 = vmul.f32 %v1339, %v1769
        %v2886 = vmul.f32 %v1340, %v1766
        %v2887 = vmul.f32 %v1341, %v1767
        %v2888 = vmul.f32 %v1342, %v1768
        %v2889 = vmul.f32 %v1343, %v1769
        %v2890 = vmul.f32 %v1344, %v1766
        %v2891 = vmul.f32 %v1345, %v1767
        %v2892 = vmul.f32 %v1346, %v1768
        %v2893 = vmul.f32 %v1347, %v1769
        %v2894 = vmul.f32 %v1348, %v1766
        %v2895 = vmul.f32 %v1349, %v1767
        %v2896 = vmul.f32 %v1350, %v1768
        %v2897 = vmul.f32 %v1351, %v1769
        %v2898 = vmul.f32 %v1352, %v1766
        %v2899 = vmul.f32 %v1353, %v1767
        %v2900 = vmul.f32 %v1354, %v1768
        %v2901 = vmul.f32 %v1355, %v1769
        %v2902 = vmul.f32 %v1356, %v1766
        %v2903 = vmul.f32 %v1357, %v1767
        %v2904 = vmul.f32 %v1358, %v1768
        %v2905 = vmul.f32 %v1359, %v1769
        %v2906 = vmul.f32 %v1360, %v1766
        %v2907 = vmul.f32 %v1361, %v1767
        %v2908 = vmul.f32 %v1362, %v1768
        %v2909 = vmul.f32 %v1363, %v1769
        %v2910 = vmul.f32 %v1364, %v1766
        %v2911 = vmul.f32 %v1365, %v1767
        %v2912 = vmul.f32 %v1366, %v1768
        %v2913 = vmul.f32 %v1367, %v1769
        %v2914 = vmul.f32 %v1368, %v1766
        %v2915 = vmul.f32 %v1369, %v1767
        %v2916 = vmul.f32 %v1370, %v1768
        %v2917 = vmul.f32 %v1371, %v1769
        %v2918 = vmul.f32 %v1372, %v1766
        %v2919 = vmul.f32 %v1373, %v1767
        %v2920 = vmul.f32 %v1374, %v1768
        %v2921 = vmul.f32 %v1375, %v1769
        %v2922 = vmul.f32 %v1376, %v1766
        %v2923 = vmul.f32 %v1377, %v1767
        %v2924 = vmul.f32 %v1378, %v1768
        %v2925 = vmul.f32 %v1379, %v1769
        %v2926 = vmul.f32 %v1380, %v1766
        %v2927 = vmul.f32 %v1381, %v1767
        %v2928 = vmul.f32 %v1382, %v1768
        %v2929 = vmul.f32 %v1383, %v1769
        %v2930 = vmul.f32 %v1384, %v1766
        %v2931 = vmul.f32 %v1385, %v1767
        %v2932 = vmul.f32 %v1386, %v1768
        %v2933 = vmul.f32 %v1387, %v1769
        %v2934 = vmul.f32 %v1388, %v1766
        %v2935 = vmul.f32 %v1389, %v1767
        %v2936 = vmul.f32 %v1390, %v1768
        %v2937 = vmul.f32 %v1391, %v1769
        %v2938 = vmul.f32 %v1392, %v1766
        %v2939 = vmul.f32 %v1393, %v1767
        %v2940 = vmul.f32 %v1394, %v1768
        %v2941 = vmul.f32 %v1395, %v1769
        %v2942 = vmul.f32 %v1396, %v1766
        %v2943 = vmul.f32 %v1397, %v1767
        %v2944 = vmul.f32 %v1398, %v1768
        %v2945 = vmul.f32 %v1399, %v1769
        %v2946 = vmul.f32 %v1400, %v1766
        %v2947 = vmul.f32 %v1401, %v1767
        %v2948 = vmul.f32 %v1402, %v1768
        %v2949 = vmul.f32 %v1403, %v1769
        %v2950 = vmul.f32 %v1404, %v1766
        %v2951 = vmul.f32 %v1405, %v1767
        %v2952 = vmul.f32 %v1406, %v1768
        %v2953 = vmul.f32 %v1407, %v1769
        %v2954 = vmul.f32 %v1408, %v1766
        %v2955 = vmul.f32 %v1409, %v1767
        %v2956 = vmul.f32 %v1410, %v1768
        %v2957 = vmul.f32 %v1411, %v1769
        %v2958 = vmul.f32 %v1412, %v1766
        %v2959 = vmul.f32 %v1413, %v1767
        %v2960 = vmul.f32 %v1414, %v1768
        %v2961 = vmul.f32 %v1415, %v1769
        %v2962 = vmul.f32 %v1416, %v1766
        %v2963 = vmul.f32 %v1417, %v1767
        %v2964 = vmul.f32 %v1418, %v1768
        %v2965 = vmul.f32 %v1419, %v1769
        %v2966 = vmul.f32 %v1420, %v1766
        %v2967 = vmul.f32 %v1421, %v1767
        %v2968 = vmul.f32 %v1422, %v1768
        %v2969 = vmul.f32 %v1423, %v1769
        %v2970 = vmul.f32 %v1424, %v1766
        %v2971 = vmul.f32 %v1425, %v1767
        %v2972 = vmul.f32 %v1426, %v1768
        %v2973 = vmul.f32 %v1427, %v1769
        %v2974 = vmul.f32 %v1428, %v1766
        %v2975 = vmul.f32 %v1429, %v1767
        %v2976 = vmul.f32 %v1430, %v1768
        %v2977 = vmul.f32 %v1431, %v1769
        %v2978 = vmul.f32 %v1432, %v1766
        %v2979 = vmul.f32 %v1433, %v1767
        %v2980 = vmul.f32 %v1434, %v1768
        %v2981 = vmul.f32 %v1435, %v1769
        %v2982 = vmul.f32 %v1436, %v1766
        %v2983 = vmul.f32 %v1437, %v1767
        %v2984 = vmul.f32 %v1438, %v1768
        %v2985 = vmul.f32 %v1439, %v1769
        %v2986 = vmul.f32 %v1440, %v1766
        %v2987 = vmul.f32 %v1441, %v1767
        %v2988 = vmul.f32 %v1442, %v1768
        %v2989 = vmul.f32 %v1443, %v1769
        %v2990 = vmul.f32 %v1444, %v1766
        %v2991 = vmul.f32 %v1445, %v1767
        %v2992 = vmul.f32 %v1446, %v1768
        %v2993 = vmul.f32 %v1447, %v1769
        %v2994 = vmul.f32 %v1448, %v1766
        %v2995 = vmul.f32 %v1449, %v1767
        %v2996 = vmul.f32 %v1450, %v1768
        %v2997 = vmul.f32 %v1451, %v1769
        %v2998 = vmul.f32 %v1452, %v1766
        %v2999 = vmul.f32 %v1453, %v1767
        %v3000 = vmul.f32 %v1454, %v1768
        %v3001 = vmul.f32 %v1455, %v1769
        %v3002 = vmul.f32 %v1456, %v1766
        %v3003 = vmul.f32 %v1457, %v1767
        %v3004 = vmul.f32 %v1458, %v1768
        %v3005 = vmul.f32 %v1459, %v1769
        %v3006 = vmul.f32 %v1460, %v1766
        %v3007 = vmul.f32 %v1461, %v1767
        %v3008 = vmul.f32 %v1462, %v1768
        %v3009 = vmul.f32 %v1463, %v1769
        %v3010 = vmul.f32 %v1464, %v1766
        %v3011 = vmul.f32 %v1465, %v1767
        %v3012 = vmul.f32 %v1466, %v1768
        %v3013 = vmul.f32 %v1467, %v1769
        %v3014 = vmul.f32 %v1468, %v1766
        %v3015 = vmul.f32 %v1469, %v1767
        %v3016 = vmul.f32 %v1470, %v1768
        %v3017 = vmul.f32 %v1471, %v1769
        %v3018 = vmul.f32 %v1472, %v1766
        %v3019 = vmul.f32 %v1473, %v1767
        %v3020 = vmul.f32 %v1474, %v1768
        %v3021 = vmul.f32 %v1475, %v1769
        %v3022 = vmul.f32 %v1476, %v1766
        %v3023 = vmul.f32 %v1477, %v1767
        %v3024 = vmul.f32 %v1478, %v1768
        %v3025 = vmul.f32 %v1479, %v1769
        %v3026 = vmul.f32 %v1480, %v1766
        %v3027 = vmul.f32 %v1481, %v1767
        %v3028 = vmul.f32 %v1482, %v1768
        %v3029 = vmul.f32 %v1483, %v1769
        %v3030 = vmul.f32 %v1484, %v1766
        %v3031 = vmul.f32 %v1485, %v1767
        %v3032 = vmul.f32 %v1486, %v1768
        %v3033 = vmul.f32 %v1487, %v1769
        %v3034 = vmul.f32 %v1488, %v1766
        %v3035 = vmul.f32 %v1489, %v1767
        %v3036 = vmul.f32 %v1490, %v1768
        %v3037 = vmul.f32 %v1491, %v1769
        %v3038 = vmul.f32 %v1492, %v1766
        %v3039 = vmul.f32 %v1493, %v1767
        %v3040 = vmul.f32 %v1494, %v1768
        %v3041 = vmul.f32 %v1495, %v1769
        %v3042 = vmul.f32 %v1496, %v1766
        %v3043 = vmul.f32 %v1497, %v1767
        %v3044 = vmul.f32 %v1498, %v1768
        %v3045 = vmul.f32 %v1499, %v1769
        %v3046 = vmul.f32 %v1500, %v1766
        %v3047 = vmul.f32 %v1501, %v1767
        %v3048 = vmul.f32 %v1502, %v1768
        %v3049 = vmul.f32 %v1503, %v1769
        %v3050 = vmul.f32 %v1504, %v1766
        %v3051 = vmul.f32 %v1505, %v1767
        %v3052 = vmul.f32 %v1506, %v1768
        %v3053 = vmul.f32 %v1507, %v1769
        %v3054 = vmul.f32 %v1508, %v1766
        %v3055 = vmul.f32 %v1509, %v1767
        %v3056 = vmul.f32 %v1510, %v1768
        %v3057 = vmul.f32 %v1511, %v1769
        %v3058 = vmul.f32 %v1512, %v1766
        %v3059 = vmul.f32 %v1513, %v1767
        %v3060 = vmul.f32 %v1514, %v1768
        %v3061 = vmul.f32 %v1515, %v1769
        %v3062 = vmul.f32 %v1516, %v1766
        %v3063 = vmul.f32 %v1517, %v1767
        %v3064 = vmul.f32 %v1518, %v1768
        %v3065 = vmul.f32 %v1519, %v1769
        %v3066 = vmul.f32 %v1520, %v1766
        %v3067 = vmul.f32 %v1521, %v1767
        %v3068 = vmul.f32 %v1522, %v1768
        %v3069 = vmul.f32 %v1523, %v1769
        %v3070 = vmul.f32 %v1524, %v1766
        %v3071 = vmul.f32 %v1525, %v1767
        %v3072 = vmul.f32 %v1526, %v1768
        %v3073 = vmul.f32 %v1527, %v1769
        %v3074 = vmul.f32 %v1528, %v1766
        %v3075 = vmul.f32 %v1529, %v1767
        %v3076 = vmul.f32 %v1530, %v1768
        %v3077 = vmul.f32 %v1531, %v1769
        %v3078 = vmul.f32 %v1532, %v1766
        %v3079 = vmul.f32 %v1533, %v1767
        %v3080 = vmul.f32 %v1534, %v1768
        %v3081 = vmul.f32 %v1535, %v1769
        %v3082 = vmul.f32 %v1536, %v1766
        %v3083 = vmul.f32 %v1537, %v1767
        %v3084 = vmul.f32 %v1538, %v1768
        %v3085 = vmul.f32 %v1539, %v1769
        %v3086 = vmul.f32 %v1540, %v1766
        %v3087 = vmul.f32 %v1541, %v1767
        %v3088 = vmul.f32 %v1542, %v1768
        %v3089 = vmul.f32 %v1543, %v1769
        %v3090 = vmul.f32 %v1544, %v1766
        %v3091 = vmul.f32 %v1545, %v1767
        %v3092 = vmul.f32 %v1546, %v1768
        %v3093 = vmul.f32 %v1547, %v1769
        %v3094 = vmul.f32 %v1548, %v1766
        %v3095 = vmul.f32 %v1549, %v1767
        %v3096 = vmul.f32 %v1550, %v1768
        %v3097 = vmul.f32 %v1551, %v1769
        %v3098 = vmul.f32 %v1552, %v1766
        %v3099 = vmul.f32 %v1553, %v1767
        %v3100 = vmul.f32 %v1554, %v1768
        %v3101 = vmul.f32 %v1555, %v1769
        %v3102 = vmul.f32 %v1556, %v1766
        %v3103 = vmul.f32 %v1557, %v1767
        %v3104 = vmul.f32 %v1558, %v1768
        %v3105 = vmul.f32 %v1559, %v1769
        %v3106 = vmul.f32 %v1560, %v1766
        %v3107 = vmul.f32 %v1561, %v1767
        %v3108 = vmul.f32 %v1562, %v1768
        %v3109 = vmul.f32 %v1563, %v1769
        %v3110 = vmul.f32 %v1564, %v1766
        %v3111 = vmul.f32 %v1565, %v1767
        %v3112 = vmul.f32 %v1566, %v1768
        %v3113 = vmul.f32 %v1567, %v1769
        %v3114 = vmul.f32 %v1568, %v1766
        %v3115 = vmul.f32 %v1569, %v1767
        %v3116 = vmul.f32 %v1570, %v1768
        %v3117 = vmul.f32 %v1571, %v1769
        %v3118 = vmul.f32 %v1572, %v1766
        %v3119 = vmul.f32 %v1573, %v1767
        %v3120 = vmul.f32 %v1574, %v1768
        %v3121 = vmul.f32 %v1575, %v1769
        %v3122 = vmul.f32 %v1576, %v1766
        %v3123 = vmul.f32 %v1577, %v1767
        %v3124 = vmul.f32 %v1578, %v1768
        %v3125 = vmul.f32 %v1579, %v1769
        %v3126 = vmul.f32 %v1580, %v1766
        %v3127 = vmul.f32 %v1581, %v1767
        %v3128 = vmul.f32 %v1582, %v1768
        %v3129 = vmul.f32 %v1583, %v1769
        %v3130 = vmul.f32 %v1584, %v1766
        %v3131 = vmul.f32 %v1585, %v1767
        %v3132 = vmul.f32 %v1586, %v1768
        %v3133 = vmul.f32 %v1587, %v1769
        %v3134 = vmul.f32 %v1588, %v1766
        %v3135 = vmul.f32 %v1589, %v1767
        %v3136 = vmul.f32 %v1590, %v1768
        %v3137 = vmul.f32 %v1591, %v1769
        %v3138 = vmul.f32 %v1592, %v1766
        %v3139 = vmul.f32 %v1593, %v1767
        %v3140 = vmul.f32 %v1594, %v1768
        %v3141 = vmul.f32 %v1595, %v1769
        %v3142 = vmul.f32 %v1596, %v1766
        %v3143 = vmul.f32 %v1597, %v1767
        %v3144 = vmul.f32 %v1598, %v1768
        %v3145 = vmul.f32 %v1599, %v1769
        %v3146 = vmul.f32 %v1600, %v1766
        %v3147 = vmul.f32 %v1601, %v1767
        %v3148 = vmul.f32 %v1602, %v1768
        %v3149 = vmul.f32 %v1603, %v1769
        %v3150 = vmul.f32 %v1604, %v1766
        %v3151 = vmul.f32 %v1605, %v1767
        %v3152 = vmul.f32 %v1606, %v1768
        %v3153 = vmul.f32 %v1607, %v1769
        %v3154 = vmul.f32 %v1608, %v1766
        %v3155 = vmul.f32 %v1609, %v1767
        %v3156 = vmul.f32 %v1610, %v1768
        %v3157 = vmul.f32 %v1611, %v1769
        %v3158 = vmul.f32 %v1612, %v1766
        %v3159 = vmul.f32 %v1613, %v1767
        %v3160 = vmul.f32 %v1614, %v1768
        %v3161 = vmul.f32 %v1615, %v1769
        %v3162 = vmul.f32 %v1616, %v1766
        %v3163 = vmul.f32 %v1617, %v1767
        %v3164 = vmul.f32 %v1618, %v1768
        %v3165 = vmul.f32 %v1619, %v1769
        %v3166 = vmul.f32 %v1620, %v1766
        %v3167 = vmul.f32 %v1621, %v1767
        %v3168 = vmul.f32 %v1622, %v1768
        %v3169 = vmul.f32 %v1623, %v1769
        %v3170 = vmul.f32 %v1624, %v1766
        %v3171 = vmul.f32 %v1625, %v1767
        %v3172 = vmul.f32 %v1626, %v1768
        %v3173 = vmul.f32 %v1627, %v1769
        %v3174 = vmul.f32 %v1628, %v1766
        %v3175 = vmul.f32 %v1629, %v1767
        %v3176 = vmul.f32 %v1630, %v1768
        %v3177 = vmul.f32 %v1631, %v1769
        %v3178 = vmul.f32 %v1632, %v1766
        %v3179 = vmul.f32 %v1633, %v1767
        %v3180 = vmul.f32 %v1634, %v1768
        %v3181 = vmul.f32 %v1635, %v1769
        %v3182 = vmul.f32 %v1636, %v1766
        %v3183 = vmul.f32 %v1637, %v1767
        %v3184 = vmul.f32 %v1638, %v1768
        %v3185 = vmul.f32 %v1639, %v1769
        %v3186 = vmul.f32 %v1640, %v1766
        %v3187 = vmul.f32 %v1641, %v1767
        %v3188 = vmul.f32 %v1642, %v1768
        %v3189 = vmul.f32 %v1643, %v1769
        %v3190 = vmul.f32 %v1644, %v1766
        %v3191 = vmul.f32 %v1645, %v1767
        %v3192 = vmul.f32 %v1646, %v1768
        %v3193 = vmul.f32 %v1647, %v1769
        %v3194 = vmul.f32 %v1648, %v1766
        %v3195 = vmul.f32 %v1649, %v1767
        %v3196 = vmul.f32 %v1650, %v1768
        %v3197 = vmul.f32 %v1651, %v1769
        %v3198 = vmul.f32 %v1652, %v1766
        %v3199 = vmul.f32 %v1653, %v1767
        %v3200 = vmul.f32 %v1654, %v1768
        %v3201 = vmul.f32 %v1655, %v1769
        %v3202 = vmul.f32 %v1656, %v1766
        %v3203 = vmul.f32 %v1657, %v1767
        %v3204 = vmul.f32 %v1658, %v1768
        %v3205 = vmul.f32 %v1659, %v1769
        %v3206 = vmul.f32 %v1660, %v1766
        %v3207 = vmul.f32 %v1661, %v1767
        %v3208 = vmul.f32 %v1662, %v1768
        %v3209 = vmul.f32 %v1663, %v1769
        %v3210 = vmul.f32 %v1664, %v1766
        %v3211 = vmul.f32 %v1665, %v1767
        %v3212 = vmul.f32 %v1666, %v1768
        %v3213 = vmul.f32 %v1667, %v1769
        %v3214 = vmul.f32 %v1668, %v1766
        %v3215 = vmul.f32 %v1669, %v1767
        %v3216 = vmul.f32 %v1670, %v1768
        %v3217 = vmul.f32 %v1671, %v1769
        %v3218 = vmul.f32 %v1672, %v1766
        %v3219 = vmul.f32 %v1673, %v1767
        %v3220 = vmul.f32 %v1674, %v1768
        %v3221 = vmul.f32 %v1675, %v1769
        %v3222 = vmul.f32 %v1676, %v1766
        %v3223 = vmul.f32 %v1677, %v1767
        %v3224 = vmul.f32 %v1678, %v1768
        %v3225 = vmul.f32 %v1679, %v1769
        %v3226 = vmul.f32 %v1680, %v1766
        %v3227 = vmul.f32 %v1681, %v1767
        %v3228 = vmul.f32 %v1682, %v1768
        %v3229 = vmul.f32 %v1683, %v1769
        %v3230 = vmul.f32 %v1684, %v1766
        %v3231 = vmul.f32 %v1685, %v1767
        %v3232 = vmul.f32 %v1686, %v1768
        %v3233 = vmul.f32 %v1687, %v1769
        %v3234 = vmul.f32 %v1688, %v1766
        %v3235 = vmul.f32 %v1689, %v1767
        %v3236 = vmul.f32 %v1690, %v1768
        %v3237 = vmul.f32 %v1691, %v1769
        %v3238 = vmul.f32 %v1692, %v1766
        %v3239 = vmul.f32 %v1693, %v1767
        %v3240 = vmul.f32 %v1694, %v1768
        %v3241 = vmul.f32 %v1695, %v1769
        %v3242 = vmul.f32 %v1696, %v1766
        %v3243 = vmul.f32 %v1697, %v1767
        %v3244 = vmul.f32 %v1698, %v1768
        %v3245 = vmul.f32 %v1699, %v1769
        %v3246 = vmul.f32 %v1700, %v1766
        %v3247 = vmul.f32 %v1701, %v1767
        %v3248 = vmul.f32 %v1702, %v1768
        %v3249 = vmul.f32 %v1703, %v1769
        %v3250 = vmul.f32 %v1704, %v1766
        %v3251 = vmul.f32 %v1705, %v1767
        %v3252 = vmul.f32 %v1706, %v1768
        %v3253 = vmul.f32 %v1707, %v1769
        %v3254 = vmul.f32 %v1708, %v1766
        %v3255 = vmul.f32 %v1709, %v1767
        %v3256 = vmul.f32 %v1710, %v1768
        %v3257 = vmul.f32 %v1711, %v1769
        %v3258 = vmul.f32 %v1712, %v1766
        %v3259 = vmul.f32 %v1713, %v1767
        %v3260 = vmul.f32 %v1714, %v1768
        %v3261 = vmul.f32 %v1715, %v1769
        %v3262 = vmul.f32 %v1716, %v1766
        %v3263 = vmul.f32 %v1717, %v1767
        %v3264 = vmul.f32 %v1718, %v1768
        %v3265 = vmul.f32 %v1719, %v1769
        %v3266 = vmul.f32 %v1720, %v1766
        %v3267 = vmul.f32 %v1721, %v1767
        %v3268 = vmul.f32 %v1722, %v1768
        %v3269 = vmul.f32 %v1723, %v1769
        %v3270 = vmul.f32 %v1724, %v1766
        %v3271 = vmul.f32 %v1725, %v1767
        %v3272 = vmul.f32 %v1726, %v1768
        %v3273 = vmul.f32 %v1727, %v1769
        %v3274 = vmul.f32 %v1728, %v1766
        %v3275 = vmul.f32 %v1729, %v1767
        %v3276 = vmul.f32 %v1730, %v1768
        %v3277 = vmul.f32 %v1731, %v1769
        %v3278 = vmul.f32 %v1732, %v1766
        %v3279 = vmul.f32 %v1733, %v1767
        %v3280 = vmul.f32 %v1734, %v1768
        %v3281 = vmul.f32 %v1735, %v1769
        %v3282 = vmul.f32 %v1736, %v1766
        %v3283 = vmul.f32 %v1737, %v1767
        %v3284 = vmul.f32 %v1738, %v1768
        %v3285 = vmul.f32 %v1739, %v1769
        %v3286 = vmul.f32 %v1740, %v1766
        %v3287 = vmul.f32 %v1741, %v1767
        %v3288 = vmul.f32 %v1742, %v1768
        %v3289 = vmul.f32 %v1743, %v1769
        %v3290 = vmul.f32 %v1744, %v1766
        %v3291 = vmul.f32 %v1745, %v1767
        %v3292 = vmul.f32 %v1746, %v1768
        %v3293 = vmul.f32 %v1747, %v1769
        %v3294 = vmul.f32 %v1748, %v1766
        %v3295 = vmul.f32 %v1749, %v1767
        %v3296 = vmul.f32 %v1750, %v1768
        %v3297 = vmul.f32 %v1751, %v1769
        %v3298 = vmul.f32 %v1752, %v1766
        %v3299 = vmul.f32 %v1753, %v1767
        %v3300 = vmul.f32 %v1754, %v1768
        %v3301 = vmul.f32 %v1755, %v1769
        %v3302 = vmul.f32 %v1756, %v1766
        %v3303 = vmul.f32 %v1757, %v1767
        %v3304 = vmul.f32 %v1758, %v1768
        %v3305 = vmul.f32 %v1759, %v1769
        %v3306 = vmul.f32 %v1760, %v1766
        %v3307 = vmul.f32 %v1761, %v1767
        %v3308 = vmul.f32 %v1762, %v1768
        %v3309 = vmul.f32 %v1763, %v1769
        %3310 = vst [vmem:[%s212] sm:$0xff] %v1774
        %3311 = vst [vmem:[%s212 + $0x8] sm:$0xff] %v1775
        %3312 = vst [vmem:[%s212 + $0x10] sm:$0xff] %v1776
        %3313 = vst [vmem:[%s212 + $0x18] sm:$0xff] %v1777
        %3314 = vst [vmem:[%s212 + $0x20] sm:$0xff] %v1778
        %3315 = vst [vmem:[%s212 + $0x28] sm:$0xff] %v1779
        %3316 = vst [vmem:[%s212 + $0x30] sm:$0xff] %v1780
        %3317 = vst [vmem:[%s212 + $0x38] sm:$0xff] %v1781
        %3318 = vst [vmem:[%s212 + $0x40] sm:$0xff] %v1782
        %3319 = vst [vmem:[%s212 + $0x48] sm:$0xff] %v1783
        %3320 = vst [vmem:[%s212 + $0x50] sm:$0xff] %v1784
        %3321 = vst [vmem:[%s212 + $0x58] sm:$0xff] %v1785
        %3322 = vst [vmem:[%s212 + $0x60] sm:$0xff] %v1786
        %3323 = vst [vmem:[%s212 + $0x68] sm:$0xff] %v1787
        %3324 = vst [vmem:[%s212 + $0x70] sm:$0xff] %v1788
        %3325 = vst [vmem:[%s212 + $0x78] sm:$0xff] %v1789
        %3326 = vst [vmem:[%s212 + $0x80] sm:$0xff] %v1790
        %3327 = vst [vmem:[%s212 + $0x88] sm:$0xff] %v1791
        %3328 = vst [vmem:[%s212 + $0x90] sm:$0xff] %v1792
        %3329 = vst [vmem:[%s212 + $0x98] sm:$0xff] %v1793
        %3330 = vst [vmem:[%s212 + $0xa0] sm:$0xff] %v1794
        %3331 = vst [vmem:[%s212 + $0xa8] sm:$0xff] %v1795
        %3332 = vst [vmem:[%s212 + $0xb0] sm:$0xff] %v1796
        %3333 = vst [vmem:[%s212 + $0xb8] sm:$0xff] %v1797
        %3334 = vst [vmem:[%s212 + $0xc0] sm:$0xff] %v1798
        %3335 = vst [vmem:[%s212 + $0xc8] sm:$0xff] %v1799
        %3336 = vst [vmem:[%s212 + $0xd0] sm:$0xff] %v1800
        %3337 = vst [vmem:[%s212 + $0xd8] sm:$0xff] %v1801
        %3338 = vst [vmem:[%s212 + $0xe0] sm:$0xff] %v1802
        %3339 = vst [vmem:[%s212 + $0xe8] sm:$0xff] %v1803
        %3340 = vst [vmem:[%s212 + $0xf0] sm:$0xff] %v1804
        %3341 = vst [vmem:[%s212 + $0xf8] sm:$0xff] %v1805
        %3342 = vst [vmem:[%s212 + $0x100] sm:$0xff] %v1806
        %3343 = vst [vmem:[%s212 + $0x108] sm:$0xff] %v1807
        %3344 = vst [vmem:[%s212 + $0x110] sm:$0xff] %v1808
        %3345 = vst [vmem:[%s212 + $0x118] sm:$0xff] %v1809
        %3346 = vst [vmem:[%s212 + $0x120] sm:$0xff] %v1810
        %3347 = vst [vmem:[%s212 + $0x128] sm:$0xff] %v1811
        %3348 = vst [vmem:[%s212 + $0x130] sm:$0xff] %v1812
        %3349 = vst [vmem:[%s212 + $0x138] sm:$0xff] %v1813
        %3350 = vst [vmem:[%s212 + $0x140] sm:$0xff] %v1814
        %3351 = vst [vmem:[%s212 + $0x148] sm:$0xff] %v1815
        %3352 = vst [vmem:[%s212 + $0x150] sm:$0xff] %v1816
        %3353 = vst [vmem:[%s212 + $0x158] sm:$0xff] %v1817
        %3354 = vst [vmem:[%s212 + $0x160] sm:$0xff] %v1818
        %3355 = vst [vmem:[%s212 + $0x168] sm:$0xff] %v1819
        %3356 = vst [vmem:[%s212 + $0x170] sm:$0xff] %v1820
        %3357 = vst [vmem:[%s212 + $0x178] sm:$0xff] %v1821
        %3358 = vst [vmem:[%s212 + $0x180] sm:$0xff] %v1822
        %3359 = vst [vmem:[%s212 + $0x188] sm:$0xff] %v1823
        %3360 = vst [vmem:[%s212 + $0x190] sm:$0xff] %v1824
        %3361 = vst [vmem:[%s212 + $0x198] sm:$0xff] %v1825
        %3362 = vst [vmem:[%s212 + $0x1a0] sm:$0xff] %v1826
        %3363 = vst [vmem:[%s212 + $0x1a8] sm:$0xff] %v1827
        %3364 = vst [vmem:[%s212 + $0x1b0] sm:$0xff] %v1828
        %3365 = vst [vmem:[%s212 + $0x1b8] sm:$0xff] %v1829
        %3366 = vst [vmem:[%s212 + $0x1c0] sm:$0xff] %v1830
        %3367 = vst [vmem:[%s212 + $0x1c8] sm:$0xff] %v1831
        %3368 = vst [vmem:[%s212 + $0x1d0] sm:$0xff] %v1832
        %3369 = vst [vmem:[%s212 + $0x1d8] sm:$0xff] %v1833
        %3370 = vst [vmem:[%s212 + $0x1e0] sm:$0xff] %v1834
        %3371 = vst [vmem:[%s212 + $0x1e8] sm:$0xff] %v1835
        %3372 = vst [vmem:[%s212 + $0x1f0] sm:$0xff] %v1836
        %3373 = vst [vmem:[%s212 + $0x1f8] sm:$0xff] %v1837
        %3374 = vst [vmem:[%s212 + $0x200] sm:$0xff] %v1838
        %3375 = vst [vmem:[%s212 + $0x208] sm:$0xff] %v1839
        %3376 = vst [vmem:[%s212 + $0x210] sm:$0xff] %v1840
        %3377 = vst [vmem:[%s212 + $0x218] sm:$0xff] %v1841
        %3378 = vst [vmem:[%s212 + $0x220] sm:$0xff] %v1842
        %3379 = vst [vmem:[%s212 + $0x228] sm:$0xff] %v1843
        %3380 = vst [vmem:[%s212 + $0x230] sm:$0xff] %v1844
        %3381 = vst [vmem:[%s212 + $0x238] sm:$0xff] %v1845
        %3382 = vst [vmem:[%s212 + $0x240] sm:$0xff] %v1846
        %3383 = vst [vmem:[%s212 + $0x248] sm:$0xff] %v1847
        %3384 = vst [vmem:[%s212 + $0x250] sm:$0xff] %v1848
        %3385 = vst [vmem:[%s212 + $0x258] sm:$0xff] %v1849
        %3386 = vst [vmem:[%s212 + $0x260] sm:$0xff] %v1850
        %3387 = vst [vmem:[%s212 + $0x268] sm:$0xff] %v1851
        %3388 = vst [vmem:[%s212 + $0x270] sm:$0xff] %v1852
        %3389 = vst [vmem:[%s212 + $0x278] sm:$0xff] %v1853
        %3390 = vst [vmem:[%s212 + $0x280] sm:$0xff] %v1854
        %3391 = vst [vmem:[%s212 + $0x288] sm:$0xff] %v1855
        %3392 = vst [vmem:[%s212 + $0x290] sm:$0xff] %v1856
        %3393 = vst [vmem:[%s212 + $0x298] sm:$0xff] %v1857
        %3394 = vst [vmem:[%s212 + $0x2a0] sm:$0xff] %v1858
        %3395 = vst [vmem:[%s212 + $0x2a8] sm:$0xff] %v1859
        %3396 = vst [vmem:[%s212 + $0x2b0] sm:$0xff] %v1860
        %3397 = vst [vmem:[%s212 + $0x2b8] sm:$0xff] %v1861
        %3398 = vst [vmem:[%s212 + $0x2c0] sm:$0xff] %v1862
        %3399 = vst [vmem:[%s212 + $0x2c8] sm:$0xff] %v1863
        %3400 = vst [vmem:[%s212 + $0x2d0] sm:$0xff] %v1864
        %3401 = vst [vmem:[%s212 + $0x2d8] sm:$0xff] %v1865
        %3402 = vst [vmem:[%s212 + $0x2e0] sm:$0xff] %v1866
        %3403 = vst [vmem:[%s212 + $0x2e8] sm:$0xff] %v1867
        %3404 = vst [vmem:[%s212 + $0x2f0] sm:$0xff] %v1868
        %3405 = vst [vmem:[%s212 + $0x2f8] sm:$0xff] %v1869
        %3406 = vst [vmem:[%s212 + $0x300] sm:$0xff] %v1870
        %3407 = vst [vmem:[%s212 + $0x308] sm:$0xff] %v1871
        %3408 = vst [vmem:[%s212 + $0x310] sm:$0xff] %v1872
        %3409 = vst [vmem:[%s212 + $0x318] sm:$0xff] %v1873
        %3410 = vst [vmem:[%s212 + $0x320] sm:$0xff] %v1874
        %3411 = vst [vmem:[%s212 + $0x328] sm:$0xff] %v1875
        %3412 = vst [vmem:[%s212 + $0x330] sm:$0xff] %v1876
        %3413 = vst [vmem:[%s212 + $0x338] sm:$0xff] %v1877
        %3414 = vst [vmem:[%s212 + $0x340] sm:$0xff] %v1878
        %3415 = vst [vmem:[%s212 + $0x348] sm:$0xff] %v1879
        %3416 = vst [vmem:[%s212 + $0x350] sm:$0xff] %v1880
        %3417 = vst [vmem:[%s212 + $0x358] sm:$0xff] %v1881
        %3418 = vst [vmem:[%s212 + $0x360] sm:$0xff] %v1882
        %3419 = vst [vmem:[%s212 + $0x368] sm:$0xff] %v1883
        %3420 = vst [vmem:[%s212 + $0x370] sm:$0xff] %v1884
        %3421 = vst [vmem:[%s212 + $0x378] sm:$0xff] %v1885
        %3422 = vst [vmem:[%s212 + $0x380] sm:$0xff] %v1886
        %3423 = vst [vmem:[%s212 + $0x388] sm:$0xff] %v1887
        %3424 = vst [vmem:[%s212 + $0x390] sm:$0xff] %v1888
        %3425 = vst [vmem:[%s212 + $0x398] sm:$0xff] %v1889
        %3426 = vst [vmem:[%s212 + $0x3a0] sm:$0xff] %v1890
        %3427 = vst [vmem:[%s212 + $0x3a8] sm:$0xff] %v1891
        %3428 = vst [vmem:[%s212 + $0x3b0] sm:$0xff] %v1892
        %3429 = vst [vmem:[%s212 + $0x3b8] sm:$0xff] %v1893
        %3430 = vst [vmem:[%s212 + $0x3c0] sm:$0xff] %v1894
        %3431 = vst [vmem:[%s212 + $0x3c8] sm:$0xff] %v1895
        %3432 = vst [vmem:[%s212 + $0x3d0] sm:$0xff] %v1896
        %3433 = vst [vmem:[%s212 + $0x3d8] sm:$0xff] %v1897
        %3434 = vst [vmem:[%s212 + $0x3e0] sm:$0xff] %v1898
        %3435 = vst [vmem:[%s212 + $0x3e8] sm:$0xff] %v1899
        %3436 = vst [vmem:[%s212 + $0x3f0] sm:$0xff] %v1900
        %3437 = vst [vmem:[%s212 + $0x3f8] sm:$0xff] %v1901
        %3438 = vst [vmem:[%s212 + $0x400] sm:$0xff] %v1902
        %3439 = vst [vmem:[%s212 + $0x408] sm:$0xff] %v1903
        %3440 = vst [vmem:[%s212 + $0x410] sm:$0xff] %v1904
        %3441 = vst [vmem:[%s212 + $0x418] sm:$0xff] %v1905
        %3442 = vst [vmem:[%s212 + $0x420] sm:$0xff] %v1906
        %3443 = vst [vmem:[%s212 + $0x428] sm:$0xff] %v1907
        %3444 = vst [vmem:[%s212 + $0x430] sm:$0xff] %v1908
        %3445 = vst [vmem:[%s212 + $0x438] sm:$0xff] %v1909
        %3446 = vst [vmem:[%s212 + $0x440] sm:$0xff] %v1910
        %3447 = vst [vmem:[%s212 + $0x448] sm:$0xff] %v1911
        %3448 = vst [vmem:[%s212 + $0x450] sm:$0xff] %v1912
        %3449 = vst [vmem:[%s212 + $0x458] sm:$0xff] %v1913
        %3450 = vst [vmem:[%s212 + $0x460] sm:$0xff] %v1914
        %3451 = vst [vmem:[%s212 + $0x468] sm:$0xff] %v1915
        %3452 = vst [vmem:[%s212 + $0x470] sm:$0xff] %v1916
        %3453 = vst [vmem:[%s212 + $0x478] sm:$0xff] %v1917
        %3454 = vst [vmem:[%s212 + $0x480] sm:$0xff] %v1918
        %3455 = vst [vmem:[%s212 + $0x488] sm:$0xff] %v1919
        %3456 = vst [vmem:[%s212 + $0x490] sm:$0xff] %v1920
        %3457 = vst [vmem:[%s212 + $0x498] sm:$0xff] %v1921
        %3458 = vst [vmem:[%s212 + $0x4a0] sm:$0xff] %v1922
        %3459 = vst [vmem:[%s212 + $0x4a8] sm:$0xff] %v1923
        %3460 = vst [vmem:[%s212 + $0x4b0] sm:$0xff] %v1924
        %3461 = vst [vmem:[%s212 + $0x4b8] sm:$0xff] %v1925
        %3462 = vst [vmem:[%s212 + $0x4c0] sm:$0xff] %v1926
        %3463 = vst [vmem:[%s212 + $0x4c8] sm:$0xff] %v1927
        %3464 = vst [vmem:[%s212 + $0x4d0] sm:$0xff] %v1928
        %3465 = vst [vmem:[%s212 + $0x4d8] sm:$0xff] %v1929
        %3466 = vst [vmem:[%s212 + $0x4e0] sm:$0xff] %v1930
        %3467 = vst [vmem:[%s212 + $0x4e8] sm:$0xff] %v1931
        %3468 = vst [vmem:[%s212 + $0x4f0] sm:$0xff] %v1932
        %3469 = vst [vmem:[%s212 + $0x4f8] sm:$0xff] %v1933
        %3470 = vst [vmem:[%s212 + $0x500] sm:$0xff] %v1934
        %3471 = vst [vmem:[%s212 + $0x508] sm:$0xff] %v1935
        %3472 = vst [vmem:[%s212 + $0x510] sm:$0xff] %v1936
        %3473 = vst [vmem:[%s212 + $0x518] sm:$0xff] %v1937
        %3474 = vst [vmem:[%s212 + $0x520] sm:$0xff] %v1938
        %3475 = vst [vmem:[%s212 + $0x528] sm:$0xff] %v1939
        %3476 = vst [vmem:[%s212 + $0x530] sm:$0xff] %v1940
        %3477 = vst [vmem:[%s212 + $0x538] sm:$0xff] %v1941
        %3478 = vst [vmem:[%s212 + $0x540] sm:$0xff] %v1942
        %3479 = vst [vmem:[%s212 + $0x548] sm:$0xff] %v1943
        %3480 = vst [vmem:[%s212 + $0x550] sm:$0xff] %v1944
        %3481 = vst [vmem:[%s212 + $0x558] sm:$0xff] %v1945
        %3482 = vst [vmem:[%s212 + $0x560] sm:$0xff] %v1946
        %3483 = vst [vmem:[%s212 + $0x568] sm:$0xff] %v1947
        %3484 = vst [vmem:[%s212 + $0x570] sm:$0xff] %v1948
        %3485 = vst [vmem:[%s212 + $0x578] sm:$0xff] %v1949
        %3486 = vst [vmem:[%s212 + $0x580] sm:$0xff] %v1950
        %3487 = vst [vmem:[%s212 + $0x588] sm:$0xff] %v1951
        %3488 = vst [vmem:[%s212 + $0x590] sm:$0xff] %v1952
        %3489 = vst [vmem:[%s212 + $0x598] sm:$0xff] %v1953
        %3490 = vst [vmem:[%s212 + $0x5a0] sm:$0xff] %v1954
        %3491 = vst [vmem:[%s212 + $0x5a8] sm:$0xff] %v1955
        %3492 = vst [vmem:[%s212 + $0x5b0] sm:$0xff] %v1956
        %3493 = vst [vmem:[%s212 + $0x5b8] sm:$0xff] %v1957
        %3494 = vst [vmem:[%s212 + $0x5c0] sm:$0xff] %v1958
        %3495 = vst [vmem:[%s212 + $0x5c8] sm:$0xff] %v1959
        %3496 = vst [vmem:[%s212 + $0x5d0] sm:$0xff] %v1960
        %3497 = vst [vmem:[%s212 + $0x5d8] sm:$0xff] %v1961
        %3498 = vst [vmem:[%s212 + $0x5e0] sm:$0xff] %v1962
        %3499 = vst [vmem:[%s212 + $0x5e8] sm:$0xff] %v1963
        %3500 = vst [vmem:[%s212 + $0x5f0] sm:$0xff] %v1964
        %3501 = vst [vmem:[%s212 + $0x5f8] sm:$0xff] %v1965
        %3502 = vst [vmem:[%s212 + $0x600] sm:$0xff] %v1966
        %3503 = vst [vmem:[%s212 + $0x608] sm:$0xff] %v1967
        %3504 = vst [vmem:[%s212 + $0x610] sm:$0xff] %v1968
        %3505 = vst [vmem:[%s212 + $0x618] sm:$0xff] %v1969
        %3506 = vst [vmem:[%s212 + $0x620] sm:$0xff] %v1970
        %3507 = vst [vmem:[%s212 + $0x628] sm:$0xff] %v1971
        %3508 = vst [vmem:[%s212 + $0x630] sm:$0xff] %v1972
        %3509 = vst [vmem:[%s212 + $0x638] sm:$0xff] %v1973
        %3510 = vst [vmem:[%s212 + $0x640] sm:$0xff] %v1974
        %3511 = vst [vmem:[%s212 + $0x648] sm:$0xff] %v1975
        %3512 = vst [vmem:[%s212 + $0x650] sm:$0xff] %v1976
        %3513 = vst [vmem:[%s212 + $0x658] sm:$0xff] %v1977
        %3514 = vst [vmem:[%s212 + $0x660] sm:$0xff] %v1978
        %3515 = vst [vmem:[%s212 + $0x668] sm:$0xff] %v1979
        %3516 = vst [vmem:[%s212 + $0x670] sm:$0xff] %v1980
        %3517 = vst [vmem:[%s212 + $0x678] sm:$0xff] %v1981
        %3518 = vst [vmem:[%s212 + $0x680] sm:$0xff] %v1982
        %3519 = vst [vmem:[%s212 + $0x688] sm:$0xff] %v1983
        %3520 = vst [vmem:[%s212 + $0x690] sm:$0xff] %v1984
        %3521 = vst [vmem:[%s212 + $0x698] sm:$0xff] %v1985
        %3522 = vst [vmem:[%s212 + $0x6a0] sm:$0xff] %v1986
        %3523 = vst [vmem:[%s212 + $0x6a8] sm:$0xff] %v1987
        %3524 = vst [vmem:[%s212 + $0x6b0] sm:$0xff] %v1988
        %3525 = vst [vmem:[%s212 + $0x6b8] sm:$0xff] %v1989
        %3526 = vst [vmem:[%s212 + $0x6c0] sm:$0xff] %v1990
        %3527 = vst [vmem:[%s212 + $0x6c8] sm:$0xff] %v1991
        %3528 = vst [vmem:[%s212 + $0x6d0] sm:$0xff] %v1992
        %3529 = vst [vmem:[%s212 + $0x6d8] sm:$0xff] %v1993
        %3530 = vst [vmem:[%s212 + $0x6e0] sm:$0xff] %v1994
        %3531 = vst [vmem:[%s212 + $0x6e8] sm:$0xff] %v1995
        %3532 = vst [vmem:[%s212 + $0x6f0] sm:$0xff] %v1996
        %3533 = vst [vmem:[%s212 + $0x6f8] sm:$0xff] %v1997
        %3534 = vst [vmem:[%s212 + $0x700] sm:$0xff] %v1998
        %3535 = vst [vmem:[%s212 + $0x708] sm:$0xff] %v1999
        %3536 = vst [vmem:[%s212 + $0x710] sm:$0xff] %v2000
        %3537 = vst [vmem:[%s212 + $0x718] sm:$0xff] %v2001
        %3538 = vst [vmem:[%s212 + $0x720] sm:$0xff] %v2002
        %3539 = vst [vmem:[%s212 + $0x728] sm:$0xff] %v2003
        %3540 = vst [vmem:[%s212 + $0x730] sm:$0xff] %v2004
        %3541 = vst [vmem:[%s212 + $0x738] sm:$0xff] %v2005
        %3542 = vst [vmem:[%s212 + $0x740] sm:$0xff] %v2006
        %3543 = vst [vmem:[%s212 + $0x748] sm:$0xff] %v2007
        %3544 = vst [vmem:[%s212 + $0x750] sm:$0xff] %v2008
        %3545 = vst [vmem:[%s212 + $0x758] sm:$0xff] %v2009
        %3546 = vst [vmem:[%s212 + $0x760] sm:$0xff] %v2010
        %3547 = vst [vmem:[%s212 + $0x768] sm:$0xff] %v2011
        %3548 = vst [vmem:[%s212 + $0x770] sm:$0xff] %v2012
        %3549 = vst [vmem:[%s212 + $0x778] sm:$0xff] %v2013
        %3550 = vst [vmem:[%s212 + $0x780] sm:$0xff] %v2014
        %3551 = vst [vmem:[%s212 + $0x788] sm:$0xff] %v2015
        %3552 = vst [vmem:[%s212 + $0x790] sm:$0xff] %v2016
        %3553 = vst [vmem:[%s212 + $0x798] sm:$0xff] %v2017
        %3554 = vst [vmem:[%s212 + $0x7a0] sm:$0xff] %v2018
        %3555 = vst [vmem:[%s212 + $0x7a8] sm:$0xff] %v2019
        %3556 = vst [vmem:[%s212 + $0x7b0] sm:$0xff] %v2020
        %3557 = vst [vmem:[%s212 + $0x7b8] sm:$0xff] %v2021
        %3558 = vst [vmem:[%s212 + $0x7c0] sm:$0xff] %v2022
        %3559 = vst [vmem:[%s212 + $0x7c8] sm:$0xff] %v2023
        %3560 = vst [vmem:[%s212 + $0x7d0] sm:$0xff] %v2024
        %3561 = vst [vmem:[%s212 + $0x7d8] sm:$0xff] %v2025
        %3562 = vst [vmem:[%s212 + $0x7e0] sm:$0xff] %v2026
        %3563 = vst [vmem:[%s212 + $0x7e8] sm:$0xff] %v2027
        %3564 = vst [vmem:[%s212 + $0x7f0] sm:$0xff] %v2028
        %3565 = vst [vmem:[%s212 + $0x7f8] sm:$0xff] %v2029
        %3566 = vst [vmem:[%s212 + $0x800] sm:$0xff] %v2030
        %3567 = vst [vmem:[%s212 + $0x808] sm:$0xff] %v2031
        %3568 = vst [vmem:[%s212 + $0x810] sm:$0xff] %v2032
        %3569 = vst [vmem:[%s212 + $0x818] sm:$0xff] %v2033
        %3570 = vst [vmem:[%s212 + $0x820] sm:$0xff] %v2034
        %3571 = vst [vmem:[%s212 + $0x828] sm:$0xff] %v2035
        %3572 = vst [vmem:[%s212 + $0x830] sm:$0xff] %v2036
        %3573 = vst [vmem:[%s212 + $0x838] sm:$0xff] %v2037
        %3574 = vst [vmem:[%s212 + $0x840] sm:$0xff] %v2038
        %3575 = vst [vmem:[%s212 + $0x848] sm:$0xff] %v2039
        %3576 = vst [vmem:[%s212 + $0x850] sm:$0xff] %v2040
        %3577 = vst [vmem:[%s212 + $0x858] sm:$0xff] %v2041
        %3578 = vst [vmem:[%s212 + $0x860] sm:$0xff] %v2042
        %3579 = vst [vmem:[%s212 + $0x868] sm:$0xff] %v2043
        %3580 = vst [vmem:[%s212 + $0x870] sm:$0xff] %v2044
        %3581 = vst [vmem:[%s212 + $0x878] sm:$0xff] %v2045
        %3582 = vst [vmem:[%s212 + $0x880] sm:$0xff] %v2046
        %3583 = vst [vmem:[%s212 + $0x888] sm:$0xff] %v2047
        %3584 = vst [vmem:[%s212 + $0x890] sm:$0xff] %v2048
        %3585 = vst [vmem:[%s212 + $0x898] sm:$0xff] %v2049
        %3586 = vst [vmem:[%s212 + $0x8a0] sm:$0xff] %v2050
        %3587 = vst [vmem:[%s212 + $0x8a8] sm:$0xff] %v2051
        %3588 = vst [vmem:[%s212 + $0x8b0] sm:$0xff] %v2052
        %3589 = vst [vmem:[%s212 + $0x8b8] sm:$0xff] %v2053
        %3590 = vst [vmem:[%s212 + $0x8c0] sm:$0xff] %v2054
        %3591 = vst [vmem:[%s212 + $0x8c8] sm:$0xff] %v2055
        %3592 = vst [vmem:[%s212 + $0x8d0] sm:$0xff] %v2056
        %3593 = vst [vmem:[%s212 + $0x8d8] sm:$0xff] %v2057
        %3594 = vst [vmem:[%s212 + $0x8e0] sm:$0xff] %v2058
        %3595 = vst [vmem:[%s212 + $0x8e8] sm:$0xff] %v2059
        %3596 = vst [vmem:[%s212 + $0x8f0] sm:$0xff] %v2060
        %3597 = vst [vmem:[%s212 + $0x8f8] sm:$0xff] %v2061
        %3598 = vst [vmem:[%s212 + $0x900] sm:$0xff] %v2062
        %3599 = vst [vmem:[%s212 + $0x908] sm:$0xff] %v2063
        %3600 = vst [vmem:[%s212 + $0x910] sm:$0xff] %v2064
        %3601 = vst [vmem:[%s212 + $0x918] sm:$0xff] %v2065
        %3602 = vst [vmem:[%s212 + $0x920] sm:$0xff] %v2066
        %3603 = vst [vmem:[%s212 + $0x928] sm:$0xff] %v2067
        %3604 = vst [vmem:[%s212 + $0x930] sm:$0xff] %v2068
        %3605 = vst [vmem:[%s212 + $0x938] sm:$0xff] %v2069
        %3606 = vst [vmem:[%s212 + $0x940] sm:$0xff] %v2070
        %3607 = vst [vmem:[%s212 + $0x948] sm:$0xff] %v2071
        %3608 = vst [vmem:[%s212 + $0x950] sm:$0xff] %v2072
        %3609 = vst [vmem:[%s212 + $0x958] sm:$0xff] %v2073
        %3610 = vst [vmem:[%s212 + $0x960] sm:$0xff] %v2074
        %3611 = vst [vmem:[%s212 + $0x968] sm:$0xff] %v2075
        %3612 = vst [vmem:[%s212 + $0x970] sm:$0xff] %v2076
        %3613 = vst [vmem:[%s212 + $0x978] sm:$0xff] %v2077
        %3614 = vst [vmem:[%s212 + $0x980] sm:$0xff] %v2078
        %3615 = vst [vmem:[%s212 + $0x988] sm:$0xff] %v2079
        %3616 = vst [vmem:[%s212 + $0x990] sm:$0xff] %v2080
        %3617 = vst [vmem:[%s212 + $0x998] sm:$0xff] %v2081
        %3618 = vst [vmem:[%s212 + $0x9a0] sm:$0xff] %v2082
        %3619 = vst [vmem:[%s212 + $0x9a8] sm:$0xff] %v2083
        %3620 = vst [vmem:[%s212 + $0x9b0] sm:$0xff] %v2084
        %3621 = vst [vmem:[%s212 + $0x9b8] sm:$0xff] %v2085
        %3622 = vst [vmem:[%s212 + $0x9c0] sm:$0xff] %v2086
        %3623 = vst [vmem:[%s212 + $0x9c8] sm:$0xff] %v2087
        %3624 = vst [vmem:[%s212 + $0x9d0] sm:$0xff] %v2088
        %3625 = vst [vmem:[%s212 + $0x9d8] sm:$0xff] %v2089
        %3626 = vst [vmem:[%s212 + $0x9e0] sm:$0xff] %v2090
        %3627 = vst [vmem:[%s212 + $0x9e8] sm:$0xff] %v2091
        %3628 = vst [vmem:[%s212 + $0x9f0] sm:$0xff] %v2092
        %3629 = vst [vmem:[%s212 + $0x9f8] sm:$0xff] %v2093
        %3630 = vst [vmem:[%s212 + $0xa00] sm:$0xff] %v2094
        %3631 = vst [vmem:[%s212 + $0xa08] sm:$0xff] %v2095
        %3632 = vst [vmem:[%s212 + $0xa10] sm:$0xff] %v2096
        %3633 = vst [vmem:[%s212 + $0xa18] sm:$0xff] %v2097
        %3634 = vst [vmem:[%s212 + $0xa20] sm:$0xff] %v2098
        %3635 = vst [vmem:[%s212 + $0xa28] sm:$0xff] %v2099
        %3636 = vst [vmem:[%s212 + $0xa30] sm:$0xff] %v2100
        %3637 = vst [vmem:[%s212 + $0xa38] sm:$0xff] %v2101
        %3638 = vst [vmem:[%s212 + $0xa40] sm:$0xff] %v2102
        %3639 = vst [vmem:[%s212 + $0xa48] sm:$0xff] %v2103
        %3640 = vst [vmem:[%s212 + $0xa50] sm:$0xff] %v2104
        %3641 = vst [vmem:[%s212 + $0xa58] sm:$0xff] %v2105
        %3642 = vst [vmem:[%s212 + $0xa60] sm:$0xff] %v2106
        %3643 = vst [vmem:[%s212 + $0xa68] sm:$0xff] %v2107
        %3644 = vst [vmem:[%s212 + $0xa70] sm:$0xff] %v2108
        %3645 = vst [vmem:[%s212 + $0xa78] sm:$0xff] %v2109
        %3646 = vst [vmem:[%s212 + $0xa80] sm:$0xff] %v2110
        %3647 = vst [vmem:[%s212 + $0xa88] sm:$0xff] %v2111
        %3648 = vst [vmem:[%s212 + $0xa90] sm:$0xff] %v2112
        %3649 = vst [vmem:[%s212 + $0xa98] sm:$0xff] %v2113
        %3650 = vst [vmem:[%s212 + $0xaa0] sm:$0xff] %v2114
        %3651 = vst [vmem:[%s212 + $0xaa8] sm:$0xff] %v2115
        %3652 = vst [vmem:[%s212 + $0xab0] sm:$0xff] %v2116
        %3653 = vst [vmem:[%s212 + $0xab8] sm:$0xff] %v2117
        %3654 = vst [vmem:[%s212 + $0xac0] sm:$0xff] %v2118
        %3655 = vst [vmem:[%s212 + $0xac8] sm:$0xff] %v2119
        %3656 = vst [vmem:[%s212 + $0xad0] sm:$0xff] %v2120
        %3657 = vst [vmem:[%s212 + $0xad8] sm:$0xff] %v2121
        %3658 = vst [vmem:[%s212 + $0xae0] sm:$0xff] %v2122
        %3659 = vst [vmem:[%s212 + $0xae8] sm:$0xff] %v2123
        %3660 = vst [vmem:[%s212 + $0xaf0] sm:$0xff] %v2124
        %3661 = vst [vmem:[%s212 + $0xaf8] sm:$0xff] %v2125
        %3662 = vst [vmem:[%s212 + $0xb00] sm:$0xff] %v2126
        %3663 = vst [vmem:[%s212 + $0xb08] sm:$0xff] %v2127
        %3664 = vst [vmem:[%s212 + $0xb10] sm:$0xff] %v2128
        %3665 = vst [vmem:[%s212 + $0xb18] sm:$0xff] %v2129
        %3666 = vst [vmem:[%s212 + $0xb20] sm:$0xff] %v2130
        %3667 = vst [vmem:[%s212 + $0xb28] sm:$0xff] %v2131
        %3668 = vst [vmem:[%s212 + $0xb30] sm:$0xff] %v2132
        %3669 = vst [vmem:[%s212 + $0xb38] sm:$0xff] %v2133
        %3670 = vst [vmem:[%s212 + $0xb40] sm:$0xff] %v2134
        %3671 = vst [vmem:[%s212 + $0xb48] sm:$0xff] %v2135
        %3672 = vst [vmem:[%s212 + $0xb50] sm:$0xff] %v2136
        %3673 = vst [vmem:[%s212 + $0xb58] sm:$0xff] %v2137
        %3674 = vst [vmem:[%s212 + $0xb60] sm:$0xff] %v2138
        %3675 = vst [vmem:[%s212 + $0xb68] sm:$0xff] %v2139
        %3676 = vst [vmem:[%s212 + $0xb70] sm:$0xff] %v2140
        %3677 = vst [vmem:[%s212 + $0xb78] sm:$0xff] %v2141
        %3678 = vst [vmem:[%s212 + $0xb80] sm:$0xff] %v2142
        %3679 = vst [vmem:[%s212 + $0xb88] sm:$0xff] %v2143
        %3680 = vst [vmem:[%s212 + $0xb90] sm:$0xff] %v2144
        %3681 = vst [vmem:[%s212 + $0xb98] sm:$0xff] %v2145
        %3682 = vst [vmem:[%s212 + $0xba0] sm:$0xff] %v2146
        %3683 = vst [vmem:[%s212 + $0xba8] sm:$0xff] %v2147
        %3684 = vst [vmem:[%s212 + $0xbb0] sm:$0xff] %v2148
        %3685 = vst [vmem:[%s212 + $0xbb8] sm:$0xff] %v2149
        %3686 = vst [vmem:[%s212 + $0xbc0] sm:$0xff] %v2150
        %3687 = vst [vmem:[%s212 + $0xbc8] sm:$0xff] %v2151
        %3688 = vst [vmem:[%s212 + $0xbd0] sm:$0xff] %v2152
        %3689 = vst [vmem:[%s212 + $0xbd8] sm:$0xff] %v2153
        %3690 = vst [vmem:[%s212 + $0xbe0] sm:$0xff] %v2154
        %3691 = vst [vmem:[%s212 + $0xbe8] sm:$0xff] %v2155
        %3692 = vst [vmem:[%s212 + $0xbf0] sm:$0xff] %v2156
        %3693 = vst [vmem:[%s212 + $0xbf8] sm:$0xff] %v2157
        %3694 = vst [vmem:[%s212 + $0xc00] sm:$0xff] %v2158
        %3695 = vst [vmem:[%s212 + $0xc08] sm:$0xff] %v2159
        %3696 = vst [vmem:[%s212 + $0xc10] sm:$0xff] %v2160
        %3697 = vst [vmem:[%s212 + $0xc18] sm:$0xff] %v2161
        %3698 = vst [vmem:[%s212 + $0xc20] sm:$0xff] %v2162
        %3699 = vst [vmem:[%s212 + $0xc28] sm:$0xff] %v2163
        %3700 = vst [vmem:[%s212 + $0xc30] sm:$0xff] %v2164
        %3701 = vst [vmem:[%s212 + $0xc38] sm:$0xff] %v2165
        %3702 = vst [vmem:[%s212 + $0xc40] sm:$0xff] %v2166
        %3703 = vst [vmem:[%s212 + $0xc48] sm:$0xff] %v2167
        %3704 = vst [vmem:[%s212 + $0xc50] sm:$0xff] %v2168
        %3705 = vst [vmem:[%s212 + $0xc58] sm:$0xff] %v2169
        %3706 = vst [vmem:[%s212 + $0xc60] sm:$0xff] %v2170
        %3707 = vst [vmem:[%s212 + $0xc68] sm:$0xff] %v2171
        %3708 = vst [vmem:[%s212 + $0xc70] sm:$0xff] %v2172
        %3709 = vst [vmem:[%s212 + $0xc78] sm:$0xff] %v2173
        %3710 = vst [vmem:[%s212 + $0xc80] sm:$0xff] %v2174
        %3711 = vst [vmem:[%s212 + $0xc88] sm:$0xff] %v2175
        %3712 = vst [vmem:[%s212 + $0xc90] sm:$0xff] %v2176
        %3713 = vst [vmem:[%s212 + $0xc98] sm:$0xff] %v2177
        %3714 = vst [vmem:[%s212 + $0xca0] sm:$0xff] %v2178
        %3715 = vst [vmem:[%s212 + $0xca8] sm:$0xff] %v2179
        %3716 = vst [vmem:[%s212 + $0xcb0] sm:$0xff] %v2180
        %3717 = vst [vmem:[%s212 + $0xcb8] sm:$0xff] %v2181
        %3718 = vst [vmem:[%s212 + $0xcc0] sm:$0xff] %v2182
        %3719 = vst [vmem:[%s212 + $0xcc8] sm:$0xff] %v2183
        %3720 = vst [vmem:[%s212 + $0xcd0] sm:$0xff] %v2184
        %3721 = vst [vmem:[%s212 + $0xcd8] sm:$0xff] %v2185
        %3722 = vst [vmem:[%s212 + $0xce0] sm:$0xff] %v2186
        %3723 = vst [vmem:[%s212 + $0xce8] sm:$0xff] %v2187
        %3724 = vst [vmem:[%s212 + $0xcf0] sm:$0xff] %v2188
        %3725 = vst [vmem:[%s212 + $0xcf8] sm:$0xff] %v2189
        %3726 = vst [vmem:[%s212 + $0xd00] sm:$0xff] %v2190
        %3727 = vst [vmem:[%s212 + $0xd08] sm:$0xff] %v2191
        %3728 = vst [vmem:[%s212 + $0xd10] sm:$0xff] %v2192
        %3729 = vst [vmem:[%s212 + $0xd18] sm:$0xff] %v2193
        %3730 = vst [vmem:[%s212 + $0xd20] sm:$0xff] %v2194
        %3731 = vst [vmem:[%s212 + $0xd28] sm:$0xff] %v2195
        %3732 = vst [vmem:[%s212 + $0xd30] sm:$0xff] %v2196
        %3733 = vst [vmem:[%s212 + $0xd38] sm:$0xff] %v2197
        %3734 = vst [vmem:[%s212 + $0xd40] sm:$0xff] %v2198
        %3735 = vst [vmem:[%s212 + $0xd48] sm:$0xff] %v2199
        %3736 = vst [vmem:[%s212 + $0xd50] sm:$0xff] %v2200
        %3737 = vst [vmem:[%s212 + $0xd58] sm:$0xff] %v2201
        %3738 = vst [vmem:[%s212 + $0xd60] sm:$0xff] %v2202
        %3739 = vst [vmem:[%s212 + $0xd68] sm:$0xff] %v2203
        %3740 = vst [vmem:[%s212 + $0xd70] sm:$0xff] %v2204
        %3741 = vst [vmem:[%s212 + $0xd78] sm:$0xff] %v2205
        %3742 = vst [vmem:[%s212 + $0xd80] sm:$0xff] %v2206
        %3743 = vst [vmem:[%s212 + $0xd88] sm:$0xff] %v2207
        %3744 = vst [vmem:[%s212 + $0xd90] sm:$0xff] %v2208
        %3745 = vst [vmem:[%s212 + $0xd98] sm:$0xff] %v2209
        %3746 = vst [vmem:[%s212 + $0xda0] sm:$0xff] %v2210
        %3747 = vst [vmem:[%s212 + $0xda8] sm:$0xff] %v2211
        %3748 = vst [vmem:[%s212 + $0xdb0] sm:$0xff] %v2212
        %3749 = vst [vmem:[%s212 + $0xdb8] sm:$0xff] %v2213
        %3750 = vst [vmem:[%s212 + $0xdc0] sm:$0xff] %v2214
        %3751 = vst [vmem:[%s212 + $0xdc8] sm:$0xff] %v2215
        %3752 = vst [vmem:[%s212 + $0xdd0] sm:$0xff] %v2216
        %3753 = vst [vmem:[%s212 + $0xdd8] sm:$0xff] %v2217
        %3754 = vst [vmem:[%s212 + $0xde0] sm:$0xff] %v2218
        %3755 = vst [vmem:[%s212 + $0xde8] sm:$0xff] %v2219
        %3756 = vst [vmem:[%s212 + $0xdf0] sm:$0xff] %v2220
        %3757 = vst [vmem:[%s212 + $0xdf8] sm:$0xff] %v2221
        %3758 = vst [vmem:[%s212 + $0xe00] sm:$0xff] %v2222
        %3759 = vst [vmem:[%s212 + $0xe08] sm:$0xff] %v2223
        %3760 = vst [vmem:[%s212 + $0xe10] sm:$0xff] %v2224
        %3761 = vst [vmem:[%s212 + $0xe18] sm:$0xff] %v2225
        %3762 = vst [vmem:[%s212 + $0xe20] sm:$0xff] %v2226
        %3763 = vst [vmem:[%s212 + $0xe28] sm:$0xff] %v2227
        %3764 = vst [vmem:[%s212 + $0xe30] sm:$0xff] %v2228
        %3765 = vst [vmem:[%s212 + $0xe38] sm:$0xff] %v2229
        %3766 = vst [vmem:[%s212 + $0xe40] sm:$0xff] %v2230
        %3767 = vst [vmem:[%s212 + $0xe48] sm:$0xff] %v2231
        %3768 = vst [vmem:[%s212 + $0xe50] sm:$0xff] %v2232
        %3769 = vst [vmem:[%s212 + $0xe58] sm:$0xff] %v2233
        %3770 = vst [vmem:[%s212 + $0xe60] sm:$0xff] %v2234
        %3771 = vst [vmem:[%s212 + $0xe68] sm:$0xff] %v2235
        %3772 = vst [vmem:[%s212 + $0xe70] sm:$0xff] %v2236
        %3773 = vst [vmem:[%s212 + $0xe78] sm:$0xff] %v2237
        %3774 = vst [vmem:[%s212 + $0xe80] sm:$0xff] %v2238
        %3775 = vst [vmem:[%s212 + $0xe88] sm:$0xff] %v2239
        %3776 = vst [vmem:[%s212 + $0xe90] sm:$0xff] %v2240
        %3777 = vst [vmem:[%s212 + $0xe98] sm:$0xff] %v2241
        %3778 = vst [vmem:[%s212 + $0xea0] sm:$0xff] %v2242
        %3779 = vst [vmem:[%s212 + $0xea8] sm:$0xff] %v2243
        %3780 = vst [vmem:[%s212 + $0xeb0] sm:$0xff] %v2244
        %3781 = vst [vmem:[%s212 + $0xeb8] sm:$0xff] %v2245
        %3782 = vst [vmem:[%s212 + $0xec0] sm:$0xff] %v2246
        %3783 = vst [vmem:[%s212 + $0xec8] sm:$0xff] %v2247
        %3784 = vst [vmem:[%s212 + $0xed0] sm:$0xff] %v2248
        %3785 = vst [vmem:[%s212 + $0xed8] sm:$0xff] %v2249
        %3786 = vst [vmem:[%s212 + $0xee0] sm:$0xff] %v2250
        %3787 = vst [vmem:[%s212 + $0xee8] sm:$0xff] %v2251
        %3788 = vst [vmem:[%s212 + $0xef0] sm:$0xff] %v2252
        %3789 = vst [vmem:[%s212 + $0xef8] sm:$0xff] %v2253
        %3790 = vst [vmem:[%s212 + $0xf00] sm:$0xff] %v2254
        %3791 = vst [vmem:[%s212 + $0xf08] sm:$0xff] %v2255
        %3792 = vst [vmem:[%s212 + $0xf10] sm:$0xff] %v2256
        %3793 = vst [vmem:[%s212 + $0xf18] sm:$0xff] %v2257
        %3794 = vst [vmem:[%s212 + $0xf20] sm:$0xff] %v2258
        %3795 = vst [vmem:[%s212 + $0xf28] sm:$0xff] %v2259
        %3796 = vst [vmem:[%s212 + $0xf30] sm:$0xff] %v2260
        %3797 = vst [vmem:[%s212 + $0xf38] sm:$0xff] %v2261
        %3798 = vst [vmem:[%s212 + $0xf40] sm:$0xff] %v2262
        %3799 = vst [vmem:[%s212 + $0xf48] sm:$0xff] %v2263
        %3800 = vst [vmem:[%s212 + $0xf50] sm:$0xff] %v2264
        %3801 = vst [vmem:[%s212 + $0xf58] sm:$0xff] %v2265
        %3802 = vst [vmem:[%s212 + $0xf60] sm:$0xff] %v2266
        %3803 = vst [vmem:[%s212 + $0xf68] sm:$0xff] %v2267
        %3804 = vst [vmem:[%s212 + $0xf70] sm:$0xff] %v2268
        %3805 = vst [vmem:[%s212 + $0xf78] sm:$0xff] %v2269
        %3806 = vst [vmem:[%s212 + $0xf80] sm:$0xff] %v2270
        %3807 = vst [vmem:[%s212 + $0xf88] sm:$0xff] %v2271
        %3808 = vst [vmem:[%s212 + $0xf90] sm:$0xff] %v2272
        %3809 = vst [vmem:[%s212 + $0xf98] sm:$0xff] %v2273
        %3810 = vst [vmem:[%s212 + $0xfa0] sm:$0xff] %v2274
        %3811 = vst [vmem:[%s212 + $0xfa8] sm:$0xff] %v2275
        %3812 = vst [vmem:[%s212 + $0xfb0] sm:$0xff] %v2276
        %3813 = vst [vmem:[%s212 + $0xfb8] sm:$0xff] %v2277
        %3814 = vst [vmem:[%s212 + $0xfc0] sm:$0xff] %v2278
        %3815 = vst [vmem:[%s212 + $0xfc8] sm:$0xff] %v2279
        %3816 = vst [vmem:[%s212 + $0xfd0] sm:$0xff] %v2280
        %3817 = vst [vmem:[%s212 + $0xfd8] sm:$0xff] %v2281
        %3818 = vst [vmem:[%s212 + $0xfe0] sm:$0xff] %v2282
        %3819 = vst [vmem:[%s212 + $0xfe8] sm:$0xff] %v2283
        %3820 = vst [vmem:[%s212 + $0xff0] sm:$0xff] %v2284
        %3821 = vst [vmem:[%s212 + $0xff8] sm:$0xff] %v2285
        %3822 = vst [vmem:[%s212 + $0x1000] sm:$0xff] %v2286
        %3823 = vst [vmem:[%s212 + $0x1008] sm:$0xff] %v2287
        %3824 = vst [vmem:[%s212 + $0x1010] sm:$0xff] %v2288
        %3825 = vst [vmem:[%s212 + $0x1018] sm:$0xff] %v2289
        %3826 = vst [vmem:[%s212 + $0x1020] sm:$0xff] %v2290
        %3827 = vst [vmem:[%s212 + $0x1028] sm:$0xff] %v2291
        %3828 = vst [vmem:[%s212 + $0x1030] sm:$0xff] %v2292
        %3829 = vst [vmem:[%s212 + $0x1038] sm:$0xff] %v2293
        %3830 = vst [vmem:[%s212 + $0x1040] sm:$0xff] %v2294
        %3831 = vst [vmem:[%s212 + $0x1048] sm:$0xff] %v2295
        %3832 = vst [vmem:[%s212 + $0x1050] sm:$0xff] %v2296
        %3833 = vst [vmem:[%s212 + $0x1058] sm:$0xff] %v2297
        %3834 = vst [vmem:[%s212 + $0x1060] sm:$0xff] %v2298
        %3835 = vst [vmem:[%s212 + $0x1068] sm:$0xff] %v2299
        %3836 = vst [vmem:[%s212 + $0x1070] sm:$0xff] %v2300
        %3837 = vst [vmem:[%s212 + $0x1078] sm:$0xff] %v2301
        %3838 = vst [vmem:[%s212 + $0x1080] sm:$0xff] %v2302
        %3839 = vst [vmem:[%s212 + $0x1088] sm:$0xff] %v2303
        %3840 = vst [vmem:[%s212 + $0x1090] sm:$0xff] %v2304
        %3841 = vst [vmem:[%s212 + $0x1098] sm:$0xff] %v2305
        %3842 = vst [vmem:[%s212 + $0x10a0] sm:$0xff] %v2306
        %3843 = vst [vmem:[%s212 + $0x10a8] sm:$0xff] %v2307
        %3844 = vst [vmem:[%s212 + $0x10b0] sm:$0xff] %v2308
        %3845 = vst [vmem:[%s212 + $0x10b8] sm:$0xff] %v2309
        %3846 = vst [vmem:[%s212 + $0x10c0] sm:$0xff] %v2310
        %3847 = vst [vmem:[%s212 + $0x10c8] sm:$0xff] %v2311
        %3848 = vst [vmem:[%s212 + $0x10d0] sm:$0xff] %v2312
        %3849 = vst [vmem:[%s212 + $0x10d8] sm:$0xff] %v2313
        %3850 = vst [vmem:[%s212 + $0x10e0] sm:$0xff] %v2314
        %3851 = vst [vmem:[%s212 + $0x10e8] sm:$0xff] %v2315
        %3852 = vst [vmem:[%s212 + $0x10f0] sm:$0xff] %v2316
        %3853 = vst [vmem:[%s212 + $0x10f8] sm:$0xff] %v2317
        %3854 = vst [vmem:[%s212 + $0x1100] sm:$0xff] %v2318
        %3855 = vst [vmem:[%s212 + $0x1108] sm:$0xff] %v2319
        %3856 = vst [vmem:[%s212 + $0x1110] sm:$0xff] %v2320
        %3857 = vst [vmem:[%s212 + $0x1118] sm:$0xff] %v2321
        %3858 = vst [vmem:[%s212 + $0x1120] sm:$0xff] %v2322
        %3859 = vst [vmem:[%s212 + $0x1128] sm:$0xff] %v2323
        %3860 = vst [vmem:[%s212 + $0x1130] sm:$0xff] %v2324
        %3861 = vst [vmem:[%s212 + $0x1138] sm:$0xff] %v2325
        %3862 = vst [vmem:[%s212 + $0x1140] sm:$0xff] %v2326
        %3863 = vst [vmem:[%s212 + $0x1148] sm:$0xff] %v2327
        %3864 = vst [vmem:[%s212 + $0x1150] sm:$0xff] %v2328
        %3865 = vst [vmem:[%s212 + $0x1158] sm:$0xff] %v2329
        %3866 = vst [vmem:[%s212 + $0x1160] sm:$0xff] %v2330
        %3867 = vst [vmem:[%s212 + $0x1168] sm:$0xff] %v2331
        %3868 = vst [vmem:[%s212 + $0x1170] sm:$0xff] %v2332
        %3869 = vst [vmem:[%s212 + $0x1178] sm:$0xff] %v2333
        %3870 = vst [vmem:[%s212 + $0x1180] sm:$0xff] %v2334
        %3871 = vst [vmem:[%s212 + $0x1188] sm:$0xff] %v2335
        %3872 = vst [vmem:[%s212 + $0x1190] sm:$0xff] %v2336
        %3873 = vst [vmem:[%s212 + $0x1198] sm:$0xff] %v2337
        %3874 = vst [vmem:[%s212 + $0x11a0] sm:$0xff] %v2338
        %3875 = vst [vmem:[%s212 + $0x11a8] sm:$0xff] %v2339
        %3876 = vst [vmem:[%s212 + $0x11b0] sm:$0xff] %v2340
        %3877 = vst [vmem:[%s212 + $0x11b8] sm:$0xff] %v2341
        %3878 = vst [vmem:[%s212 + $0x11c0] sm:$0xff] %v2342
        %3879 = vst [vmem:[%s212 + $0x11c8] sm:$0xff] %v2343
        %3880 = vst [vmem:[%s212 + $0x11d0] sm:$0xff] %v2344
        %3881 = vst [vmem:[%s212 + $0x11d8] sm:$0xff] %v2345
        %3882 = vst [vmem:[%s212 + $0x11e0] sm:$0xff] %v2346
        %3883 = vst [vmem:[%s212 + $0x11e8] sm:$0xff] %v2347
        %3884 = vst [vmem:[%s212 + $0x11f0] sm:$0xff] %v2348
        %3885 = vst [vmem:[%s212 + $0x11f8] sm:$0xff] %v2349
        %3886 = vst [vmem:[%s212 + $0x1200] sm:$0xff] %v2350
        %3887 = vst [vmem:[%s212 + $0x1208] sm:$0xff] %v2351
        %3888 = vst [vmem:[%s212 + $0x1210] sm:$0xff] %v2352
        %3889 = vst [vmem:[%s212 + $0x1218] sm:$0xff] %v2353
        %3890 = vst [vmem:[%s212 + $0x1220] sm:$0xff] %v2354
        %3891 = vst [vmem:[%s212 + $0x1228] sm:$0xff] %v2355
        %3892 = vst [vmem:[%s212 + $0x1230] sm:$0xff] %v2356
        %3893 = vst [vmem:[%s212 + $0x1238] sm:$0xff] %v2357
        %3894 = vst [vmem:[%s212 + $0x1240] sm:$0xff] %v2358
        %3895 = vst [vmem:[%s212 + $0x1248] sm:$0xff] %v2359
        %3896 = vst [vmem:[%s212 + $0x1250] sm:$0xff] %v2360
        %3897 = vst [vmem:[%s212 + $0x1258] sm:$0xff] %v2361
        %3898 = vst [vmem:[%s212 + $0x1260] sm:$0xff] %v2362
        %3899 = vst [vmem:[%s212 + $0x1268] sm:$0xff] %v2363
        %3900 = vst [vmem:[%s212 + $0x1270] sm:$0xff] %v2364
        %3901 = vst [vmem:[%s212 + $0x1278] sm:$0xff] %v2365
        %3902 = vst [vmem:[%s212 + $0x1280] sm:$0xff] %v2366
        %3903 = vst [vmem:[%s212 + $0x1288] sm:$0xff] %v2367
        %3904 = vst [vmem:[%s212 + $0x1290] sm:$0xff] %v2368
        %3905 = vst [vmem:[%s212 + $0x1298] sm:$0xff] %v2369
        %3906 = vst [vmem:[%s212 + $0x12a0] sm:$0xff] %v2370
        %3907 = vst [vmem:[%s212 + $0x12a8] sm:$0xff] %v2371
        %3908 = vst [vmem:[%s212 + $0x12b0] sm:$0xff] %v2372
        %3909 = vst [vmem:[%s212 + $0x12b8] sm:$0xff] %v2373
        %3910 = vst [vmem:[%s212 + $0x12c0] sm:$0xff] %v2374
        %3911 = vst [vmem:[%s212 + $0x12c8] sm:$0xff] %v2375
        %3912 = vst [vmem:[%s212 + $0x12d0] sm:$0xff] %v2376
        %3913 = vst [vmem:[%s212 + $0x12d8] sm:$0xff] %v2377
        %3914 = vst [vmem:[%s212 + $0x12e0] sm:$0xff] %v2378
        %3915 = vst [vmem:[%s212 + $0x12e8] sm:$0xff] %v2379
        %3916 = vst [vmem:[%s212 + $0x12f0] sm:$0xff] %v2380
        %3917 = vst [vmem:[%s212 + $0x12f8] sm:$0xff] %v2381
        %3918 = vst [vmem:[%s212 + $0x1300] sm:$0xff] %v2382
        %3919 = vst [vmem:[%s212 + $0x1308] sm:$0xff] %v2383
        %3920 = vst [vmem:[%s212 + $0x1310] sm:$0xff] %v2384
        %3921 = vst [vmem:[%s212 + $0x1318] sm:$0xff] %v2385
        %3922 = vst [vmem:[%s212 + $0x1320] sm:$0xff] %v2386
        %3923 = vst [vmem:[%s212 + $0x1328] sm:$0xff] %v2387
        %3924 = vst [vmem:[%s212 + $0x1330] sm:$0xff] %v2388
        %3925 = vst [vmem:[%s212 + $0x1338] sm:$0xff] %v2389
        %3926 = vst [vmem:[%s212 + $0x1340] sm:$0xff] %v2390
        %3927 = vst [vmem:[%s212 + $0x1348] sm:$0xff] %v2391
        %3928 = vst [vmem:[%s212 + $0x1350] sm:$0xff] %v2392
        %3929 = vst [vmem:[%s212 + $0x1358] sm:$0xff] %v2393
        %3930 = vst [vmem:[%s212 + $0x1360] sm:$0xff] %v2394
        %3931 = vst [vmem:[%s212 + $0x1368] sm:$0xff] %v2395
        %3932 = vst [vmem:[%s212 + $0x1370] sm:$0xff] %v2396
        %3933 = vst [vmem:[%s212 + $0x1378] sm:$0xff] %v2397
        %3934 = vst [vmem:[%s212 + $0x1380] sm:$0xff] %v2398
        %3935 = vst [vmem:[%s212 + $0x1388] sm:$0xff] %v2399
        %3936 = vst [vmem:[%s212 + $0x1390] sm:$0xff] %v2400
        %3937 = vst [vmem:[%s212 + $0x1398] sm:$0xff] %v2401
        %3938 = vst [vmem:[%s212 + $0x13a0] sm:$0xff] %v2402
        %3939 = vst [vmem:[%s212 + $0x13a8] sm:$0xff] %v2403
        %3940 = vst [vmem:[%s212 + $0x13b0] sm:$0xff] %v2404
        %3941 = vst [vmem:[%s212 + $0x13b8] sm:$0xff] %v2405
        %3942 = vst [vmem:[%s212 + $0x13c0] sm:$0xff] %v2406
        %3943 = vst [vmem:[%s212 + $0x13c8] sm:$0xff] %v2407
        %3944 = vst [vmem:[%s212 + $0x13d0] sm:$0xff] %v2408
        %3945 = vst [vmem:[%s212 + $0x13d8] sm:$0xff] %v2409
        %3946 = vst [vmem:[%s212 + $0x13e0] sm:$0xff] %v2410
        %3947 = vst [vmem:[%s212 + $0x13e8] sm:$0xff] %v2411
        %3948 = vst [vmem:[%s212 + $0x13f0] sm:$0xff] %v2412
        %3949 = vst [vmem:[%s212 + $0x13f8] sm:$0xff] %v2413
        %3950 = vst [vmem:[%s212 + $0x1400] sm:$0xff] %v2414
        %3951 = vst [vmem:[%s212 + $0x1408] sm:$0xff] %v2415
        %3952 = vst [vmem:[%s212 + $0x1410] sm:$0xff] %v2416
        %3953 = vst [vmem:[%s212 + $0x1418] sm:$0xff] %v2417
        %3954 = vst [vmem:[%s212 + $0x1420] sm:$0xff] %v2418
        %3955 = vst [vmem:[%s212 + $0x1428] sm:$0xff] %v2419
        %3956 = vst [vmem:[%s212 + $0x1430] sm:$0xff] %v2420
        %3957 = vst [vmem:[%s212 + $0x1438] sm:$0xff] %v2421
        %3958 = vst [vmem:[%s212 + $0x1440] sm:$0xff] %v2422
        %3959 = vst [vmem:[%s212 + $0x1448] sm:$0xff] %v2423
        %3960 = vst [vmem:[%s212 + $0x1450] sm:$0xff] %v2424
        %3961 = vst [vmem:[%s212 + $0x1458] sm:$0xff] %v2425
        %3962 = vst [vmem:[%s212 + $0x1460] sm:$0xff] %v2426
        %3963 = vst [vmem:[%s212 + $0x1468] sm:$0xff] %v2427
        %3964 = vst [vmem:[%s212 + $0x1470] sm:$0xff] %v2428
        %3965 = vst [vmem:[%s212 + $0x1478] sm:$0xff] %v2429
        %3966 = vst [vmem:[%s212 + $0x1480] sm:$0xff] %v2430
        %3967 = vst [vmem:[%s212 + $0x1488] sm:$0xff] %v2431
        %3968 = vst [vmem:[%s212 + $0x1490] sm:$0xff] %v2432
        %3969 = vst [vmem:[%s212 + $0x1498] sm:$0xff] %v2433
        %3970 = vst [vmem:[%s212 + $0x14a0] sm:$0xff] %v2434
        %3971 = vst [vmem:[%s212 + $0x14a8] sm:$0xff] %v2435
        %3972 = vst [vmem:[%s212 + $0x14b0] sm:$0xff] %v2436
        %3973 = vst [vmem:[%s212 + $0x14b8] sm:$0xff] %v2437
        %3974 = vst [vmem:[%s212 + $0x14c0] sm:$0xff] %v2438
        %3975 = vst [vmem:[%s212 + $0x14c8] sm:$0xff] %v2439
        %3976 = vst [vmem:[%s212 + $0x14d0] sm:$0xff] %v2440
        %3977 = vst [vmem:[%s212 + $0x14d8] sm:$0xff] %v2441
        %3978 = vst [vmem:[%s212 + $0x14e0] sm:$0xff] %v2442
        %3979 = vst [vmem:[%s212 + $0x14e8] sm:$0xff] %v2443
        %3980 = vst [vmem:[%s212 + $0x14f0] sm:$0xff] %v2444
        %3981 = vst [vmem:[%s212 + $0x14f8] sm:$0xff] %v2445
        %3982 = vst [vmem:[%s212 + $0x1500] sm:$0xff] %v2446
        %3983 = vst [vmem:[%s212 + $0x1508] sm:$0xff] %v2447
        %3984 = vst [vmem:[%s212 + $0x1510] sm:$0xff] %v2448
        %3985 = vst [vmem:[%s212 + $0x1518] sm:$0xff] %v2449
        %3986 = vst [vmem:[%s212 + $0x1520] sm:$0xff] %v2450
        %3987 = vst [vmem:[%s212 + $0x1528] sm:$0xff] %v2451
        %3988 = vst [vmem:[%s212 + $0x1530] sm:$0xff] %v2452
        %3989 = vst [vmem:[%s212 + $0x1538] sm:$0xff] %v2453
        %3990 = vst [vmem:[%s212 + $0x1540] sm:$0xff] %v2454
        %3991 = vst [vmem:[%s212 + $0x1548] sm:$0xff] %v2455
        %3992 = vst [vmem:[%s212 + $0x1550] sm:$0xff] %v2456
        %3993 = vst [vmem:[%s212 + $0x1558] sm:$0xff] %v2457
        %3994 = vst [vmem:[%s212 + $0x1560] sm:$0xff] %v2458
        %3995 = vst [vmem:[%s212 + $0x1568] sm:$0xff] %v2459
        %3996 = vst [vmem:[%s212 + $0x1570] sm:$0xff] %v2460
        %3997 = vst [vmem:[%s212 + $0x1578] sm:$0xff] %v2461
        %3998 = vst [vmem:[%s212 + $0x1580] sm:$0xff] %v2462
        %3999 = vst [vmem:[%s212 + $0x1588] sm:$0xff] %v2463
        %4000 = vst [vmem:[%s212 + $0x1590] sm:$0xff] %v2464
        %4001 = vst [vmem:[%s212 + $0x1598] sm:$0xff] %v2465
        %4002 = vst [vmem:[%s212 + $0x15a0] sm:$0xff] %v2466
        %4003 = vst [vmem:[%s212 + $0x15a8] sm:$0xff] %v2467
        %4004 = vst [vmem:[%s212 + $0x15b0] sm:$0xff] %v2468
        %4005 = vst [vmem:[%s212 + $0x15b8] sm:$0xff] %v2469
        %4006 = vst [vmem:[%s212 + $0x15c0] sm:$0xff] %v2470
        %4007 = vst [vmem:[%s212 + $0x15c8] sm:$0xff] %v2471
        %4008 = vst [vmem:[%s212 + $0x15d0] sm:$0xff] %v2472
        %4009 = vst [vmem:[%s212 + $0x15d8] sm:$0xff] %v2473
        %4010 = vst [vmem:[%s212 + $0x15e0] sm:$0xff] %v2474
        %4011 = vst [vmem:[%s212 + $0x15e8] sm:$0xff] %v2475
        %4012 = vst [vmem:[%s212 + $0x15f0] sm:$0xff] %v2476
        %4013 = vst [vmem:[%s212 + $0x15f8] sm:$0xff] %v2477
        %4014 = vst [vmem:[%s212 + $0x1600] sm:$0xff] %v2478
        %4015 = vst [vmem:[%s212 + $0x1608] sm:$0xff] %v2479
        %4016 = vst [vmem:[%s212 + $0x1610] sm:$0xff] %v2480
        %4017 = vst [vmem:[%s212 + $0x1618] sm:$0xff] %v2481
        %4018 = vst [vmem:[%s212 + $0x1620] sm:$0xff] %v2482
        %4019 = vst [vmem:[%s212 + $0x1628] sm:$0xff] %v2483
        %4020 = vst [vmem:[%s212 + $0x1630] sm:$0xff] %v2484
        %4021 = vst [vmem:[%s212 + $0x1638] sm:$0xff] %v2485
        %4022 = vst [vmem:[%s212 + $0x1640] sm:$0xff] %v2486
        %4023 = vst [vmem:[%s212 + $0x1648] sm:$0xff] %v2487
        %4024 = vst [vmem:[%s212 + $0x1650] sm:$0xff] %v2488
        %4025 = vst [vmem:[%s212 + $0x1658] sm:$0xff] %v2489
        %4026 = vst [vmem:[%s212 + $0x1660] sm:$0xff] %v2490
        %4027 = vst [vmem:[%s212 + $0x1668] sm:$0xff] %v2491
        %4028 = vst [vmem:[%s212 + $0x1670] sm:$0xff] %v2492
        %4029 = vst [vmem:[%s212 + $0x1678] sm:$0xff] %v2493
        %4030 = vst [vmem:[%s212 + $0x1680] sm:$0xff] %v2494
        %4031 = vst [vmem:[%s212 + $0x1688] sm:$0xff] %v2495
        %4032 = vst [vmem:[%s212 + $0x1690] sm:$0xff] %v2496
        %4033 = vst [vmem:[%s212 + $0x1698] sm:$0xff] %v2497
        %4034 = vst [vmem:[%s212 + $0x16a0] sm:$0xff] %v2498
        %4035 = vst [vmem:[%s212 + $0x16a8] sm:$0xff] %v2499
        %4036 = vst [vmem:[%s212 + $0x16b0] sm:$0xff] %v2500
        %4037 = vst [vmem:[%s212 + $0x16b8] sm:$0xff] %v2501
        %4038 = vst [vmem:[%s212 + $0x16c0] sm:$0xff] %v2502
        %4039 = vst [vmem:[%s212 + $0x16c8] sm:$0xff] %v2503
        %4040 = vst [vmem:[%s212 + $0x16d0] sm:$0xff] %v2504
        %4041 = vst [vmem:[%s212 + $0x16d8] sm:$0xff] %v2505
        %4042 = vst [vmem:[%s212 + $0x16e0] sm:$0xff] %v2506
        %4043 = vst [vmem:[%s212 + $0x16e8] sm:$0xff] %v2507
        %4044 = vst [vmem:[%s212 + $0x16f0] sm:$0xff] %v2508
        %4045 = vst [vmem:[%s212 + $0x16f8] sm:$0xff] %v2509
        %4046 = vst [vmem:[%s212 + $0x1700] sm:$0xff] %v2510
        %4047 = vst [vmem:[%s212 + $0x1708] sm:$0xff] %v2511
        %4048 = vst [vmem:[%s212 + $0x1710] sm:$0xff] %v2512
        %4049 = vst [vmem:[%s212 + $0x1718] sm:$0xff] %v2513
        %4050 = vst [vmem:[%s212 + $0x1720] sm:$0xff] %v2514
        %4051 = vst [vmem:[%s212 + $0x1728] sm:$0xff] %v2515
        %4052 = vst [vmem:[%s212 + $0x1730] sm:$0xff] %v2516
        %4053 = vst [vmem:[%s212 + $0x1738] sm:$0xff] %v2517
        %4054 = vst [vmem:[%s212 + $0x1740] sm:$0xff] %v2518
        %4055 = vst [vmem:[%s212 + $0x1748] sm:$0xff] %v2519
        %4056 = vst [vmem:[%s212 + $0x1750] sm:$0xff] %v2520
        %4057 = vst [vmem:[%s212 + $0x1758] sm:$0xff] %v2521
        %4058 = vst [vmem:[%s212 + $0x1760] sm:$0xff] %v2522
        %4059 = vst [vmem:[%s212 + $0x1768] sm:$0xff] %v2523
        %4060 = vst [vmem:[%s212 + $0x1770] sm:$0xff] %v2524
        %4061 = vst [vmem:[%s212 + $0x1778] sm:$0xff] %v2525
        %4062 = vst [vmem:[%s212 + $0x1780] sm:$0xff] %v2526
        %4063 = vst [vmem:[%s212 + $0x1788] sm:$0xff] %v2527
        %4064 = vst [vmem:[%s212 + $0x1790] sm:$0xff] %v2528
        %4065 = vst [vmem:[%s212 + $0x1798] sm:$0xff] %v2529
        %4066 = vst [vmem:[%s212 + $0x17a0] sm:$0xff] %v2530
        %4067 = vst [vmem:[%s212 + $0x17a8] sm:$0xff] %v2531
        %4068 = vst [vmem:[%s212 + $0x17b0] sm:$0xff] %v2532
        %4069 = vst [vmem:[%s212 + $0x17b8] sm:$0xff] %v2533
        %4070 = vst [vmem:[%s212 + $0x17c0] sm:$0xff] %v2534
        %4071 = vst [vmem:[%s212 + $0x17c8] sm:$0xff] %v2535
        %4072 = vst [vmem:[%s212 + $0x17d0] sm:$0xff] %v2536
        %4073 = vst [vmem:[%s212 + $0x17d8] sm:$0xff] %v2537
        %4074 = vst [vmem:[%s212 + $0x17e0] sm:$0xff] %v2538
        %4075 = vst [vmem:[%s212 + $0x17e8] sm:$0xff] %v2539
        %4076 = vst [vmem:[%s212 + $0x17f0] sm:$0xff] %v2540
        %4077 = vst [vmem:[%s212 + $0x17f8] sm:$0xff] %v2541
        %4078 = vst [vmem:[%s212 + $0x1800] sm:$0xff] %v2542
        %4079 = vst [vmem:[%s212 + $0x1808] sm:$0xff] %v2543
        %4080 = vst [vmem:[%s212 + $0x1810] sm:$0xff] %v2544
        %4081 = vst [vmem:[%s212 + $0x1818] sm:$0xff] %v2545
        %4082 = vst [vmem:[%s212 + $0x1820] sm:$0xff] %v2546
        %4083 = vst [vmem:[%s212 + $0x1828] sm:$0xff] %v2547
        %4084 = vst [vmem:[%s212 + $0x1830] sm:$0xff] %v2548
        %4085 = vst [vmem:[%s212 + $0x1838] sm:$0xff] %v2549
        %4086 = vst [vmem:[%s212 + $0x1840] sm:$0xff] %v2550
        %4087 = vst [vmem:[%s212 + $0x1848] sm:$0xff] %v2551
        %4088 = vst [vmem:[%s212 + $0x1850] sm:$0xff] %v2552
        %4089 = vst [vmem:[%s212 + $0x1858] sm:$0xff] %v2553
        %4090 = vst [vmem:[%s212 + $0x1860] sm:$0xff] %v2554
        %4091 = vst [vmem:[%s212 + $0x1868] sm:$0xff] %v2555
        %4092 = vst [vmem:[%s212 + $0x1870] sm:$0xff] %v2556
        %4093 = vst [vmem:[%s212 + $0x1878] sm:$0xff] %v2557
        %4094 = vst [vmem:[%s212 + $0x1880] sm:$0xff] %v2558
        %4095 = vst [vmem:[%s212 + $0x1888] sm:$0xff] %v2559
        %4096 = vst [vmem:[%s212 + $0x1890] sm:$0xff] %v2560
        %4097 = vst [vmem:[%s212 + $0x1898] sm:$0xff] %v2561
        %4098 = vst [vmem:[%s212 + $0x18a0] sm:$0xff] %v2562
        %4099 = vst [vmem:[%s212 + $0x18a8] sm:$0xff] %v2563
        %4100 = vst [vmem:[%s212 + $0x18b0] sm:$0xff] %v2564
        %4101 = vst [vmem:[%s212 + $0x18b8] sm:$0xff] %v2565
        %4102 = vst [vmem:[%s212 + $0x18c0] sm:$0xff] %v2566
        %4103 = vst [vmem:[%s212 + $0x18c8] sm:$0xff] %v2567
        %4104 = vst [vmem:[%s212 + $0x18d0] sm:$0xff] %v2568
        %4105 = vst [vmem:[%s212 + $0x18d8] sm:$0xff] %v2569
        %4106 = vst [vmem:[%s212 + $0x18e0] sm:$0xff] %v2570
        %4107 = vst [vmem:[%s212 + $0x18e8] sm:$0xff] %v2571
        %4108 = vst [vmem:[%s212 + $0x18f0] sm:$0xff] %v2572
        %4109 = vst [vmem:[%s212 + $0x18f8] sm:$0xff] %v2573
        %4110 = vst [vmem:[%s212 + $0x1900] sm:$0xff] %v2574
        %4111 = vst [vmem:[%s212 + $0x1908] sm:$0xff] %v2575
        %4112 = vst [vmem:[%s212 + $0x1910] sm:$0xff] %v2576
        %4113 = vst [vmem:[%s212 + $0x1918] sm:$0xff] %v2577
        %4114 = vst [vmem:[%s212 + $0x1920] sm:$0xff] %v2578
        %4115 = vst [vmem:[%s212 + $0x1928] sm:$0xff] %v2579
        %4116 = vst [vmem:[%s212 + $0x1930] sm:$0xff] %v2580
        %4117 = vst [vmem:[%s212 + $0x1938] sm:$0xff] %v2581
        %4118 = vst [vmem:[%s212 + $0x1940] sm:$0xff] %v2582
        %4119 = vst [vmem:[%s212 + $0x1948] sm:$0xff] %v2583
        %4120 = vst [vmem:[%s212 + $0x1950] sm:$0xff] %v2584
        %4121 = vst [vmem:[%s212 + $0x1958] sm:$0xff] %v2585
        %4122 = vst [vmem:[%s212 + $0x1960] sm:$0xff] %v2586
        %4123 = vst [vmem:[%s212 + $0x1968] sm:$0xff] %v2587
        %4124 = vst [vmem:[%s212 + $0x1970] sm:$0xff] %v2588
        %4125 = vst [vmem:[%s212 + $0x1978] sm:$0xff] %v2589
        %4126 = vst [vmem:[%s212 + $0x1980] sm:$0xff] %v2590
        %4127 = vst [vmem:[%s212 + $0x1988] sm:$0xff] %v2591
        %4128 = vst [vmem:[%s212 + $0x1990] sm:$0xff] %v2592
        %4129 = vst [vmem:[%s212 + $0x1998] sm:$0xff] %v2593
        %4130 = vst [vmem:[%s212 + $0x19a0] sm:$0xff] %v2594
        %4131 = vst [vmem:[%s212 + $0x19a8] sm:$0xff] %v2595
        %4132 = vst [vmem:[%s212 + $0x19b0] sm:$0xff] %v2596
        %4133 = vst [vmem:[%s212 + $0x19b8] sm:$0xff] %v2597
        %4134 = vst [vmem:[%s212 + $0x19c0] sm:$0xff] %v2598
        %4135 = vst [vmem:[%s212 + $0x19c8] sm:$0xff] %v2599
        %4136 = vst [vmem:[%s212 + $0x19d0] sm:$0xff] %v2600
        %4137 = vst [vmem:[%s212 + $0x19d8] sm:$0xff] %v2601
        %4138 = vst [vmem:[%s212 + $0x19e0] sm:$0xff] %v2602
        %4139 = vst [vmem:[%s212 + $0x19e8] sm:$0xff] %v2603
        %4140 = vst [vmem:[%s212 + $0x19f0] sm:$0xff] %v2604
        %4141 = vst [vmem:[%s212 + $0x19f8] sm:$0xff] %v2605
        %4142 = vst [vmem:[%s212 + $0x1a00] sm:$0xff] %v2606
        %4143 = vst [vmem:[%s212 + $0x1a08] sm:$0xff] %v2607
        %4144 = vst [vmem:[%s212 + $0x1a10] sm:$0xff] %v2608
        %4145 = vst [vmem:[%s212 + $0x1a18] sm:$0xff] %v2609
        %4146 = vst [vmem:[%s212 + $0x1a20] sm:$0xff] %v2610
        %4147 = vst [vmem:[%s212 + $0x1a28] sm:$0xff] %v2611
        %4148 = vst [vmem:[%s212 + $0x1a30] sm:$0xff] %v2612
        %4149 = vst [vmem:[%s212 + $0x1a38] sm:$0xff] %v2613
        %4150 = vst [vmem:[%s212 + $0x1a40] sm:$0xff] %v2614
        %4151 = vst [vmem:[%s212 + $0x1a48] sm:$0xff] %v2615
        %4152 = vst [vmem:[%s212 + $0x1a50] sm:$0xff] %v2616
        %4153 = vst [vmem:[%s212 + $0x1a58] sm:$0xff] %v2617
        %4154 = vst [vmem:[%s212 + $0x1a60] sm:$0xff] %v2618
        %4155 = vst [vmem:[%s212 + $0x1a68] sm:$0xff] %v2619
        %4156 = vst [vmem:[%s212 + $0x1a70] sm:$0xff] %v2620
        %4157 = vst [vmem:[%s212 + $0x1a78] sm:$0xff] %v2621
        %4158 = vst [vmem:[%s212 + $0x1a80] sm:$0xff] %v2622
        %4159 = vst [vmem:[%s212 + $0x1a88] sm:$0xff] %v2623
        %4160 = vst [vmem:[%s212 + $0x1a90] sm:$0xff] %v2624
        %4161 = vst [vmem:[%s212 + $0x1a98] sm:$0xff] %v2625
        %4162 = vst [vmem:[%s212 + $0x1aa0] sm:$0xff] %v2626
        %4163 = vst [vmem:[%s212 + $0x1aa8] sm:$0xff] %v2627
        %4164 = vst [vmem:[%s212 + $0x1ab0] sm:$0xff] %v2628
        %4165 = vst [vmem:[%s212 + $0x1ab8] sm:$0xff] %v2629
        %4166 = vst [vmem:[%s212 + $0x1ac0] sm:$0xff] %v2630
        %4167 = vst [vmem:[%s212 + $0x1ac8] sm:$0xff] %v2631
        %4168 = vst [vmem:[%s212 + $0x1ad0] sm:$0xff] %v2632
        %4169 = vst [vmem:[%s212 + $0x1ad8] sm:$0xff] %v2633
        %4170 = vst [vmem:[%s212 + $0x1ae0] sm:$0xff] %v2634
        %4171 = vst [vmem:[%s212 + $0x1ae8] sm:$0xff] %v2635
        %4172 = vst [vmem:[%s212 + $0x1af0] sm:$0xff] %v2636
        %4173 = vst [vmem:[%s212 + $0x1af8] sm:$0xff] %v2637
        %4174 = vst [vmem:[%s212 + $0x1b00] sm:$0xff] %v2638
        %4175 = vst [vmem:[%s212 + $0x1b08] sm:$0xff] %v2639
        %4176 = vst [vmem:[%s212 + $0x1b10] sm:$0xff] %v2640
        %4177 = vst [vmem:[%s212 + $0x1b18] sm:$0xff] %v2641
        %4178 = vst [vmem:[%s212 + $0x1b20] sm:$0xff] %v2642
        %4179 = vst [vmem:[%s212 + $0x1b28] sm:$0xff] %v2643
        %4180 = vst [vmem:[%s212 + $0x1b30] sm:$0xff] %v2644
        %4181 = vst [vmem:[%s212 + $0x1b38] sm:$0xff] %v2645
        %4182 = vst [vmem:[%s212 + $0x1b40] sm:$0xff] %v2646
        %4183 = vst [vmem:[%s212 + $0x1b48] sm:$0xff] %v2647
        %4184 = vst [vmem:[%s212 + $0x1b50] sm:$0xff] %v2648
        %4185 = vst [vmem:[%s212 + $0x1b58] sm:$0xff] %v2649
        %4186 = vst [vmem:[%s212 + $0x1b60] sm:$0xff] %v2650
        %4187 = vst [vmem:[%s212 + $0x1b68] sm:$0xff] %v2651
        %4188 = vst [vmem:[%s212 + $0x1b70] sm:$0xff] %v2652
        %4189 = vst [vmem:[%s212 + $0x1b78] sm:$0xff] %v2653
        %4190 = vst [vmem:[%s212 + $0x1b80] sm:$0xff] %v2654
        %4191 = vst [vmem:[%s212 + $0x1b88] sm:$0xff] %v2655
        %4192 = vst [vmem:[%s212 + $0x1b90] sm:$0xff] %v2656
        %4193 = vst [vmem:[%s212 + $0x1b98] sm:$0xff] %v2657
        %4194 = vst [vmem:[%s212 + $0x1ba0] sm:$0xff] %v2658
        %4195 = vst [vmem:[%s212 + $0x1ba8] sm:$0xff] %v2659
        %4196 = vst [vmem:[%s212 + $0x1bb0] sm:$0xff] %v2660
        %4197 = vst [vmem:[%s212 + $0x1bb8] sm:$0xff] %v2661
        %4198 = vst [vmem:[%s212 + $0x1bc0] sm:$0xff] %v2662
        %4199 = vst [vmem:[%s212 + $0x1bc8] sm:$0xff] %v2663
        %4200 = vst [vmem:[%s212 + $0x1bd0] sm:$0xff] %v2664
        %4201 = vst [vmem:[%s212 + $0x1bd8] sm:$0xff] %v2665
        %4202 = vst [vmem:[%s212 + $0x1be0] sm:$0xff] %v2666
        %4203 = vst [vmem:[%s212 + $0x1be8] sm:$0xff] %v2667
        %4204 = vst [vmem:[%s212 + $0x1bf0] sm:$0xff] %v2668
        %4205 = vst [vmem:[%s212 + $0x1bf8] sm:$0xff] %v2669
        %4206 = vst [vmem:[%s212 + $0x1c00] sm:$0xff] %v2670
        %4207 = vst [vmem:[%s212 + $0x1c08] sm:$0xff] %v2671
        %4208 = vst [vmem:[%s212 + $0x1c10] sm:$0xff] %v2672
        %4209 = vst [vmem:[%s212 + $0x1c18] sm:$0xff] %v2673
        %4210 = vst [vmem:[%s212 + $0x1c20] sm:$0xff] %v2674
        %4211 = vst [vmem:[%s212 + $0x1c28] sm:$0xff] %v2675
        %4212 = vst [vmem:[%s212 + $0x1c30] sm:$0xff] %v2676
        %4213 = vst [vmem:[%s212 + $0x1c38] sm:$0xff] %v2677
        %4214 = vst [vmem:[%s212 + $0x1c40] sm:$0xff] %v2678
        %4215 = vst [vmem:[%s212 + $0x1c48] sm:$0xff] %v2679
        %4216 = vst [vmem:[%s212 + $0x1c50] sm:$0xff] %v2680
        %4217 = vst [vmem:[%s212 + $0x1c58] sm:$0xff] %v2681
        %4218 = vst [vmem:[%s212 + $0x1c60] sm:$0xff] %v2682
        %4219 = vst [vmem:[%s212 + $0x1c68] sm:$0xff] %v2683
        %4220 = vst [vmem:[%s212 + $0x1c70] sm:$0xff] %v2684
        %4221 = vst [vmem:[%s212 + $0x1c78] sm:$0xff] %v2685
        %4222 = vst [vmem:[%s212 + $0x1c80] sm:$0xff] %v2686
        %4223 = vst [vmem:[%s212 + $0x1c88] sm:$0xff] %v2687
        %4224 = vst [vmem:[%s212 + $0x1c90] sm:$0xff] %v2688
        %4225 = vst [vmem:[%s212 + $0x1c98] sm:$0xff] %v2689
        %4226 = vst [vmem:[%s212 + $0x1ca0] sm:$0xff] %v2690
        %4227 = vst [vmem:[%s212 + $0x1ca8] sm:$0xff] %v2691
        %4228 = vst [vmem:[%s212 + $0x1cb0] sm:$0xff] %v2692
        %4229 = vst [vmem:[%s212 + $0x1cb8] sm:$0xff] %v2693
        %4230 = vst [vmem:[%s212 + $0x1cc0] sm:$0xff] %v2694
        %4231 = vst [vmem:[%s212 + $0x1cc8] sm:$0xff] %v2695
        %4232 = vst [vmem:[%s212 + $0x1cd0] sm:$0xff] %v2696
        %4233 = vst [vmem:[%s212 + $0x1cd8] sm:$0xff] %v2697
        %4234 = vst [vmem:[%s212 + $0x1ce0] sm:$0xff] %v2698
        %4235 = vst [vmem:[%s212 + $0x1ce8] sm:$0xff] %v2699
        %4236 = vst [vmem:[%s212 + $0x1cf0] sm:$0xff] %v2700
        %4237 = vst [vmem:[%s212 + $0x1cf8] sm:$0xff] %v2701
        %4238 = vst [vmem:[%s212 + $0x1d00] sm:$0xff] %v2702
        %4239 = vst [vmem:[%s212 + $0x1d08] sm:$0xff] %v2703
        %4240 = vst [vmem:[%s212 + $0x1d10] sm:$0xff] %v2704
        %4241 = vst [vmem:[%s212 + $0x1d18] sm:$0xff] %v2705
        %4242 = vst [vmem:[%s212 + $0x1d20] sm:$0xff] %v2706
        %4243 = vst [vmem:[%s212 + $0x1d28] sm:$0xff] %v2707
        %4244 = vst [vmem:[%s212 + $0x1d30] sm:$0xff] %v2708
        %4245 = vst [vmem:[%s212 + $0x1d38] sm:$0xff] %v2709
        %4246 = vst [vmem:[%s212 + $0x1d40] sm:$0xff] %v2710
        %4247 = vst [vmem:[%s212 + $0x1d48] sm:$0xff] %v2711
        %4248 = vst [vmem:[%s212 + $0x1d50] sm:$0xff] %v2712
        %4249 = vst [vmem:[%s212 + $0x1d58] sm:$0xff] %v2713
        %4250 = vst [vmem:[%s212 + $0x1d60] sm:$0xff] %v2714
        %4251 = vst [vmem:[%s212 + $0x1d68] sm:$0xff] %v2715
        %4252 = vst [vmem:[%s212 + $0x1d70] sm:$0xff] %v2716
        %4253 = vst [vmem:[%s212 + $0x1d78] sm:$0xff] %v2717
        %4254 = vst [vmem:[%s212 + $0x1d80] sm:$0xff] %v2718
        %4255 = vst [vmem:[%s212 + $0x1d88] sm:$0xff] %v2719
        %4256 = vst [vmem:[%s212 + $0x1d90] sm:$0xff] %v2720
        %4257 = vst [vmem:[%s212 + $0x1d98] sm:$0xff] %v2721
        %4258 = vst [vmem:[%s212 + $0x1da0] sm:$0xff] %v2722
        %4259 = vst [vmem:[%s212 + $0x1da8] sm:$0xff] %v2723
        %4260 = vst [vmem:[%s212 + $0x1db0] sm:$0xff] %v2724
        %4261 = vst [vmem:[%s212 + $0x1db8] sm:$0xff] %v2725
        %4262 = vst [vmem:[%s212 + $0x1dc0] sm:$0xff] %v2726
        %4263 = vst [vmem:[%s212 + $0x1dc8] sm:$0xff] %v2727
        %4264 = vst [vmem:[%s212 + $0x1dd0] sm:$0xff] %v2728
        %4265 = vst [vmem:[%s212 + $0x1dd8] sm:$0xff] %v2729
        %4266 = vst [vmem:[%s212 + $0x1de0] sm:$0xff] %v2730
        %4267 = vst [vmem:[%s212 + $0x1de8] sm:$0xff] %v2731
        %4268 = vst [vmem:[%s212 + $0x1df0] sm:$0xff] %v2732
        %4269 = vst [vmem:[%s212 + $0x1df8] sm:$0xff] %v2733
        %4270 = vst [vmem:[%s212 + $0x1e00] sm:$0xff] %v2734
        %4271 = vst [vmem:[%s212 + $0x1e08] sm:$0xff] %v2735
        %4272 = vst [vmem:[%s212 + $0x1e10] sm:$0xff] %v2736
        %4273 = vst [vmem:[%s212 + $0x1e18] sm:$0xff] %v2737
        %4274 = vst [vmem:[%s212 + $0x1e20] sm:$0xff] %v2738
        %4275 = vst [vmem:[%s212 + $0x1e28] sm:$0xff] %v2739
        %4276 = vst [vmem:[%s212 + $0x1e30] sm:$0xff] %v2740
        %4277 = vst [vmem:[%s212 + $0x1e38] sm:$0xff] %v2741
        %4278 = vst [vmem:[%s212 + $0x1e40] sm:$0xff] %v2742
        %4279 = vst [vmem:[%s212 + $0x1e48] sm:$0xff] %v2743
        %4280 = vst [vmem:[%s212 + $0x1e50] sm:$0xff] %v2744
        %4281 = vst [vmem:[%s212 + $0x1e58] sm:$0xff] %v2745
        %4282 = vst [vmem:[%s212 + $0x1e60] sm:$0xff] %v2746
        %4283 = vst [vmem:[%s212 + $0x1e68] sm:$0xff] %v2747
        %4284 = vst [vmem:[%s212 + $0x1e70] sm:$0xff] %v2748
        %4285 = vst [vmem:[%s212 + $0x1e78] sm:$0xff] %v2749
        %4286 = vst [vmem:[%s212 + $0x1e80] sm:$0xff] %v2750
        %4287 = vst [vmem:[%s212 + $0x1e88] sm:$0xff] %v2751
        %4288 = vst [vmem:[%s212 + $0x1e90] sm:$0xff] %v2752
        %4289 = vst [vmem:[%s212 + $0x1e98] sm:$0xff] %v2753
        %4290 = vst [vmem:[%s212 + $0x1ea0] sm:$0xff] %v2754
        %4291 = vst [vmem:[%s212 + $0x1ea8] sm:$0xff] %v2755
        %4292 = vst [vmem:[%s212 + $0x1eb0] sm:$0xff] %v2756
        %4293 = vst [vmem:[%s212 + $0x1eb8] sm:$0xff] %v2757
        %4294 = vst [vmem:[%s212 + $0x1ec0] sm:$0xff] %v2758
        %4295 = vst [vmem:[%s212 + $0x1ec8] sm:$0xff] %v2759
        %4296 = vst [vmem:[%s212 + $0x1ed0] sm:$0xff] %v2760
        %4297 = vst [vmem:[%s212 + $0x1ed8] sm:$0xff] %v2761
        %4298 = vst [vmem:[%s212 + $0x1ee0] sm:$0xff] %v2762
        %4299 = vst [vmem:[%s212 + $0x1ee8] sm:$0xff] %v2763
        %4300 = vst [vmem:[%s212 + $0x1ef0] sm:$0xff] %v2764
        %4301 = vst [vmem:[%s212 + $0x1ef8] sm:$0xff] %v2765
        %4302 = vst [vmem:[%s212 + $0x1f00] sm:$0xff] %v2766
        %4303 = vst [vmem:[%s212 + $0x1f08] sm:$0xff] %v2767
        %4304 = vst [vmem:[%s212 + $0x1f10] sm:$0xff] %v2768
        %4305 = vst [vmem:[%s212 + $0x1f18] sm:$0xff] %v2769
        %4306 = vst [vmem:[%s212 + $0x1f20] sm:$0xff] %v2770
        %4307 = vst [vmem:[%s212 + $0x1f28] sm:$0xff] %v2771
        %4308 = vst [vmem:[%s212 + $0x1f30] sm:$0xff] %v2772
        %4309 = vst [vmem:[%s212 + $0x1f38] sm:$0xff] %v2773
        %4310 = vst [vmem:[%s212 + $0x1f40] sm:$0xff] %v2774
        %4311 = vst [vmem:[%s212 + $0x1f48] sm:$0xff] %v2775
        %4312 = vst [vmem:[%s212 + $0x1f50] sm:$0xff] %v2776
        %4313 = vst [vmem:[%s212 + $0x1f58] sm:$0xff] %v2777
        %4314 = vst [vmem:[%s212 + $0x1f60] sm:$0xff] %v2778
        %4315 = vst [vmem:[%s212 + $0x1f68] sm:$0xff] %v2779
        %4316 = vst [vmem:[%s212 + $0x1f70] sm:$0xff] %v2780
        %4317 = vst [vmem:[%s212 + $0x1f78] sm:$0xff] %v2781
        %4318 = vst [vmem:[%s212 + $0x1f80] sm:$0xff] %v2782
        %4319 = vst [vmem:[%s212 + $0x1f88] sm:$0xff] %v2783
        %4320 = vst [vmem:[%s212 + $0x1f90] sm:$0xff] %v2784
        %4321 = vst [vmem:[%s212 + $0x1f98] sm:$0xff] %v2785
        %4322 = vst [vmem:[%s212 + $0x1fa0] sm:$0xff] %v2786
        %4323 = vst [vmem:[%s212 + $0x1fa8] sm:$0xff] %v2787
        %4324 = vst [vmem:[%s212 + $0x1fb0] sm:$0xff] %v2788
        %4325 = vst [vmem:[%s212 + $0x1fb8] sm:$0xff] %v2789
        %4326 = vst [vmem:[%s212 + $0x1fc0] sm:$0xff] %v2790
        %4327 = vst [vmem:[%s212 + $0x1fc8] sm:$0xff] %v2791
        %4328 = vst [vmem:[%s212 + $0x1fd0] sm:$0xff] %v2792
        %4329 = vst [vmem:[%s212 + $0x1fd8] sm:$0xff] %v2793
        %4330 = vst [vmem:[%s212 + $0x1fe0] sm:$0xff] %v2794
        %4331 = vst [vmem:[%s212 + $0x1fe8] sm:$0xff] %v2795
        %4332 = vst [vmem:[%s212 + $0x1ff0] sm:$0xff] %v2796
        %4333 = vst [vmem:[%s212 + $0x1ff8] sm:$0xff] %v2797
        %4334 = vst [vmem:[%s212 + $0x2000] sm:$0xff] %v2798
        %4335 = vst [vmem:[%s212 + $0x2008] sm:$0xff] %v2799
        %4336 = vst [vmem:[%s212 + $0x2010] sm:$0xff] %v2800
        %4337 = vst [vmem:[%s212 + $0x2018] sm:$0xff] %v2801
        %4338 = vst [vmem:[%s212 + $0x2020] sm:$0xff] %v2802
        %4339 = vst [vmem:[%s212 + $0x2028] sm:$0xff] %v2803
        %4340 = vst [vmem:[%s212 + $0x2030] sm:$0xff] %v2804
        %4341 = vst [vmem:[%s212 + $0x2038] sm:$0xff] %v2805
        %4342 = vst [vmem:[%s212 + $0x2040] sm:$0xff] %v2806
        %4343 = vst [vmem:[%s212 + $0x2048] sm:$0xff] %v2807
        %4344 = vst [vmem:[%s212 + $0x2050] sm:$0xff] %v2808
        %4345 = vst [vmem:[%s212 + $0x2058] sm:$0xff] %v2809
        %4346 = vst [vmem:[%s212 + $0x2060] sm:$0xff] %v2810
        %4347 = vst [vmem:[%s212 + $0x2068] sm:$0xff] %v2811
        %4348 = vst [vmem:[%s212 + $0x2070] sm:$0xff] %v2812
        %4349 = vst [vmem:[%s212 + $0x2078] sm:$0xff] %v2813
        %4350 = vst [vmem:[%s212 + $0x2080] sm:$0xff] %v2814
        %4351 = vst [vmem:[%s212 + $0x2088] sm:$0xff] %v2815
        %4352 = vst [vmem:[%s212 + $0x2090] sm:$0xff] %v2816
        %4353 = vst [vmem:[%s212 + $0x2098] sm:$0xff] %v2817
        %4354 = vst [vmem:[%s212 + $0x20a0] sm:$0xff] %v2818
        %4355 = vst [vmem:[%s212 + $0x20a8] sm:$0xff] %v2819
        %4356 = vst [vmem:[%s212 + $0x20b0] sm:$0xff] %v2820
        %4357 = vst [vmem:[%s212 + $0x20b8] sm:$0xff] %v2821
        %4358 = vst [vmem:[%s212 + $0x20c0] sm:$0xff] %v2822
        %4359 = vst [vmem:[%s212 + $0x20c8] sm:$0xff] %v2823
        %4360 = vst [vmem:[%s212 + $0x20d0] sm:$0xff] %v2824
        %4361 = vst [vmem:[%s212 + $0x20d8] sm:$0xff] %v2825
        %4362 = vst [vmem:[%s212 + $0x20e0] sm:$0xff] %v2826
        %4363 = vst [vmem:[%s212 + $0x20e8] sm:$0xff] %v2827
        %4364 = vst [vmem:[%s212 + $0x20f0] sm:$0xff] %v2828
        %4365 = vst [vmem:[%s212 + $0x20f8] sm:$0xff] %v2829
        %4366 = vst [vmem:[%s212 + $0x2100] sm:$0xff] %v2830
        %4367 = vst [vmem:[%s212 + $0x2108] sm:$0xff] %v2831
        %4368 = vst [vmem:[%s212 + $0x2110] sm:$0xff] %v2832
        %4369 = vst [vmem:[%s212 + $0x2118] sm:$0xff] %v2833
        %4370 = vst [vmem:[%s212 + $0x2120] sm:$0xff] %v2834
        %4371 = vst [vmem:[%s212 + $0x2128] sm:$0xff] %v2835
        %4372 = vst [vmem:[%s212 + $0x2130] sm:$0xff] %v2836
        %4373 = vst [vmem:[%s212 + $0x2138] sm:$0xff] %v2837
        %4374 = vst [vmem:[%s212 + $0x2140] sm:$0xff] %v2838
        %4375 = vst [vmem:[%s212 + $0x2148] sm:$0xff] %v2839
        %4376 = vst [vmem:[%s212 + $0x2150] sm:$0xff] %v2840
        %4377 = vst [vmem:[%s212 + $0x2158] sm:$0xff] %v2841
        %4378 = vst [vmem:[%s212 + $0x2160] sm:$0xff] %v2842
        %4379 = vst [vmem:[%s212 + $0x2168] sm:$0xff] %v2843
        %4380 = vst [vmem:[%s212 + $0x2170] sm:$0xff] %v2844
        %4381 = vst [vmem:[%s212 + $0x2178] sm:$0xff] %v2845
        %4382 = vst [vmem:[%s212 + $0x2180] sm:$0xff] %v2846
        %4383 = vst [vmem:[%s212 + $0x2188] sm:$0xff] %v2847
        %4384 = vst [vmem:[%s212 + $0x2190] sm:$0xff] %v2848
        %4385 = vst [vmem:[%s212 + $0x2198] sm:$0xff] %v2849
        %4386 = vst [vmem:[%s212 + $0x21a0] sm:$0xff] %v2850
        %4387 = vst [vmem:[%s212 + $0x21a8] sm:$0xff] %v2851
        %4388 = vst [vmem:[%s212 + $0x21b0] sm:$0xff] %v2852
        %4389 = vst [vmem:[%s212 + $0x21b8] sm:$0xff] %v2853
        %4390 = vst [vmem:[%s212 + $0x21c0] sm:$0xff] %v2854
        %4391 = vst [vmem:[%s212 + $0x21c8] sm:$0xff] %v2855
        %4392 = vst [vmem:[%s212 + $0x21d0] sm:$0xff] %v2856
        %4393 = vst [vmem:[%s212 + $0x21d8] sm:$0xff] %v2857
        %4394 = vst [vmem:[%s212 + $0x21e0] sm:$0xff] %v2858
        %4395 = vst [vmem:[%s212 + $0x21e8] sm:$0xff] %v2859
        %4396 = vst [vmem:[%s212 + $0x21f0] sm:$0xff] %v2860
        %4397 = vst [vmem:[%s212 + $0x21f8] sm:$0xff] %v2861
        %4398 = vst [vmem:[%s212 + $0x2200] sm:$0xff] %v2862
        %4399 = vst [vmem:[%s212 + $0x2208] sm:$0xff] %v2863
        %4400 = vst [vmem:[%s212 + $0x2210] sm:$0xff] %v2864
        %4401 = vst [vmem:[%s212 + $0x2218] sm:$0xff] %v2865
        %4402 = vst [vmem:[%s212 + $0x2220] sm:$0xff] %v2866
        %4403 = vst [vmem:[%s212 + $0x2228] sm:$0xff] %v2867
        %4404 = vst [vmem:[%s212 + $0x2230] sm:$0xff] %v2868
        %4405 = vst [vmem:[%s212 + $0x2238] sm:$0xff] %v2869
        %4406 = vst [vmem:[%s212 + $0x2240] sm:$0xff] %v2870
        %4407 = vst [vmem:[%s212 + $0x2248] sm:$0xff] %v2871
        %4408 = vst [vmem:[%s212 + $0x2250] sm:$0xff] %v2872
        %4409 = vst [vmem:[%s212 + $0x2258] sm:$0xff] %v2873
        %4410 = vst [vmem:[%s212 + $0x2260] sm:$0xff] %v2874
        %4411 = vst [vmem:[%s212 + $0x2268] sm:$0xff] %v2875
        %4412 = vst [vmem:[%s212 + $0x2270] sm:$0xff] %v2876
        %4413 = vst [vmem:[%s212 + $0x2278] sm:$0xff] %v2877
        %4414 = vst [vmem:[%s212 + $0x2280] sm:$0xff] %v2878
        %4415 = vst [vmem:[%s212 + $0x2288] sm:$0xff] %v2879
        %4416 = vst [vmem:[%s212 + $0x2290] sm:$0xff] %v2880
        %4417 = vst [vmem:[%s212 + $0x2298] sm:$0xff] %v2881
        %4418 = vst [vmem:[%s212 + $0x22a0] sm:$0xff] %v2882
        %4419 = vst [vmem:[%s212 + $0x22a8] sm:$0xff] %v2883
        %4420 = vst [vmem:[%s212 + $0x22b0] sm:$0xff] %v2884
        %4421 = vst [vmem:[%s212 + $0x22b8] sm:$0xff] %v2885
        %4422 = vst [vmem:[%s212 + $0x22c0] sm:$0xff] %v2886
        %4423 = vst [vmem:[%s212 + $0x22c8] sm:$0xff] %v2887
        %4424 = vst [vmem:[%s212 + $0x22d0] sm:$0xff] %v2888
        %4425 = vst [vmem:[%s212 + $0x22d8] sm:$0xff] %v2889
        %4426 = vst [vmem:[%s212 + $0x22e0] sm:$0xff] %v2890
        %4427 = vst [vmem:[%s212 + $0x22e8] sm:$0xff] %v2891
        %4428 = vst [vmem:[%s212 + $0x22f0] sm:$0xff] %v2892
        %4429 = vst [vmem:[%s212 + $0x22f8] sm:$0xff] %v2893
        %4430 = vst [vmem:[%s212 + $0x2300] sm:$0xff] %v2894
        %4431 = vst [vmem:[%s212 + $0x2308] sm:$0xff] %v2895
        %4432 = vst [vmem:[%s212 + $0x2310] sm:$0xff] %v2896
        %4433 = vst [vmem:[%s212 + $0x2318] sm:$0xff] %v2897
        %4434 = vst [vmem:[%s212 + $0x2320] sm:$0xff] %v2898
        %4435 = vst [vmem:[%s212 + $0x2328] sm:$0xff] %v2899
        %4436 = vst [vmem:[%s212 + $0x2330] sm:$0xff] %v2900
        %4437 = vst [vmem:[%s212 + $0x2338] sm:$0xff] %v2901
        %4438 = vst [vmem:[%s212 + $0x2340] sm:$0xff] %v2902
        %4439 = vst [vmem:[%s212 + $0x2348] sm:$0xff] %v2903
        %4440 = vst [vmem:[%s212 + $0x2350] sm:$0xff] %v2904
        %4441 = vst [vmem:[%s212 + $0x2358] sm:$0xff] %v2905
        %4442 = vst [vmem:[%s212 + $0x2360] sm:$0xff] %v2906
        %4443 = vst [vmem:[%s212 + $0x2368] sm:$0xff] %v2907
        %4444 = vst [vmem:[%s212 + $0x2370] sm:$0xff] %v2908
        %4445 = vst [vmem:[%s212 + $0x2378] sm:$0xff] %v2909
        %4446 = vst [vmem:[%s212 + $0x2380] sm:$0xff] %v2910
        %4447 = vst [vmem:[%s212 + $0x2388] sm:$0xff] %v2911
        %4448 = vst [vmem:[%s212 + $0x2390] sm:$0xff] %v2912
        %4449 = vst [vmem:[%s212 + $0x2398] sm:$0xff] %v2913
        %4450 = vst [vmem:[%s212 + $0x23a0] sm:$0xff] %v2914
        %4451 = vst [vmem:[%s212 + $0x23a8] sm:$0xff] %v2915
        %4452 = vst [vmem:[%s212 + $0x23b0] sm:$0xff] %v2916
        %4453 = vst [vmem:[%s212 + $0x23b8] sm:$0xff] %v2917
        %4454 = vst [vmem:[%s212 + $0x23c0] sm:$0xff] %v2918
        %4455 = vst [vmem:[%s212 + $0x23c8] sm:$0xff] %v2919
        %4456 = vst [vmem:[%s212 + $0x23d0] sm:$0xff] %v2920
        %4457 = vst [vmem:[%s212 + $0x23d8] sm:$0xff] %v2921
        %4458 = vst [vmem:[%s212 + $0x23e0] sm:$0xff] %v2922
        %4459 = vst [vmem:[%s212 + $0x23e8] sm:$0xff] %v2923
        %4460 = vst [vmem:[%s212 + $0x23f0] sm:$0xff] %v2924
        %4461 = vst [vmem:[%s212 + $0x23f8] sm:$0xff] %v2925
        %4462 = vst [vmem:[%s212 + $0x2400] sm:$0xff] %v2926
        %4463 = vst [vmem:[%s212 + $0x2408] sm:$0xff] %v2927
        %4464 = vst [vmem:[%s212 + $0x2410] sm:$0xff] %v2928
        %4465 = vst [vmem:[%s212 + $0x2418] sm:$0xff] %v2929
        %4466 = vst [vmem:[%s212 + $0x2420] sm:$0xff] %v2930
        %4467 = vst [vmem:[%s212 + $0x2428] sm:$0xff] %v2931
        %4468 = vst [vmem:[%s212 + $0x2430] sm:$0xff] %v2932
        %4469 = vst [vmem:[%s212 + $0x2438] sm:$0xff] %v2933
        %4470 = vst [vmem:[%s212 + $0x2440] sm:$0xff] %v2934
        %4471 = vst [vmem:[%s212 + $0x2448] sm:$0xff] %v2935
        %4472 = vst [vmem:[%s212 + $0x2450] sm:$0xff] %v2936
        %4473 = vst [vmem:[%s212 + $0x2458] sm:$0xff] %v2937
        %4474 = vst [vmem:[%s212 + $0x2460] sm:$0xff] %v2938
        %4475 = vst [vmem:[%s212 + $0x2468] sm:$0xff] %v2939
        %4476 = vst [vmem:[%s212 + $0x2470] sm:$0xff] %v2940
        %4477 = vst [vmem:[%s212 + $0x2478] sm:$0xff] %v2941
        %4478 = vst [vmem:[%s212 + $0x2480] sm:$0xff] %v2942
        %4479 = vst [vmem:[%s212 + $0x2488] sm:$0xff] %v2943
        %4480 = vst [vmem:[%s212 + $0x2490] sm:$0xff] %v2944
        %4481 = vst [vmem:[%s212 + $0x2498] sm:$0xff] %v2945
        %4482 = vst [vmem:[%s212 + $0x24a0] sm:$0xff] %v2946
        %4483 = vst [vmem:[%s212 + $0x24a8] sm:$0xff] %v2947
        %4484 = vst [vmem:[%s212 + $0x24b0] sm:$0xff] %v2948
        %4485 = vst [vmem:[%s212 + $0x24b8] sm:$0xff] %v2949
        %4486 = vst [vmem:[%s212 + $0x24c0] sm:$0xff] %v2950
        %4487 = vst [vmem:[%s212 + $0x24c8] sm:$0xff] %v2951
        %4488 = vst [vmem:[%s212 + $0x24d0] sm:$0xff] %v2952
        %4489 = vst [vmem:[%s212 + $0x24d8] sm:$0xff] %v2953
        %4490 = vst [vmem:[%s212 + $0x24e0] sm:$0xff] %v2954
        %4491 = vst [vmem:[%s212 + $0x24e8] sm:$0xff] %v2955
        %4492 = vst [vmem:[%s212 + $0x24f0] sm:$0xff] %v2956
        %4493 = vst [vmem:[%s212 + $0x24f8] sm:$0xff] %v2957
        %4494 = vst [vmem:[%s212 + $0x2500] sm:$0xff] %v2958
        %4495 = vst [vmem:[%s212 + $0x2508] sm:$0xff] %v2959
        %4496 = vst [vmem:[%s212 + $0x2510] sm:$0xff] %v2960
        %4497 = vst [vmem:[%s212 + $0x2518] sm:$0xff] %v2961
        %4498 = vst [vmem:[%s212 + $0x2520] sm:$0xff] %v2962
        %4499 = vst [vmem:[%s212 + $0x2528] sm:$0xff] %v2963
        %4500 = vst [vmem:[%s212 + $0x2530] sm:$0xff] %v2964
        %4501 = vst [vmem:[%s212 + $0x2538] sm:$0xff] %v2965
        %4502 = vst [vmem:[%s212 + $0x2540] sm:$0xff] %v2966
        %4503 = vst [vmem:[%s212 + $0x2548] sm:$0xff] %v2967
        %4504 = vst [vmem:[%s212 + $0x2550] sm:$0xff] %v2968
        %4505 = vst [vmem:[%s212 + $0x2558] sm:$0xff] %v2969
        %4506 = vst [vmem:[%s212 + $0x2560] sm:$0xff] %v2970
        %4507 = vst [vmem:[%s212 + $0x2568] sm:$0xff] %v2971
        %4508 = vst [vmem:[%s212 + $0x2570] sm:$0xff] %v2972
        %4509 = vst [vmem:[%s212 + $0x2578] sm:$0xff] %v2973
        %4510 = vst [vmem:[%s212 + $0x2580] sm:$0xff] %v2974
        %4511 = vst [vmem:[%s212 + $0x2588] sm:$0xff] %v2975
        %4512 = vst [vmem:[%s212 + $0x2590] sm:$0xff] %v2976
        %4513 = vst [vmem:[%s212 + $0x2598] sm:$0xff] %v2977
        %4514 = vst [vmem:[%s212 + $0x25a0] sm:$0xff] %v2978
        %4515 = vst [vmem:[%s212 + $0x25a8] sm:$0xff] %v2979
        %4516 = vst [vmem:[%s212 + $0x25b0] sm:$0xff] %v2980
        %4517 = vst [vmem:[%s212 + $0x25b8] sm:$0xff] %v2981
        %4518 = vst [vmem:[%s212 + $0x25c0] sm:$0xff] %v2982
        %4519 = vst [vmem:[%s212 + $0x25c8] sm:$0xff] %v2983
        %4520 = vst [vmem:[%s212 + $0x25d0] sm:$0xff] %v2984
        %4521 = vst [vmem:[%s212 + $0x25d8] sm:$0xff] %v2985
        %4522 = vst [vmem:[%s212 + $0x25e0] sm:$0xff] %v2986
        %4523 = vst [vmem:[%s212 + $0x25e8] sm:$0xff] %v2987
        %4524 = vst [vmem:[%s212 + $0x25f0] sm:$0xff] %v2988
        %4525 = vst [vmem:[%s212 + $0x25f8] sm:$0xff] %v2989
        %4526 = vst [vmem:[%s212 + $0x2600] sm:$0xff] %v2990
        %4527 = vst [vmem:[%s212 + $0x2608] sm:$0xff] %v2991
        %4528 = vst [vmem:[%s212 + $0x2610] sm:$0xff] %v2992
        %4529 = vst [vmem:[%s212 + $0x2618] sm:$0xff] %v2993
        %4530 = vst [vmem:[%s212 + $0x2620] sm:$0xff] %v2994
        %4531 = vst [vmem:[%s212 + $0x2628] sm:$0xff] %v2995
        %4532 = vst [vmem:[%s212 + $0x2630] sm:$0xff] %v2996
        %4533 = vst [vmem:[%s212 + $0x2638] sm:$0xff] %v2997
        %4534 = vst [vmem:[%s212 + $0x2640] sm:$0xff] %v2998
        %4535 = vst [vmem:[%s212 + $0x2648] sm:$0xff] %v2999
        %4536 = vst [vmem:[%s212 + $0x2650] sm:$0xff] %v3000
        %4537 = vst [vmem:[%s212 + $0x2658] sm:$0xff] %v3001
        %4538 = vst [vmem:[%s212 + $0x2660] sm:$0xff] %v3002
        %4539 = vst [vmem:[%s212 + $0x2668] sm:$0xff] %v3003
        %4540 = vst [vmem:[%s212 + $0x2670] sm:$0xff] %v3004
        %4541 = vst [vmem:[%s212 + $0x2678] sm:$0xff] %v3005
        %4542 = vst [vmem:[%s212 + $0x2680] sm:$0xff] %v3006
        %4543 = vst [vmem:[%s212 + $0x2688] sm:$0xff] %v3007
        %4544 = vst [vmem:[%s212 + $0x2690] sm:$0xff] %v3008
        %4545 = vst [vmem:[%s212 + $0x2698] sm:$0xff] %v3009
        %4546 = vst [vmem:[%s212 + $0x26a0] sm:$0xff] %v3010
        %4547 = vst [vmem:[%s212 + $0x26a8] sm:$0xff] %v3011
        %4548 = vst [vmem:[%s212 + $0x26b0] sm:$0xff] %v3012
        %4549 = vst [vmem:[%s212 + $0x26b8] sm:$0xff] %v3013
        %4550 = vst [vmem:[%s212 + $0x26c0] sm:$0xff] %v3014
        %4551 = vst [vmem:[%s212 + $0x26c8] sm:$0xff] %v3015
        %4552 = vst [vmem:[%s212 + $0x26d0] sm:$0xff] %v3016
        %4553 = vst [vmem:[%s212 + $0x26d8] sm:$0xff] %v3017
        %4554 = vst [vmem:[%s212 + $0x26e0] sm:$0xff] %v3018
        %4555 = vst [vmem:[%s212 + $0x26e8] sm:$0xff] %v3019
        %4556 = vst [vmem:[%s212 + $0x26f0] sm:$0xff] %v3020
        %4557 = vst [vmem:[%s212 + $0x26f8] sm:$0xff] %v3021
        %4558 = vst [vmem:[%s212 + $0x2700] sm:$0xff] %v3022
        %4559 = vst [vmem:[%s212 + $0x2708] sm:$0xff] %v3023
        %4560 = vst [vmem:[%s212 + $0x2710] sm:$0xff] %v3024
        %4561 = vst [vmem:[%s212 + $0x2718] sm:$0xff] %v3025
        %4562 = vst [vmem:[%s212 + $0x2720] sm:$0xff] %v3026
        %4563 = vst [vmem:[%s212 + $0x2728] sm:$0xff] %v3027
        %4564 = vst [vmem:[%s212 + $0x2730] sm:$0xff] %v3028
        %4565 = vst [vmem:[%s212 + $0x2738] sm:$0xff] %v3029
        %4566 = vst [vmem:[%s212 + $0x2740] sm:$0xff] %v3030
        %4567 = vst [vmem:[%s212 + $0x2748] sm:$0xff] %v3031
        %4568 = vst [vmem:[%s212 + $0x2750] sm:$0xff] %v3032
        %4569 = vst [vmem:[%s212 + $0x2758] sm:$0xff] %v3033
        %4570 = vst [vmem:[%s212 + $0x2760] sm:$0xff] %v3034
        %4571 = vst [vmem:[%s212 + $0x2768] sm:$0xff] %v3035
        %4572 = vst [vmem:[%s212 + $0x2770] sm:$0xff] %v3036
        %4573 = vst [vmem:[%s212 + $0x2778] sm:$0xff] %v3037
        %4574 = vst [vmem:[%s212 + $0x2780] sm:$0xff] %v3038
        %4575 = vst [vmem:[%s212 + $0x2788] sm:$0xff] %v3039
        %4576 = vst [vmem:[%s212 + $0x2790] sm:$0xff] %v3040
        %4577 = vst [vmem:[%s212 + $0x2798] sm:$0xff] %v3041
        %4578 = vst [vmem:[%s212 + $0x27a0] sm:$0xff] %v3042
        %4579 = vst [vmem:[%s212 + $0x27a8] sm:$0xff] %v3043
        %4580 = vst [vmem:[%s212 + $0x27b0] sm:$0xff] %v3044
        %4581 = vst [vmem:[%s212 + $0x27b8] sm:$0xff] %v3045
        %4582 = vst [vmem:[%s212 + $0x27c0] sm:$0xff] %v3046
        %4583 = vst [vmem:[%s212 + $0x27c8] sm:$0xff] %v3047
        %4584 = vst [vmem:[%s212 + $0x27d0] sm:$0xff] %v3048
        %4585 = vst [vmem:[%s212 + $0x27d8] sm:$0xff] %v3049
        %4586 = vst [vmem:[%s212 + $0x27e0] sm:$0xff] %v3050
        %4587 = vst [vmem:[%s212 + $0x27e8] sm:$0xff] %v3051
        %4588 = vst [vmem:[%s212 + $0x27f0] sm:$0xff] %v3052
        %4589 = vst [vmem:[%s212 + $0x27f8] sm:$0xff] %v3053
        %4590 = vst [vmem:[%s212 + $0x2800] sm:$0xff] %v3054
        %4591 = vst [vmem:[%s212 + $0x2808] sm:$0xff] %v3055
        %4592 = vst [vmem:[%s212 + $0x2810] sm:$0xff] %v3056
        %4593 = vst [vmem:[%s212 + $0x2818] sm:$0xff] %v3057
        %4594 = vst [vmem:[%s212 + $0x2820] sm:$0xff] %v3058
        %4595 = vst [vmem:[%s212 + $0x2828] sm:$0xff] %v3059
        %4596 = vst [vmem:[%s212 + $0x2830] sm:$0xff] %v3060
        %4597 = vst [vmem:[%s212 + $0x2838] sm:$0xff] %v3061
        %4598 = vst [vmem:[%s212 + $0x2840] sm:$0xff] %v3062
        %4599 = vst [vmem:[%s212 + $0x2848] sm:$0xff] %v3063
        %4600 = vst [vmem:[%s212 + $0x2850] sm:$0xff] %v3064
        %4601 = vst [vmem:[%s212 + $0x2858] sm:$0xff] %v3065
        %4602 = vst [vmem:[%s212 + $0x2860] sm:$0xff] %v3066
        %4603 = vst [vmem:[%s212 + $0x2868] sm:$0xff] %v3067
        %4604 = vst [vmem:[%s212 + $0x2870] sm:$0xff] %v3068
        %4605 = vst [vmem:[%s212 + $0x2878] sm:$0xff] %v3069
        %4606 = vst [vmem:[%s212 + $0x2880] sm:$0xff] %v3070
        %4607 = vst [vmem:[%s212 + $0x2888] sm:$0xff] %v3071
        %4608 = vst [vmem:[%s212 + $0x2890] sm:$0xff] %v3072
        %4609 = vst [vmem:[%s212 + $0x2898] sm:$0xff] %v3073
        %4610 = vst [vmem:[%s212 + $0x28a0] sm:$0xff] %v3074
        %4611 = vst [vmem:[%s212 + $0x28a8] sm:$0xff] %v3075
        %4612 = vst [vmem:[%s212 + $0x28b0] sm:$0xff] %v3076
        %4613 = vst [vmem:[%s212 + $0x28b8] sm:$0xff] %v3077
        %4614 = vst [vmem:[%s212 + $0x28c0] sm:$0xff] %v3078
        %4615 = vst [vmem:[%s212 + $0x28c8] sm:$0xff] %v3079
        %4616 = vst [vmem:[%s212 + $0x28d0] sm:$0xff] %v3080
        %4617 = vst [vmem:[%s212 + $0x28d8] sm:$0xff] %v3081
        %4618 = vst [vmem:[%s212 + $0x28e0] sm:$0xff] %v3082
        %4619 = vst [vmem:[%s212 + $0x28e8] sm:$0xff] %v3083
        %4620 = vst [vmem:[%s212 + $0x28f0] sm:$0xff] %v3084
        %4621 = vst [vmem:[%s212 + $0x28f8] sm:$0xff] %v3085
        %4622 = vst [vmem:[%s212 + $0x2900] sm:$0xff] %v3086
        %4623 = vst [vmem:[%s212 + $0x2908] sm:$0xff] %v3087
        %4624 = vst [vmem:[%s212 + $0x2910] sm:$0xff] %v3088
        %4625 = vst [vmem:[%s212 + $0x2918] sm:$0xff] %v3089
        %4626 = vst [vmem:[%s212 + $0x2920] sm:$0xff] %v3090
        %4627 = vst [vmem:[%s212 + $0x2928] sm:$0xff] %v3091
        %4628 = vst [vmem:[%s212 + $0x2930] sm:$0xff] %v3092
        %4629 = vst [vmem:[%s212 + $0x2938] sm:$0xff] %v3093
        %4630 = vst [vmem:[%s212 + $0x2940] sm:$0xff] %v3094
        %4631 = vst [vmem:[%s212 + $0x2948] sm:$0xff] %v3095
        %4632 = vst [vmem:[%s212 + $0x2950] sm:$0xff] %v3096
        %4633 = vst [vmem:[%s212 + $0x2958] sm:$0xff] %v3097
        %4634 = vst [vmem:[%s212 + $0x2960] sm:$0xff] %v3098
        %4635 = vst [vmem:[%s212 + $0x2968] sm:$0xff] %v3099
        %4636 = vst [vmem:[%s212 + $0x2970] sm:$0xff] %v3100
        %4637 = vst [vmem:[%s212 + $0x2978] sm:$0xff] %v3101
        %4638 = vst [vmem:[%s212 + $0x2980] sm:$0xff] %v3102
        %4639 = vst [vmem:[%s212 + $0x2988] sm:$0xff] %v3103
        %4640 = vst [vmem:[%s212 + $0x2990] sm:$0xff] %v3104
        %4641 = vst [vmem:[%s212 + $0x2998] sm:$0xff] %v3105
        %4642 = vst [vmem:[%s212 + $0x29a0] sm:$0xff] %v3106
        %4643 = vst [vmem:[%s212 + $0x29a8] sm:$0xff] %v3107
        %4644 = vst [vmem:[%s212 + $0x29b0] sm:$0xff] %v3108
        %4645 = vst [vmem:[%s212 + $0x29b8] sm:$0xff] %v3109
        %4646 = vst [vmem:[%s212 + $0x29c0] sm:$0xff] %v3110
        %4647 = vst [vmem:[%s212 + $0x29c8] sm:$0xff] %v3111
        %4648 = vst [vmem:[%s212 + $0x29d0] sm:$0xff] %v3112
        %4649 = vst [vmem:[%s212 + $0x29d8] sm:$0xff] %v3113
        %4650 = vst [vmem:[%s212 + $0x29e0] sm:$0xff] %v3114
        %4651 = vst [vmem:[%s212 + $0x29e8] sm:$0xff] %v3115
        %4652 = vst [vmem:[%s212 + $0x29f0] sm:$0xff] %v3116
        %4653 = vst [vmem:[%s212 + $0x29f8] sm:$0xff] %v3117
        %4654 = vst [vmem:[%s212 + $0x2a00] sm:$0xff] %v3118
        %4655 = vst [vmem:[%s212 + $0x2a08] sm:$0xff] %v3119
        %4656 = vst [vmem:[%s212 + $0x2a10] sm:$0xff] %v3120
        %4657 = vst [vmem:[%s212 + $0x2a18] sm:$0xff] %v3121
        %4658 = vst [vmem:[%s212 + $0x2a20] sm:$0xff] %v3122
        %4659 = vst [vmem:[%s212 + $0x2a28] sm:$0xff] %v3123
        %4660 = vst [vmem:[%s212 + $0x2a30] sm:$0xff] %v3124
        %4661 = vst [vmem:[%s212 + $0x2a38] sm:$0xff] %v3125
        %4662 = vst [vmem:[%s212 + $0x2a40] sm:$0xff] %v3126
        %4663 = vst [vmem:[%s212 + $0x2a48] sm:$0xff] %v3127
        %4664 = vst [vmem:[%s212 + $0x2a50] sm:$0xff] %v3128
        %4665 = vst [vmem:[%s212 + $0x2a58] sm:$0xff] %v3129
        %4666 = vst [vmem:[%s212 + $0x2a60] sm:$0xff] %v3130
        %4667 = vst [vmem:[%s212 + $0x2a68] sm:$0xff] %v3131
        %4668 = vst [vmem:[%s212 + $0x2a70] sm:$0xff] %v3132
        %4669 = vst [vmem:[%s212 + $0x2a78] sm:$0xff] %v3133
        %4670 = vst [vmem:[%s212 + $0x2a80] sm:$0xff] %v3134
        %4671 = vst [vmem:[%s212 + $0x2a88] sm:$0xff] %v3135
        %4672 = vst [vmem:[%s212 + $0x2a90] sm:$0xff] %v3136
        %4673 = vst [vmem:[%s212 + $0x2a98] sm:$0xff] %v3137
        %4674 = vst [vmem:[%s212 + $0x2aa0] sm:$0xff] %v3138
        %4675 = vst [vmem:[%s212 + $0x2aa8] sm:$0xff] %v3139
        %4676 = vst [vmem:[%s212 + $0x2ab0] sm:$0xff] %v3140
        %4677 = vst [vmem:[%s212 + $0x2ab8] sm:$0xff] %v3141
        %4678 = vst [vmem:[%s212 + $0x2ac0] sm:$0xff] %v3142
        %4679 = vst [vmem:[%s212 + $0x2ac8] sm:$0xff] %v3143
        %4680 = vst [vmem:[%s212 + $0x2ad0] sm:$0xff] %v3144
        %4681 = vst [vmem:[%s212 + $0x2ad8] sm:$0xff] %v3145
        %4682 = vst [vmem:[%s212 + $0x2ae0] sm:$0xff] %v3146
        %4683 = vst [vmem:[%s212 + $0x2ae8] sm:$0xff] %v3147
        %4684 = vst [vmem:[%s212 + $0x2af0] sm:$0xff] %v3148
        %4685 = vst [vmem:[%s212 + $0x2af8] sm:$0xff] %v3149
        %4686 = vst [vmem:[%s212 + $0x2b00] sm:$0xff] %v3150
        %4687 = vst [vmem:[%s212 + $0x2b08] sm:$0xff] %v3151
        %4688 = vst [vmem:[%s212 + $0x2b10] sm:$0xff] %v3152
        %4689 = vst [vmem:[%s212 + $0x2b18] sm:$0xff] %v3153
        %4690 = vst [vmem:[%s212 + $0x2b20] sm:$0xff] %v3154
        %4691 = vst [vmem:[%s212 + $0x2b28] sm:$0xff] %v3155
        %4692 = vst [vmem:[%s212 + $0x2b30] sm:$0xff] %v3156
        %4693 = vst [vmem:[%s212 + $0x2b38] sm:$0xff] %v3157
        %4694 = vst [vmem:[%s212 + $0x2b40] sm:$0xff] %v3158
        %4695 = vst [vmem:[%s212 + $0x2b48] sm:$0xff] %v3159
        %4696 = vst [vmem:[%s212 + $0x2b50] sm:$0xff] %v3160
        %4697 = vst [vmem:[%s212 + $0x2b58] sm:$0xff] %v3161
        %4698 = vst [vmem:[%s212 + $0x2b60] sm:$0xff] %v3162
        %4699 = vst [vmem:[%s212 + $0x2b68] sm:$0xff] %v3163
        %4700 = vst [vmem:[%s212 + $0x2b70] sm:$0xff] %v3164
        %4701 = vst [vmem:[%s212 + $0x2b78] sm:$0xff] %v3165
        %4702 = vst [vmem:[%s212 + $0x2b80] sm:$0xff] %v3166
        %4703 = vst [vmem:[%s212 + $0x2b88] sm:$0xff] %v3167
        %4704 = vst [vmem:[%s212 + $0x2b90] sm:$0xff] %v3168
        %4705 = vst [vmem:[%s212 + $0x2b98] sm:$0xff] %v3169
        %4706 = vst [vmem:[%s212 + $0x2ba0] sm:$0xff] %v3170
        %4707 = vst [vmem:[%s212 + $0x2ba8] sm:$0xff] %v3171
        %4708 = vst [vmem:[%s212 + $0x2bb0] sm:$0xff] %v3172
        %4709 = vst [vmem:[%s212 + $0x2bb8] sm:$0xff] %v3173
        %4710 = vst [vmem:[%s212 + $0x2bc0] sm:$0xff] %v3174
        %4711 = vst [vmem:[%s212 + $0x2bc8] sm:$0xff] %v3175
        %4712 = vst [vmem:[%s212 + $0x2bd0] sm:$0xff] %v3176
        %4713 = vst [vmem:[%s212 + $0x2bd8] sm:$0xff] %v3177
        %4714 = vst [vmem:[%s212 + $0x2be0] sm:$0xff] %v3178
        %4715 = vst [vmem:[%s212 + $0x2be8] sm:$0xff] %v3179
        %4716 = vst [vmem:[%s212 + $0x2bf0] sm:$0xff] %v3180
        %4717 = vst [vmem:[%s212 + $0x2bf8] sm:$0xff] %v3181
        %4718 = vst [vmem:[%s212 + $0x2c00] sm:$0xff] %v3182
        %4719 = vst [vmem:[%s212 + $0x2c08] sm:$0xff] %v3183
        %4720 = vst [vmem:[%s212 + $0x2c10] sm:$0xff] %v3184
        %4721 = vst [vmem:[%s212 + $0x2c18] sm:$0xff] %v3185
        %4722 = vst [vmem:[%s212 + $0x2c20] sm:$0xff] %v3186
        %4723 = vst [vmem:[%s212 + $0x2c28] sm:$0xff] %v3187
        %4724 = vst [vmem:[%s212 + $0x2c30] sm:$0xff] %v3188
        %4725 = vst [vmem:[%s212 + $0x2c38] sm:$0xff] %v3189
        %4726 = vst [vmem:[%s212 + $0x2c40] sm:$0xff] %v3190
        %4727 = vst [vmem:[%s212 + $0x2c48] sm:$0xff] %v3191
        %4728 = vst [vmem:[%s212 + $0x2c50] sm:$0xff] %v3192
        %4729 = vst [vmem:[%s212 + $0x2c58] sm:$0xff] %v3193
        %4730 = vst [vmem:[%s212 + $0x2c60] sm:$0xff] %v3194
        %4731 = vst [vmem:[%s212 + $0x2c68] sm:$0xff] %v3195
        %4732 = vst [vmem:[%s212 + $0x2c70] sm:$0xff] %v3196
        %4733 = vst [vmem:[%s212 + $0x2c78] sm:$0xff] %v3197
        %4734 = vst [vmem:[%s212 + $0x2c80] sm:$0xff] %v3198
        %4735 = vst [vmem:[%s212 + $0x2c88] sm:$0xff] %v3199
        %4736 = vst [vmem:[%s212 + $0x2c90] sm:$0xff] %v3200
        %4737 = vst [vmem:[%s212 + $0x2c98] sm:$0xff] %v3201
        %4738 = vst [vmem:[%s212 + $0x2ca0] sm:$0xff] %v3202
        %4739 = vst [vmem:[%s212 + $0x2ca8] sm:$0xff] %v3203
        %4740 = vst [vmem:[%s212 + $0x2cb0] sm:$0xff] %v3204
        %4741 = vst [vmem:[%s212 + $0x2cb8] sm:$0xff] %v3205
        %4742 = vst [vmem:[%s212 + $0x2cc0] sm:$0xff] %v3206
        %4743 = vst [vmem:[%s212 + $0x2cc8] sm:$0xff] %v3207
        %4744 = vst [vmem:[%s212 + $0x2cd0] sm:$0xff] %v3208
        %4745 = vst [vmem:[%s212 + $0x2cd8] sm:$0xff] %v3209
        %4746 = vst [vmem:[%s212 + $0x2ce0] sm:$0xff] %v3210
        %4747 = vst [vmem:[%s212 + $0x2ce8] sm:$0xff] %v3211
        %4748 = vst [vmem:[%s212 + $0x2cf0] sm:$0xff] %v3212
        %4749 = vst [vmem:[%s212 + $0x2cf8] sm:$0xff] %v3213
        %4750 = vst [vmem:[%s212 + $0x2d00] sm:$0xff] %v3214
        %4751 = vst [vmem:[%s212 + $0x2d08] sm:$0xff] %v3215
        %4752 = vst [vmem:[%s212 + $0x2d10] sm:$0xff] %v3216
        %4753 = vst [vmem:[%s212 + $0x2d18] sm:$0xff] %v3217
        %4754 = vst [vmem:[%s212 + $0x2d20] sm:$0xff] %v3218
        %4755 = vst [vmem:[%s212 + $0x2d28] sm:$0xff] %v3219
        %4756 = vst [vmem:[%s212 + $0x2d30] sm:$0xff] %v3220
        %4757 = vst [vmem:[%s212 + $0x2d38] sm:$0xff] %v3221
        %4758 = vst [vmem:[%s212 + $0x2d40] sm:$0xff] %v3222
        %4759 = vst [vmem:[%s212 + $0x2d48] sm:$0xff] %v3223
        %4760 = vst [vmem:[%s212 + $0x2d50] sm:$0xff] %v3224
        %4761 = vst [vmem:[%s212 + $0x2d58] sm:$0xff] %v3225
        %4762 = vst [vmem:[%s212 + $0x2d60] sm:$0xff] %v3226
        %4763 = vst [vmem:[%s212 + $0x2d68] sm:$0xff] %v3227
        %4764 = vst [vmem:[%s212 + $0x2d70] sm:$0xff] %v3228
        %4765 = vst [vmem:[%s212 + $0x2d78] sm:$0xff] %v3229
        %4766 = vst [vmem:[%s212 + $0x2d80] sm:$0xff] %v3230
        %4767 = vst [vmem:[%s212 + $0x2d88] sm:$0xff] %v3231
        %4768 = vst [vmem:[%s212 + $0x2d90] sm:$0xff] %v3232
        %4769 = vst [vmem:[%s212 + $0x2d98] sm:$0xff] %v3233
        %4770 = vst [vmem:[%s212 + $0x2da0] sm:$0xff] %v3234
        %4771 = vst [vmem:[%s212 + $0x2da8] sm:$0xff] %v3235
        %4772 = vst [vmem:[%s212 + $0x2db0] sm:$0xff] %v3236
        %4773 = vst [vmem:[%s212 + $0x2db8] sm:$0xff] %v3237
        %4774 = vst [vmem:[%s212 + $0x2dc0] sm:$0xff] %v3238
        %4775 = vst [vmem:[%s212 + $0x2dc8] sm:$0xff] %v3239
        %4776 = vst [vmem:[%s212 + $0x2dd0] sm:$0xff] %v3240
        %4777 = vst [vmem:[%s212 + $0x2dd8] sm:$0xff] %v3241
        %4778 = vst [vmem:[%s212 + $0x2de0] sm:$0xff] %v3242
        %4779 = vst [vmem:[%s212 + $0x2de8] sm:$0xff] %v3243
        %4780 = vst [vmem:[%s212 + $0x2df0] sm:$0xff] %v3244
        %4781 = vst [vmem:[%s212 + $0x2df8] sm:$0xff] %v3245
        %4782 = vst [vmem:[%s212 + $0x2e00] sm:$0xff] %v3246
        %4783 = vst [vmem:[%s212 + $0x2e08] sm:$0xff] %v3247
        %4784 = vst [vmem:[%s212 + $0x2e10] sm:$0xff] %v3248
        %4785 = vst [vmem:[%s212 + $0x2e18] sm:$0xff] %v3249
        %4786 = vst [vmem:[%s212 + $0x2e20] sm:$0xff] %v3250
        %4787 = vst [vmem:[%s212 + $0x2e28] sm:$0xff] %v3251
        %4788 = vst [vmem:[%s212 + $0x2e30] sm:$0xff] %v3252
        %4789 = vst [vmem:[%s212 + $0x2e38] sm:$0xff] %v3253
        %4790 = vst [vmem:[%s212 + $0x2e40] sm:$0xff] %v3254
        %4791 = vst [vmem:[%s212 + $0x2e48] sm:$0xff] %v3255
        %4792 = vst [vmem:[%s212 + $0x2e50] sm:$0xff] %v3256
        %4793 = vst [vmem:[%s212 + $0x2e58] sm:$0xff] %v3257
        %4794 = vst [vmem:[%s212 + $0x2e60] sm:$0xff] %v3258
        %4795 = vst [vmem:[%s212 + $0x2e68] sm:$0xff] %v3259
        %4796 = vst [vmem:[%s212 + $0x2e70] sm:$0xff] %v3260
        %4797 = vst [vmem:[%s212 + $0x2e78] sm:$0xff] %v3261
        %4798 = vst [vmem:[%s212 + $0x2e80] sm:$0xff] %v3262
        %4799 = vst [vmem:[%s212 + $0x2e88] sm:$0xff] %v3263
        %4800 = vst [vmem:[%s212 + $0x2e90] sm:$0xff] %v3264
        %4801 = vst [vmem:[%s212 + $0x2e98] sm:$0xff] %v3265
        %4802 = vst [vmem:[%s212 + $0x2ea0] sm:$0xff] %v3266
        %4803 = vst [vmem:[%s212 + $0x2ea8] sm:$0xff] %v3267
        %4804 = vst [vmem:[%s212 + $0x2eb0] sm:$0xff] %v3268
        %4805 = vst [vmem:[%s212 + $0x2eb8] sm:$0xff] %v3269
        %4806 = vst [vmem:[%s212 + $0x2ec0] sm:$0xff] %v3270
        %4807 = vst [vmem:[%s212 + $0x2ec8] sm:$0xff] %v3271
        %4808 = vst [vmem:[%s212 + $0x2ed0] sm:$0xff] %v3272
        %4809 = vst [vmem:[%s212 + $0x2ed8] sm:$0xff] %v3273
        %4810 = vst [vmem:[%s212 + $0x2ee0] sm:$0xff] %v3274
        %4811 = vst [vmem:[%s212 + $0x2ee8] sm:$0xff] %v3275
        %4812 = vst [vmem:[%s212 + $0x2ef0] sm:$0xff] %v3276
        %4813 = vst [vmem:[%s212 + $0x2ef8] sm:$0xff] %v3277
        %4814 = vst [vmem:[%s212 + $0x2f00] sm:$0xff] %v3278
        %4815 = vst [vmem:[%s212 + $0x2f08] sm:$0xff] %v3279
        %4816 = vst [vmem:[%s212 + $0x2f10] sm:$0xff] %v3280
        %4817 = vst [vmem:[%s212 + $0x2f18] sm:$0xff] %v3281
        %4818 = vst [vmem:[%s212 + $0x2f20] sm:$0xff] %v3282
        %4819 = vst [vmem:[%s212 + $0x2f28] sm:$0xff] %v3283
        %4820 = vst [vmem:[%s212 + $0x2f30] sm:$0xff] %v3284
        %4821 = vst [vmem:[%s212 + $0x2f38] sm:$0xff] %v3285
        %4822 = vst [vmem:[%s212 + $0x2f40] sm:$0xff] %v3286
        %4823 = vst [vmem:[%s212 + $0x2f48] sm:$0xff] %v3287
        %4824 = vst [vmem:[%s212 + $0x2f50] sm:$0xff] %v3288
        %4825 = vst [vmem:[%s212 + $0x2f58] sm:$0xff] %v3289
        %4826 = vst [vmem:[%s212 + $0x2f60] sm:$0xff] %v3290
        %4827 = vst [vmem:[%s212 + $0x2f68] sm:$0xff] %v3291
        %4828 = vst [vmem:[%s212 + $0x2f70] sm:$0xff] %v3292
        %4829 = vst [vmem:[%s212 + $0x2f78] sm:$0xff] %v3293
        %4830 = vst [vmem:[%s212 + $0x2f80] sm:$0xff] %v3294
        %4831 = vst [vmem:[%s212 + $0x2f88] sm:$0xff] %v3295
        %4832 = vst [vmem:[%s212 + $0x2f90] sm:$0xff] %v3296
        %4833 = vst [vmem:[%s212 + $0x2f98] sm:$0xff] %v3297
        %4834 = vst [vmem:[%s212 + $0x2fa0] sm:$0xff] %v3298
        %4835 = vst [vmem:[%s212 + $0x2fa8] sm:$0xff] %v3299
        %4836 = vst [vmem:[%s212 + $0x2fb0] sm:$0xff] %v3300
        %4837 = vst [vmem:[%s212 + $0x2fb8] sm:$0xff] %v3301
        %4838 = vst [vmem:[%s212 + $0x2fc0] sm:$0xff] %v3302
        %4839 = vst [vmem:[%s212 + $0x2fc8] sm:$0xff] %v3303
        %4840 = vst [vmem:[%s212 + $0x2fd0] sm:$0xff] %v3304
        %4841 = vst [vmem:[%s212 + $0x2fd8] sm:$0xff] %v3305
        %4842 = vst [vmem:[%s212 + $0x2fe0] sm:$0xff] %v3306
        %4843 = vst [vmem:[%s212 + $0x2fe8] sm:$0xff] %v3307
        %4844 = vst [vmem:[%s212 + $0x2ff0] sm:$0xff] %v3308
        %4845 = vst [vmem:[%s212 + $0x2ff8] sm:$0xff] %v3309
        %s4846 = sand.u32 %s96, 1
        %s4847 = scalar_lea.sflag [#allocation4], %s4846
        %s4848 = sand.u32 %s96, 1
        %s4849 = smul.addr %s4848, 12288
        %s4850 = scalar_lea.vmem [#allocation7], %s4849
        // Predicated region
        $region37: #{tpu_custom_call.1} parent=27 // pred_check
          %p4851 = pneg %p106
        $region38: #{tpu_custom_call.1} parent=27 // pred_check_branch
          %4853 = sbr.rel (%p4851) target = $region40
        $region39: #{tpu_custom_call.1} parent=27 // pred_region
          %s4854 = smul.u32 384, %s24
          %s4855 = smul.u32 4, %s25
          %s4856 = ssub.s32 512, %s4854
          %p4857 = scmp.lt.s32.totalorder %s4856, 384
          %s4858 = scalar_select %p4857, %s4856, 384
          %s4859 = smul.u32 8, %s4858
          %s4860 = smul.u32 %s4859, 4
          %s4861 = ssub.s32 12288, %s4860
          %s4862 = sshll.u32 %s4861, 4
          %4863 = vsyncadd %s4847, %s4862
          %p4864 = scmp.ne.s32.totalorder 0, %s4860
          %s4865 = smul.addr %s4854, 4
          %s4866 = sadd.s32 %s4855, %s4865
          %s4867 = smul.addr %s4866, 8
          %s4868 = scalar_lea.hbm %s2, %s4867
          %s4869 = smul.u32 32, %s4858
          %s4870 = sshll.u32 %s4850, 4
          %s4871 = int_to_ptr.vmem [resolvable:$true] %s4870
          %s4872 = sshll.u32 %s4868, 4
          %s4873 = int_to_ptr.hbm [resolvable:$true] %s4872
          %s4874 = sshll.u32 %s4869, 4
          %4878 = dma.vmem_to_hbm [thread:$0]  (%p4864), %s4871, %s4874, %s4873, %s4847, 512, 512, 32
        $region40: #{tpu_custom_call.1} parent=27 // pred_fallthru
          _
      $region28: #{tpu_custom_call.1} parent=5 // pred_fallthru
        _
      %p4879 = scmp.le.s32.totalorder 2, %s15
      // Predicated region
      $region41: #{tpu_custom_call.1} parent=5 // pred_check
        %p4880 = pneg %p4879
      $region42: #{tpu_custom_call.1} parent=5 // pred_check_branch
        %4882 = sbr.rel (%p4880) target = $region44
      $region43: #{tpu_custom_call.1} parent=5 // pred_region
        %s4883 = ssub.s32 %s15, 2
        // Predicated region
        $region45: #{tpu_custom_call.1} parent=43 // pred_check
          %p4884 = pneg %p112
        $region46: #{tpu_custom_call.1} parent=43 // pred_check_branch
          %4886 = sbr.rel (%p4884) target = $region48
        $region47: #{tpu_custom_call.1} parent=43 // pred_region
          %s4887 = sand.u32 %s97, 1
          %s4888 = scalar_lea.sflag [#allocation4], %s4887
          %s4889 = sand.u32 %s97, 1
          %s4890 = smul.addr %s4889, 12288
          %s4891 = scalar_lea.vmem [#allocation7], %s4890
          %4893 = dma.done %s4888, 196608
        $region48: #{tpu_custom_call.1} parent=43 // pred_fallthru
          _
      $region44: #{tpu_custom_call.1} parent=5 // pred_fallthru
        _
    $region6: #{tpu_custom_call.1} parent=1 // loop_footer
      %s19 = sadd.s32 1, %s15
    $region7: #{tpu_custom_call.1} parent=1 // loop_footer_branch
      %14 = sbr.rel target = $region3
    $region8: #{tpu_custom_call.1} parent=1 // loop_exit
      _
    %4894 = vsyncpa [#allocation3], 1
    %s4895 = scalar_lea.sflag [#allocation3], 1
    %4896 = vsyncpa %s4895, 1
    %4897 = vsyncpa [#allocation6], 1
    %4898 = vsyncpa [#allocation4], 1
    %s4899 = scalar_lea.sflag [#allocation4], 1
    %4900 = vsyncpa %s4899, 1

</llo_original>
